<compile_context>
chip_gen: v7x
topology: tpu7x:2x2x1
jax: 0.10.0
libtpu: 0.0.40
codegen_flags: <defaults>
</compile_context>

<pallas_src>
import functools

import jax
import jax.numpy as jnp
from jax.experimental import pallas as pl
from jax.experimental.pallas import tpu as pltpu


def _mha_kernel(lengths_ref, x_ref, wq_ref, wk_ref, wv_ref, wp_ref, bp_ref,
                o_ref, *, num_heads, head_size, batch_block, seq_len,
                approx_recip):
    """One grid step = `batch_block` batch rows of fused multi-head attention."""
    i = pl.program_id(0)
    T, Bb, hs = seq_len, batch_block, head_size
    cdt = x_ref.dtype                     # MXU operand dtype (bf16 or f32)

    x = x_ref[...]                        # (Bb*T, n_embd)

    # Fat QKV projections over the whole batch block (M = Bb*T rows on the
    # MXU).  Per-head weights are column-blocked into (n_embd, n_embd).
    q = jnp.dot(x, wq_ref[...], preferred_element_type=jnp.float32)
    k = jnp.dot(x, wk_ref[...], preferred_element_type=jnp.float32)
    v = jnp.dot(x, wv_ref[...], preferred_element_type=jnp.float32)

    # Fold the 1/sqrt(hs) score scale into q once (M*n_embd mults instead of
    # Bb*H*T*T).  Equivalent to PyTorch's post-mask scaling (-inf stays -inf).
    q = q * jnp.float32(hs ** -0.5)

    q = q.astype(cdt)
    k = k.astype(cdt)
    v = v.astype(cdt)

    wp = wp_ref[...]                      # (n_embd, n_embd), hoisted
    bp = bp_ref[...]                      # (1, n_embd) f32, hoisted

    # Mask pieces shared by every batch row / head in this block.
    row = jax.lax.broadcasted_iota(jnp.int32, (T, T), 0)
    col = jax.lax.broadcasted_iota(jnp.int32, (T, T), 1)
    causal = col <= row
    diag = row == col
    neg_big = jnp.float32(-1e30)          # underflows to exactly 0 after exp()

    # q @ k^T expressed via dimension_numbers (no explicit transpose op).
    score_dims = (((1,), (1,)), ((), ()))

    y_rows = []
    for b in range(Bb):                   # static, unrolled
        # allowed[i, j] = (j <= i) AND ((i < L and j < L) OR i == j)
        L = lengths_ref[i * Bb + b]
        valid = (row < L) & (col < L)
        allowed = causal & (valid | diag)

        r0 = b * T
        acc = jnp.zeros((T, num_heads * hs), jnp.float32)
        for h in range(num_heads):        # static, unrolled
            c0 = h * hs
            qh = q[r0:r0 + T, c0:c0 + hs]
            kh = k[r0:r0 + T, c0:c0 + hs]
            vh = v[r0:r0 + T, c0:c0 + hs]

            s = jax.lax.dot_general(qh, kh, score_dims,
                                    preferred_element_type=jnp.float32)
            s = jnp.where(allowed, s, neg_big)
            p = jnp.exp(s - jnp.max(s, axis=-1, keepdims=True))
            denom = jnp.sum(p, axis=-1, keepdims=True)            # (T, 1)

            # TODO(synk): training-mode dropout on attention probabilities
            #             would use pltpu.prng_seed / pltpu.prng_random_bits;
            #             eval-mode dropout is the identity.
            o_h = jnp.dot(p.astype(cdt), vh,
                          preferred_element_type=jnp.float32)     # (T, hs)
            # Deferred softmax normalization: T*hs mults via the EUP
            # reciprocal instead of T*T divides on the VPU.
            o_h = o_h * pl.reciprocal(denom, approx=approx_recip)

            # Fold the head into the output projection by accumulating
            # head_out @ Wproj[rows of head h] — no lane-level concat.
            acc = acc + jnp.dot(o_h.astype(cdt), wp[c0:c0 + hs, :],
                                preferred_element_type=jnp.float32)

        y_rows.append(acc + bp)

    # Sublane-dim concat (cheap) -> a single (Bb*T, n_embd) slab store.
    y = jnp.concatenate(y_rows, axis=0) if Bb > 1 else y_rows[0]
    # TODO(synk): training-mode output dropout; eval-mode is identity.
    o_ref[...] = y.astype(o_ref.dtype)


@functools.partial(
    jax.jit,
    static_argnames=("num_heads", "batch_block", "compute_dtype",
                     "single_buffer_weights"))
def _mha_pallas(x, wq, wk, wv, wproj, bproj, lengths, *, num_heads,
                batch_block, compute_dtype, single_buffer_weights):
    B, T, n_embd = x.shape
    assert n_embd % num_heads == 0
    head_size = n_embd // num_heads
    out_dtype = x.dtype

    Bb = batch_block
    n_blocks = -(-B // Bb)                # ceil
    B_pad = n_blocks * Bb

    lengths = lengths.astype(jnp.int32)
    if B_pad != B:                        # pad batch; padded rows are dropped
        x = jnp.pad(x, ((0, B_pad - B), (0, 0), (0, 0)))
        lengths = jnp.pad(lengths, (0, B_pad - B), constant_values=T)

    # Present x / out as 2-D slabs so each grid step loads/stores one fat
    # (Bb*T, n_embd) block (wrapper-side reshapes are layout plumbing only).
    x2d = x.reshape(B_pad * T, n_embd).astype(compute_dtype)
    wq = wq.astype(compute_dtype)
    wk = wk.astype(compute_dtype)
    wv = wv.astype(compute_dtype)
    wproj = wproj.astype(compute_dtype)
    bproj2d = bproj.reshape(1, n_embd).astype(jnp.float32)

    # Weights/bias have a constant index_map -> no need to double-buffer them.
    w_kwargs = (dict(pipeline_mode=pl.Buffered(1))
                if single_buffer_weights else {})

    kernel = functools.partial(
        _mha_kernel, num_heads=num_heads, head_size=head_size,
        batch_block=Bb, seq_len=T,
        approx_recip=(compute_dtype == jnp.bfloat16))

    out2d = pl.pallas_call(
        kernel,
        out_shape=jax.ShapeDtypeStruct((B_pad * T, n_embd), out_dtype),
        grid_spec=pltpu.PrefetchScalarGridSpec(
            num_scalar_prefetch=1,                  # lengths -> SMEM
            grid=(n_blocks,),
            in_specs=[
                pl.BlockSpec((Bb * T, n_embd), lambda i, lens: (i, 0)),     # x
                pl.BlockSpec((n_embd, n_embd), lambda i, lens: (0, 0),
                             **w_kwargs),                                   # Wq
                pl.BlockSpec((n_embd, n_embd), lambda i, lens: (0, 0),
                             **w_kwargs),                                   # Wk
                pl.BlockSpec((n_embd, n_embd), lambda i, lens: (0, 0),
                             **w_kwargs),                                   # Wv
                pl.BlockSpec((n_embd, n_embd), lambda i, lens: (0, 0),
                             **w_kwargs),                                   # Wproj
                pl.BlockSpec((1, n_embd), lambda i, lens: (0, 0),
                             **w_kwargs),                                   # bproj
            ],
            out_specs=pl.BlockSpec((Bb * T, n_embd), lambda i, lens: (i, 0)),
        ),
        compiler_params=pltpu.CompilerParams(
            dimension_semantics=("parallel",),      # shards steps across TCs
            # Nano shapes use a few KiB; rule for scale-up: stay well under
            # ~48 MiB of actual usage on v7x (64 MiB VMEM) — bf16 weights,
            # Buffered(1), and column-tiling the weights keep it resident.
            vmem_limit_bytes=32 * 1024 * 1024,
        ),
    )(lengths, x2d, wq, wk, wv, wproj, bproj2d)

    return out2d.reshape(B_pad, T, n_embd)[:B]


_SINGLE_BUFFER_WEIGHTS = True   # flipped off at runtime if this jax build does
                                # not honor pl.Buffered(1) on the main pipeline


def multi_head_attention(x, wq, wk, wv, wproj, bproj, lengths=None, *,
                         num_heads, batch_block=None,
                         compute_dtype=jnp.bfloat16):
    """x: (B, T, n_embd) -> (B, T, n_embd).  Eval-mode MHA (dropout = id).

    Weights are stored (in, out); per-head Q/K/V weights are column-blocked
    into (n_embd, n_embd) so head h owns columns [h*hs, (h+1)*hs).
    `compute_dtype` is the MXU-operand dtype (bf16 default; softmax math and
    all accumulation stay f32).  Pass jnp.float32 for exact f32 numerics.
    """
    global _SINGLE_BUFFER_WEIGHTS
    B, T, _ = x.shape

    if lengths is None:
        lengths = jnp.full((B,), T, dtype=jnp.int32)

    if batch_block is None:
        # Fatter grid steps amortize the ~0.35us/step pipeline overhead; at
        # nano shapes the whole batch fits in one step.  On v7x, pass a
        # smaller batch_block explicitly if >=2 steps are needed to populate
        # both TensorCores.
        batch_block = min(B, 8)
    if (batch_block * T) % 8 != 0:        # keep the (8, 128) block constraint
        batch_block = B

    kwargs = dict(num_heads=num_heads, batch_block=batch_block,
                  compute_dtype=compute_dtype)
    try:
        out = _mha_pallas(x, wq, wk, wv, wproj, bproj, lengths,
                          single_buffer_weights=_SINGLE_BUFFER_WEIGHTS,
                          **kwargs)
        return jax.block_until_ready(out)
    except Exception:
        if not _SINGLE_BUFFER_WEIGHTS:
            raise
        _SINGLE_BUFFER_WEIGHTS = False    # retry without pl.Buffered(1)
        out = _mha_pallas(x, wq, wk, wv, wproj, bproj, lengths,
                          single_buffer_weights=False, **kwargs)
        return jax.block_until_ready(out)


def _ref_mha(x, wq, wk, wv, wproj, bproj, lengths, num_heads):
    """Pure-JAX mirror of the PyTorch module (eval mode)."""
    B, T, n_embd = x.shape
    hs = n_embd // num_heads
    hi = jax.lax.Precision.HIGHEST
    q = jnp.einsum("btd,de->bte", x, wq, precision=hi)
    k = jnp.einsum("btd,de->bte", x, wk, precision=hi)
    v = jnp.einsum("btd,de->bte", x, wv, precision=hi)
    q = q.reshape(B, T, num_heads, hs).transpose(0, 2, 1, 3)
    k = k.reshape(B, T, num_heads, hs).transpose(0, 2, 1, 3)
    v = v.reshape(B, T, num_heads, hs).transpose(0, 2, 1, 3)
    s = jnp.einsum("bhqd,bhkd->bhqk", q, k, precision=hi)
    tril = jnp.tril(jnp.ones((T, T), dtype=bool))
    s = jnp.where(tril[None, None], s, -jnp.inf)
    if lengths is not None:
        m = jnp.arange(T)[None, :] < lengths[:, None]
        pair = (m[:, :, None] & m[:, None, :]) | jnp.eye(T, dtype=bool)[None]
        s = jnp.where(pair[:, None], s, -jnp.inf)
    s = s * hs ** (-0.5)
    p = jax.nn.softmax(s, axis=-1)
    o = jnp.einsum("bhqk,bhkd->bhqd", p, v, precision=hi)
    o = o.transpose(0, 2, 1, 3).reshape(B, T, n_embd)
    return jnp.einsum("btd,de->bte", o, wproj, precision=hi) + bproj


if __name__ == "__main__":
    # Small shapes consistent with the module: batch=2, seq=block_size=8,
    # n_embd=32, num_heads=4 (head_size=8), dropout eval-mode.
    B, T, n_embd, num_heads = 2, 8, 32, 4

    key = jax.random.PRNGKey(0)
    kx, kq, kk, kv, kp, kb = jax.random.split(key, 6)

    x = jax.random.normal(kx, (B, T, n_embd), dtype=jnp.float32)
    # PyTorch nn.Linear stores (out, in); here weights are stored transposed
    # as (in, out), with per-head Q/K/V weights column-blocked head-by-head.
    wq = jax.random.normal(kq, (n_embd, n_embd), dtype=jnp.float32) * 0.05
    wk = jax.random.normal(kk, (n_embd, n_embd), dtype=jnp.float32) * 0.05
    wv = jax.random.normal(kv, (n_embd, n_embd), dtype=jnp.float32) * 0.05
    wproj = jax.random.normal(kp, (n_embd, n_embd), dtype=jnp.float32) * 0.05
    bproj = jax.random.normal(kb, (n_embd,), dtype=jnp.float32) * 0.05

    lengths = jnp.array([T, 5], dtype=jnp.int32)

    # --- exact-semantics f32 path (tight tolerance vs. HIGHEST-precision ref)
    for lens, tag in ((None, "causal"), (lengths, "lengths")):
        out = multi_head_attention(x, wq, wk, wv, wproj, bproj, lens,
                                   num_heads=num_heads,
                                   compute_dtype=jnp.float32)
        ref = _ref_mha(x, wq, wk, wv, wproj, bproj, lens, num_heads)
        assert out.shape == (B, T, n_embd)
        assert jnp.allclose(out, ref, atol=2e-5, rtol=2e-5), \
            f"max err f32 ({tag}): {jnp.max(jnp.abs(out - ref))}"

    # --- default bf16 MXU-operand path (looser tolerance)
    for lens, tag in ((None, "causal"), (lengths, "lengths")):
        out = multi_head_attention(x, wq, wk, wv, wproj, bproj, lens,
                                   num_heads=num_heads)
        ref = _ref_mha(x, wq, wk, wv, wproj, bproj, lens, num_heads)
        assert jnp.allclose(out, ref, atol=5e-2, rtol=5e-2), \
            f"max err bf16 ({tag}): {jnp.max(jnp.abs(out - ref))}"

    print("KERNEL_OK")
</pallas_src>

<mosaic_0001>
module attributes {stable_mosaic.version = 11 : i64} {
  func.func @_mha_kernel(%arg0: i32, %arg1: memref<2xi32, #tpu.memory_space<smem>>, %arg2: memref<16x32xf32, #tpu.memory_space<vmem>>, %arg3: memref<32x32xf32, #tpu.memory_space<vmem>>, %arg4: memref<32x32xf32, #tpu.memory_space<vmem>>, %arg5: memref<32x32xf32, #tpu.memory_space<vmem>>, %arg6: memref<32x32xf32, #tpu.memory_space<vmem>>, %arg7: memref<1x32xf32, #tpu.memory_space<vmem>>, %arg8: memref<16x32xf32, #tpu.memory_space<vmem>>) attributes {dimension_semantics = [#tpu.dimension_semantics<parallel>], iteration_bounds = array<i64: 1>, scalar_prefetch = 1 : i64, scratch_operands = 0 : i64, tpu.core_type = #tpu.core_type<tc>, window_params = [{transform_indices = @transform_0, window_bounds = array<i64: 16, 32>}, {pipeline_mode = #tpu.pipeline_mode<synchronous>, transform_indices = @transform_1, window_bounds = array<i64: 32, 32>}, {pipeline_mode = #tpu.pipeline_mode<synchronous>, transform_indices = @transform_2, window_bounds = array<i64: 32, 32>}, {pipeline_mode = #tpu.pipeline_mode<synchronous>, transform_indices = @transform_3, window_bounds = array<i64: 32, 32>}, {pipeline_mode = #tpu.pipeline_mode<synchronous>, transform_indices = @transform_4, window_bounds = array<i64: 32, 32>}, {pipeline_mode = #tpu.pipeline_mode<synchronous>, transform_indices = @transform_5, window_bounds = array<i64: 1, 32>}, {transform_indices = @transform_6, window_bounds = array<i64: 16, 32>}]} {
    %c0 = arith.constant 0 : index
    %c0_0 = arith.constant 0 : index
    %0 = vector.load %arg2[%c0, %c0_0] : memref<16x32xf32, #tpu.memory_space<vmem>>, vector<16x32xf32>
    %c0_1 = arith.constant 0 : index
    %c0_2 = arith.constant 0 : index
    %1 = vector.load %arg3[%c0_1, %c0_2] : memref<32x32xf32, #tpu.memory_space<vmem>>, vector<32x32xf32>
    %cst = arith.constant dense<0.000000e+00> : vector<16x32xf32>
    %2 = tpu.matmul %0, %1, %cst {dimension_numbers = #tpu.dot_dimension_numbers<[1], [0], [0], [1], [0, 0, 1, 1], [], []>} : vector<16x32xf32>, vector<32x32xf32>, vector<16x32xf32> -> vector<16x32xf32>
    %c0_3 = arith.constant 0 : index
    %c0_4 = arith.constant 0 : index
    %3 = vector.load %arg4[%c0_3, %c0_4] : memref<32x32xf32, #tpu.memory_space<vmem>>, vector<32x32xf32>
    %cst_5 = arith.constant dense<0.000000e+00> : vector<16x32xf32>
    %4 = tpu.matmul %0, %3, %cst_5 {dimension_numbers = #tpu.dot_dimension_numbers<[1], [0], [0], [1], [0, 0, 1, 1], [], []>} : vector<16x32xf32>, vector<32x32xf32>, vector<16x32xf32> -> vector<16x32xf32>
    %c0_6 = arith.constant 0 : index
    %c0_7 = arith.constant 0 : index
    %5 = vector.load %arg5[%c0_6, %c0_7] : memref<32x32xf32, #tpu.memory_space<vmem>>, vector<32x32xf32>
    %cst_8 = arith.constant dense<0.000000e+00> : vector<16x32xf32>
    %6 = tpu.matmul %0, %5, %cst_8 {dimension_numbers = #tpu.dot_dimension_numbers<[1], [0], [0], [1], [0, 0, 1, 1], [], []>} : vector<16x32xf32>, vector<32x32xf32>, vector<16x32xf32> -> vector<16x32xf32>
    %cst_9 = arith.constant 0.353553385 : f32
    %7 = vector.broadcast %cst_9 : f32 to vector<16x32xf32>
    %8 = arith.mulf %2, %7 : vector<16x32xf32>
    %c0_10 = arith.constant 0 : index
    %c0_11 = arith.constant 0 : index
    %9 = vector.load %arg6[%c0_10, %c0_11] : memref<32x32xf32, #tpu.memory_space<vmem>>, vector<32x32xf32>
    %c0_12 = arith.constant 0 : index
    %c0_13 = arith.constant 0 : index
    %10 = vector.load %arg7[%c0_12, %c0_13] : memref<1x32xf32, #tpu.memory_space<vmem>>, vector<1x32xf32>
    %11 = tpu.iota {dimensions = array<i32: 0>} : vector<8x8xi32>
    %12 = tpu.iota {dimensions = array<i32: 1>} : vector<8x8xi32>
    %13 = arith.cmpi sle, %12, %11 : vector<8x8xi32>
    %14 = arith.cmpi eq, %11, %12 : vector<8x8xi32>
    %c2_i32 = arith.constant 2 : i32
    %15 = arith.muli %arg0, %c2_i32 : i32
    %c0_i32 = arith.constant 0 : i32
    %16 = arith.addi %15, %c0_i32 : i32
    %17 = arith.index_cast %16 : i32 to index
    %18 = memref.load %arg1[%17] : memref<2xi32, #tpu.memory_space<smem>>
    %19 = vector.broadcast %18 : i32 to vector<8x8xi32>
    %20 = arith.cmpi slt, %11, %19 : vector<8x8xi32>
    %21 = vector.broadcast %18 : i32 to vector<8x8xi32>
    %22 = arith.cmpi slt, %12, %21 : vector<8x8xi32>
    %23 = arith.andi %20, %22 : vector<8x8xi1>
    %24 = arith.ori %23, %14 : vector<8x8xi1>
    %25 = arith.andi %13, %24 : vector<8x8xi1>
    %cst_14 = arith.constant 0.000000e+00 : f32
    %26 = vector.broadcast %cst_14 : f32 to vector<8x32xf32>
    %27 = vector.extract_strided_slice %8 {offsets = [0, 0], sizes = [8, 8], strides = [1, 1]} : vector<16x32xf32> to vector<8x8xf32>
    %28 = vector.extract_strided_slice %4 {offsets = [0, 0], sizes = [8, 8], strides = [1, 1]} : vector<16x32xf32> to vector<8x8xf32>
    %29 = vector.extract_strided_slice %6 {offsets = [0, 0], sizes = [8, 8], strides = [1, 1]} : vector<16x32xf32> to vector<8x8xf32>
    %cst_15 = arith.constant dense<0.000000e+00> : vector<8x8xf32>
    %30 = tpu.matmul %27, %28, %cst_15 {dimension_numbers = #tpu.dot_dimension_numbers<[1], [1], [0], [0], [0, 0, 1, 0], [], []>} : vector<8x8xf32>, vector<8x8xf32>, vector<8x8xf32> -> vector<8x8xf32>
    %cst_16 = arith.constant -1.000000e+30 : f32
    %31 = vector.broadcast %cst_16 : f32 to vector<8x8xf32>
    %32 = arith.select %25, %30, %31 : vector<8x8xi1>, vector<8x8xf32>
    %cst_17 = arith.constant dense<0xFF800000> : vector<8xf32>
    %33 = vector.multi_reduction <maximumf>, %32, %cst_17 [1] : vector<8x8xf32> to vector<8xf32>
    %34 = vector.shape_cast %33 : vector<8xf32> to vector<8x1xf32>
    %35 = vector.broadcast %34 : vector<8x1xf32> to vector<8x8xf32>
    %36 = arith.subf %32, %35 : vector<8x8xf32>
    %37 = math.exp %36 : vector<8x8xf32>
    %cst_18 = arith.constant dense<0.000000e+00> : vector<8xf32>
    %38 = vector.multi_reduction <add>, %37, %cst_18 [1] : vector<8x8xf32> to vector<8xf32>
    %39 = vector.shape_cast %38 : vector<8xf32> to vector<8x1xf32>
    %cst_19 = arith.constant dense<0.000000e+00> : vector<8x8xf32>
    %40 = tpu.matmul %37, %29, %cst_19 {dimension_numbers = #tpu.dot_dimension_numbers<[1], [0], [0], [1], [0, 0, 1, 1], [], []>} : vector<8x8xf32>, vector<8x8xf32>, vector<8x8xf32> -> vector<8x8xf32>
    %41 = tpu.reciprocal %39 : vector<8x1xf32> -> vector<8x1xf32>
    %42 = vector.broadcast %41 : vector<8x1xf32> to vector<8x8xf32>
    %43 = arith.mulf %40, %42 : vector<8x8xf32>
    %44 = vector.extract_strided_slice %9 {offsets = [0, 0], sizes = [8, 32], strides = [1, 1]} : vector<32x32xf32> to vector<8x32xf32>
    %cst_20 = arith.constant dense<0.000000e+00> : vector<8x32xf32>
    %45 = tpu.matmul %43, %44, %cst_20 {dimension_numbers = #tpu.dot_dimension_numbers<[1], [0], [0], [1], [0, 0, 1, 1], [], []>} : vector<8x8xf32>, vector<8x32xf32>, vector<8x32xf32> -> vector<8x32xf32>
    %46 = arith.addf %26, %45 : vector<8x32xf32>
    %47 = vector.extract_strided_slice %8 {offsets = [0, 8], sizes = [8, 8], strides = [1, 1]} : vector<16x32xf32> to vector<8x8xf32>
    %48 = vector.extract_strided_slice %4 {offsets = [0, 8], sizes = [8, 8], strides = [1, 1]} : vector<16x32xf32> to vector<8x8xf32>
    %49 = vector.extract_strided_slice %6 {offsets = [0, 8], sizes = [8, 8], strides = [1, 1]} : vector<16x32xf32> to vector<8x8xf32>
    %cst_21 = arith.constant dense<0.000000e+00> : vector<8x8xf32>
    %50 = tpu.matmul %47, %48, %cst_21 {dimension_numbers = #tpu.dot_dimension_numbers<[1], [1], [0], [0], [0, 0, 1, 0], [], []>} : vector<8x8xf32>, vector<8x8xf32>, vector<8x8xf32> -> vector<8x8xf32>
    %cst_22 = arith.constant -1.000000e+30 : f32
    %51 = vector.broadcast %cst_22 : f32 to vector<8x8xf32>
    %52 = arith.select %25, %50, %51 : vector<8x8xi1>, vector<8x8xf32>
    %cst_23 = arith.constant dense<0xFF800000> : vector<8xf32>
    %53 = vector.multi_reduction <maximumf>, %52, %cst_23 [1] : vector<8x8xf32> to vector<8xf32>
    %54 = vector.shape_cast %53 : vector<8xf32> to vector<8x1xf32>
    %55 = vector.broadcast %54 : vector<8x1xf32> to vector<8x8xf32>
    %56 = arith.subf %52, %55 : vector<8x8xf32>
    %57 = math.exp %56 : vector<8x8xf32>
    %cst_24 = arith.constant dense<0.000000e+00> : vector<8xf32>
    %58 = vector.multi_reduction <add>, %57, %cst_24 [1] : vector<8x8xf32> to vector<8xf32>
    %59 = vector.shape_cast %58 : vector<8xf32> to vector<8x1xf32>
    %cst_25 = arith.constant dense<0.000000e+00> : vector<8x8xf32>
    %60 = tpu.matmul %57, %49, %cst_25 {dimension_numbers = #tpu.dot_dimension_numbers<[1], [0], [0], [1], [0, 0, 1, 1], [], []>} : vector<8x8xf32>, vector<8x8xf32>, vector<8x8xf32> -> vector<8x8xf32>
    %61 = tpu.reciprocal %59 : vector<8x1xf32> -> vector<8x1xf32>
    %62 = vector.broadcast %61 : vector<8x1xf32> to vector<8x8xf32>
    %63 = arith.mulf %60, %62 : vector<8x8xf32>
    %64 = vector.extract_strided_slice %9 {offsets = [8, 0], sizes = [8, 32], strides = [1, 1]} : vector<32x32xf32> to vector<8x32xf32>
    %cst_26 = arith.constant dense<0.000000e+00> : vector<8x32xf32>
    %65 = tpu.matmul %63, %64, %cst_26 {dimension_numbers = #tpu.dot_dimension_numbers<[1], [0], [0], [1], [0, 0, 1, 1], [], []>} : vector<8x8xf32>, vector<8x32xf32>, vector<8x32xf32> -> vector<8x32xf32>
    %66 = arith.addf %46, %65 : vector<8x32xf32>
    %67 = vector.extract_strided_slice %8 {offsets = [0, 16], sizes = [8, 8], strides = [1, 1]} : vector<16x32xf32> to vector<8x8xf32>
    %68 = vector.extract_strided_slice %4 {offsets = [0, 16], sizes = [8, 8], strides = [1, 1]} : vector<16x32xf32> to vector<8x8xf32>
    %69 = vector.extract_strided_slice %6 {offsets = [0, 16], sizes = [8, 8], strides = [1, 1]} : vector<16x32xf32> to vector<8x8xf32>
    %cst_27 = arith.constant dense<0.000000e+00> : vector<8x8xf32>
    %70 = tpu.matmul %67, %68, %cst_27 {dimension_numbers = #tpu.dot_dimension_numbers<[1], [1], [0], [0], [0, 0, 1, 0], [], []>} : vector<8x8xf32>, vector<8x8xf32>, vector<8x8xf32> -> vector<8x8xf32>
    %cst_28 = arith.constant -1.000000e+30 : f32
    %71 = vector.broadcast %cst_28 : f32 to vector<8x8xf32>
    %72 = arith.select %25, %70, %71 : vector<8x8xi1>, vector<8x8xf32>
    %cst_29 = arith.constant dense<0xFF800000> : vector<8xf32>
    %73 = vector.multi_reduction <maximumf>, %72, %cst_29 [1] : vector<8x8xf32> to vector<8xf32>
    %74 = vector.shape_cast %73 : vector<8xf32> to vector<8x1xf32>
    %75 = vector.broadcast %74 : vector<8x1xf32> to vector<8x8xf32>
    %76 = arith.subf %72, %75 : vector<8x8xf32>
    %77 = math.exp %76 : vector<8x8xf32>
    %cst_30 = arith.constant dense<0.000000e+00> : vector<8xf32>
    %78 = vector.multi_reduction <add>, %77, %cst_30 [1] : vector<8x8xf32> to vector<8xf32>
    %79 = vector.shape_cast %78 : vector<8xf32> to vector<8x1xf32>
    %cst_31 = arith.constant dense<0.000000e+00> : vector<8x8xf32>
    %80 = tpu.matmul %77, %69, %cst_31 {dimension_numbers = #tpu.dot_dimension_numbers<[1], [0], [0], [1], [0, 0, 1, 1], [], []>} : vector<8x8xf32>, vector<8x8xf32>, vector<8x8xf32> -> vector<8x8xf32>
    %81 = tpu.reciprocal %79 : vector<8x1xf32> -> vector<8x1xf32>
    %82 = vector.broadcast %81 : vector<8x1xf32> to vector<8x8xf32>
    %83 = arith.mulf %80, %82 : vector<8x8xf32>
    %84 = vector.extract_strided_slice %9 {offsets = [16, 0], sizes = [8, 32], strides = [1, 1]} : vector<32x32xf32> to vector<8x32xf32>
    %cst_32 = arith.constant dense<0.000000e+00> : vector<8x32xf32>
    %85 = tpu.matmul %83, %84, %cst_32 {dimension_numbers = #tpu.dot_dimension_numbers<[1], [0], [0], [1], [0, 0, 1, 1], [], []>} : vector<8x8xf32>, vector<8x32xf32>, vector<8x32xf32> -> vector<8x32xf32>
    %86 = arith.addf %66, %85 : vector<8x32xf32>
    %87 = vector.extract_strided_slice %8 {offsets = [0, 24], sizes = [8, 8], strides = [1, 1]} : vector<16x32xf32> to vector<8x8xf32>
    %88 = vector.extract_strided_slice %4 {offsets = [0, 24], sizes = [8, 8], strides = [1, 1]} : vector<16x32xf32> to vector<8x8xf32>
    %89 = vector.extract_strided_slice %6 {offsets = [0, 24], sizes = [8, 8], strides = [1, 1]} : vector<16x32xf32> to vector<8x8xf32>
    %cst_33 = arith.constant dense<0.000000e+00> : vector<8x8xf32>
    %90 = tpu.matmul %87, %88, %cst_33 {dimension_numbers = #tpu.dot_dimension_numbers<[1], [1], [0], [0], [0, 0, 1, 0], [], []>} : vector<8x8xf32>, vector<8x8xf32>, vector<8x8xf32> -> vector<8x8xf32>
    %cst_34 = arith.constant -1.000000e+30 : f32
    %91 = vector.broadcast %cst_34 : f32 to vector<8x8xf32>
    %92 = arith.select %25, %90, %91 : vector<8x8xi1>, vector<8x8xf32>
    %cst_35 = arith.constant dense<0xFF800000> : vector<8xf32>
    %93 = vector.multi_reduction <maximumf>, %92, %cst_35 [1] : vector<8x8xf32> to vector<8xf32>
    %94 = vector.shape_cast %93 : vector<8xf32> to vector<8x1xf32>
    %95 = vector.broadcast %94 : vector<8x1xf32> to vector<8x8xf32>
    %96 = arith.subf %92, %95 : vector<8x8xf32>
    %97 = math.exp %96 : vector<8x8xf32>
    %cst_36 = arith.constant dense<0.000000e+00> : vector<8xf32>
    %98 = vector.multi_reduction <add>, %97, %cst_36 [1] : vector<8x8xf32> to vector<8xf32>
    %99 = vector.shape_cast %98 : vector<8xf32> to vector<8x1xf32>
    %cst_37 = arith.constant dense<0.000000e+00> : vector<8x8xf32>
    %100 = tpu.matmul %97, %89, %cst_37 {dimension_numbers = #tpu.dot_dimension_numbers<[1], [0], [0], [1], [0, 0, 1, 1], [], []>} : vector<8x8xf32>, vector<8x8xf32>, vector<8x8xf32> -> vector<8x8xf32>
    %101 = tpu.reciprocal %99 : vector<8x1xf32> -> vector<8x1xf32>
    %102 = vector.broadcast %101 : vector<8x1xf32> to vector<8x8xf32>
    %103 = arith.mulf %100, %102 : vector<8x8xf32>
    %104 = vector.extract_strided_slice %9 {offsets = [24, 0], sizes = [8, 32], strides = [1, 1]} : vector<32x32xf32> to vector<8x32xf32>
    %cst_38 = arith.constant dense<0.000000e+00> : vector<8x32xf32>
    %105 = tpu.matmul %103, %104, %cst_38 {dimension_numbers = #tpu.dot_dimension_numbers<[1], [0], [0], [1], [0, 0, 1, 1], [], []>} : vector<8x8xf32>, vector<8x32xf32>, vector<8x32xf32> -> vector<8x32xf32>
    %106 = arith.addf %86, %105 : vector<8x32xf32>
    %107 = vector.broadcast %10 : vector<1x32xf32> to vector<8x32xf32>
    %108 = arith.addf %106, %107 : vector<8x32xf32>
    %c2_i32_39 = arith.constant 2 : i32
    %109 = arith.muli %arg0, %c2_i32_39 : i32
    %c1_i32 = arith.constant 1 : i32
    %110 = arith.addi %109, %c1_i32 : i32
    %111 = arith.index_cast %110 : i32 to index
    %112 = memref.load %arg1[%111] : memref<2xi32, #tpu.memory_space<smem>>
    %113 = vector.broadcast %112 : i32 to vector<8x8xi32>
    %114 = arith.cmpi slt, %11, %113 : vector<8x8xi32>
    %115 = vector.broadcast %112 : i32 to vector<8x8xi32>
    %116 = arith.cmpi slt, %12, %115 : vector<8x8xi32>
    %117 = arith.andi %114, %116 : vector<8x8xi1>
    %118 = arith.ori %117, %14 : vector<8x8xi1>
    %119 = arith.andi %13, %118 : vector<8x8xi1>
    %cst_40 = arith.constant 0.000000e+00 : f32
    %120 = vector.broadcast %cst_40 : f32 to vector<8x32xf32>
    %121 = vector.extract_strided_slice %8 {offsets = [8, 0], sizes = [8, 8], strides = [1, 1]} : vector<16x32xf32> to vector<8x8xf32>
    %122 = vector.extract_strided_slice %4 {offsets = [8, 0], sizes = [8, 8], strides = [1, 1]} : vector<16x32xf32> to vector<8x8xf32>
    %123 = vector.extract_strided_slice %6 {offsets = [8, 0], sizes = [8, 8], strides = [1, 1]} : vector<16x32xf32> to vector<8x8xf32>
    %cst_41 = arith.constant dense<0.000000e+00> : vector<8x8xf32>
    %124 = tpu.matmul %121, %122, %cst_41 {dimension_numbers = #tpu.dot_dimension_numbers<[1], [1], [0], [0], [0, 0, 1, 0], [], []>} : vector<8x8xf32>, vector<8x8xf32>, vector<8x8xf32> -> vector<8x8xf32>
    %cst_42 = arith.constant -1.000000e+30 : f32
    %125 = vector.broadcast %cst_42 : f32 to vector<8x8xf32>
    %126 = arith.select %119, %124, %125 : vector<8x8xi1>, vector<8x8xf32>
    %cst_43 = arith.constant dense<0xFF800000> : vector<8xf32>
    %127 = vector.multi_reduction <maximumf>, %126, %cst_43 [1] : vector<8x8xf32> to vector<8xf32>
    %128 = vector.shape_cast %127 : vector<8xf32> to vector<8x1xf32>
    %129 = vector.broadcast %128 : vector<8x1xf32> to vector<8x8xf32>
    %130 = arith.subf %126, %129 : vector<8x8xf32>
    %131 = math.exp %130 : vector<8x8xf32>
    %cst_44 = arith.constant dense<0.000000e+00> : vector<8xf32>
    %132 = vector.multi_reduction <add>, %131, %cst_44 [1] : vector<8x8xf32> to vector<8xf32>
    %133 = vector.shape_cast %132 : vector<8xf32> to vector<8x1xf32>
    %cst_45 = arith.constant dense<0.000000e+00> : vector<8x8xf32>
    %134 = tpu.matmul %131, %123, %cst_45 {dimension_numbers = #tpu.dot_dimension_numbers<[1], [0], [0], [1], [0, 0, 1, 1], [], []>} : vector<8x8xf32>, vector<8x8xf32>, vector<8x8xf32> -> vector<8x8xf32>
    %135 = tpu.reciprocal %133 : vector<8x1xf32> -> vector<8x1xf32>
    %136 = vector.broadcast %135 : vector<8x1xf32> to vector<8x8xf32>
    %137 = arith.mulf %134, %136 : vector<8x8xf32>
    %138 = vector.extract_strided_slice %9 {offsets = [0, 0], sizes = [8, 32], strides = [1, 1]} : vector<32x32xf32> to vector<8x32xf32>
    %cst_46 = arith.constant dense<0.000000e+00> : vector<8x32xf32>
    %139 = tpu.matmul %137, %138, %cst_46 {dimension_numbers = #tpu.dot_dimension_numbers<[1], [0], [0], [1], [0, 0, 1, 1], [], []>} : vector<8x8xf32>, vector<8x32xf32>, vector<8x32xf32> -> vector<8x32xf32>
    %140 = arith.addf %120, %139 : vector<8x32xf32>
    %141 = vector.extract_strided_slice %8 {offsets = [8, 8], sizes = [8, 8], strides = [1, 1]} : vector<16x32xf32> to vector<8x8xf32>
    %142 = vector.extract_strided_slice %4 {offsets = [8, 8], sizes = [8, 8], strides = [1, 1]} : vector<16x32xf32> to vector<8x8xf32>
    %143 = vector.extract_strided_slice %6 {offsets = [8, 8], sizes = [8, 8], strides = [1, 1]} : vector<16x32xf32> to vector<8x8xf32>
    %cst_47 = arith.constant dense<0.000000e+00> : vector<8x8xf32>
    %144 = tpu.matmul %141, %142, %cst_47 {dimension_numbers = #tpu.dot_dimension_numbers<[1], [1], [0], [0], [0, 0, 1, 0], [], []>} : vector<8x8xf32>, vector<8x8xf32>, vector<8x8xf32> -> vector<8x8xf32>
    %cst_48 = arith.constant -1.000000e+30 : f32
    %145 = vector.broadcast %cst_48 : f32 to vector<8x8xf32>
    %146 = arith.select %119, %144, %145 : vector<8x8xi1>, vector<8x8xf32>
    %cst_49 = arith.constant dense<0xFF800000> : vector<8xf32>
    %147 = vector.multi_reduction <maximumf>, %146, %cst_49 [1] : vector<8x8xf32> to vector<8xf32>
    %148 = vector.shape_cast %147 : vector<8xf32> to vector<8x1xf32>
    %149 = vector.broadcast %148 : vector<8x1xf32> to vector<8x8xf32>
    %150 = arith.subf %146, %149 : vector<8x8xf32>
    %151 = math.exp %150 : vector<8x8xf32>
    %cst_50 = arith.constant dense<0.000000e+00> : vector<8xf32>
    %152 = vector.multi_reduction <add>, %151, %cst_50 [1] : vector<8x8xf32> to vector<8xf32>
    %153 = vector.shape_cast %152 : vector<8xf32> to vector<8x1xf32>
    %cst_51 = arith.constant dense<0.000000e+00> : vector<8x8xf32>
    %154 = tpu.matmul %151, %143, %cst_51 {dimension_numbers = #tpu.dot_dimension_numbers<[1], [0], [0], [1], [0, 0, 1, 1], [], []>} : vector<8x8xf32>, vector<8x8xf32>, vector<8x8xf32> -> vector<8x8xf32>
    %155 = tpu.reciprocal %153 : vector<8x1xf32> -> vector<8x1xf32>
    %156 = vector.broadcast %155 : vector<8x1xf32> to vector<8x8xf32>
    %157 = arith.mulf %154, %156 : vector<8x8xf32>
    %158 = vector.extract_strided_slice %9 {offsets = [8, 0], sizes = [8, 32], strides = [1, 1]} : vector<32x32xf32> to vector<8x32xf32>
    %cst_52 = arith.constant dense<0.000000e+00> : vector<8x32xf32>
    %159 = tpu.matmul %157, %158, %cst_52 {dimension_numbers = #tpu.dot_dimension_numbers<[1], [0], [0], [1], [0, 0, 1, 1], [], []>} : vector<8x8xf32>, vector<8x32xf32>, vector<8x32xf32> -> vector<8x32xf32>
    %160 = arith.addf %140, %159 : vector<8x32xf32>
    %161 = vector.extract_strided_slice %8 {offsets = [8, 16], sizes = [8, 8], strides = [1, 1]} : vector<16x32xf32> to vector<8x8xf32>
    %162 = vector.extract_strided_slice %4 {offsets = [8, 16], sizes = [8, 8], strides = [1, 1]} : vector<16x32xf32> to vector<8x8xf32>
    %163 = vector.extract_strided_slice %6 {offsets = [8, 16], sizes = [8, 8], strides = [1, 1]} : vector<16x32xf32> to vector<8x8xf32>
    %cst_53 = arith.constant dense<0.000000e+00> : vector<8x8xf32>
    %164 = tpu.matmul %161, %162, %cst_53 {dimension_numbers = #tpu.dot_dimension_numbers<[1], [1], [0], [0], [0, 0, 1, 0], [], []>} : vector<8x8xf32>, vector<8x8xf32>, vector<8x8xf32> -> vector<8x8xf32>
    %cst_54 = arith.constant -1.000000e+30 : f32
    %165 = vector.broadcast %cst_54 : f32 to vector<8x8xf32>
    %166 = arith.select %119, %164, %165 : vector<8x8xi1>, vector<8x8xf32>
    %cst_55 = arith.constant dense<0xFF800000> : vector<8xf32>
    %167 = vector.multi_reduction <maximumf>, %166, %cst_55 [1] : vector<8x8xf32> to vector<8xf32>
    %168 = vector.shape_cast %167 : vector<8xf32> to vector<8x1xf32>
    %169 = vector.broadcast %168 : vector<8x1xf32> to vector<8x8xf32>
    %170 = arith.subf %166, %169 : vector<8x8xf32>
    %171 = math.exp %170 : vector<8x8xf32>
    %cst_56 = arith.constant dense<0.000000e+00> : vector<8xf32>
    %172 = vector.multi_reduction <add>, %171, %cst_56 [1] : vector<8x8xf32> to vector<8xf32>
    %173 = vector.shape_cast %172 : vector<8xf32> to vector<8x1xf32>
    %cst_57 = arith.constant dense<0.000000e+00> : vector<8x8xf32>
    %174 = tpu.matmul %171, %163, %cst_57 {dimension_numbers = #tpu.dot_dimension_numbers<[1], [0], [0], [1], [0, 0, 1, 1], [], []>} : vector<8x8xf32>, vector<8x8xf32>, vector<8x8xf32> -> vector<8x8xf32>
    %175 = tpu.reciprocal %173 : vector<8x1xf32> -> vector<8x1xf32>
    %176 = vector.broadcast %175 : vector<8x1xf32> to vector<8x8xf32>
    %177 = arith.mulf %174, %176 : vector<8x8xf32>
    %178 = vector.extract_strided_slice %9 {offsets = [16, 0], sizes = [8, 32], strides = [1, 1]} : vector<32x32xf32> to vector<8x32xf32>
    %cst_58 = arith.constant dense<0.000000e+00> : vector<8x32xf32>
    %179 = tpu.matmul %177, %178, %cst_58 {dimension_numbers = #tpu.dot_dimension_numbers<[1], [0], [0], [1], [0, 0, 1, 1], [], []>} : vector<8x8xf32>, vector<8x32xf32>, vector<8x32xf32> -> vector<8x32xf32>
    %180 = arith.addf %160, %179 : vector<8x32xf32>
    %181 = vector.extract_strided_slice %8 {offsets = [8, 24], sizes = [8, 8], strides = [1, 1]} : vector<16x32xf32> to vector<8x8xf32>
    %182 = vector.extract_strided_slice %4 {offsets = [8, 24], sizes = [8, 8], strides = [1, 1]} : vector<16x32xf32> to vector<8x8xf32>
    %183 = vector.extract_strided_slice %6 {offsets = [8, 24], sizes = [8, 8], strides = [1, 1]} : vector<16x32xf32> to vector<8x8xf32>
    %cst_59 = arith.constant dense<0.000000e+00> : vector<8x8xf32>
    %184 = tpu.matmul %181, %182, %cst_59 {dimension_numbers = #tpu.dot_dimension_numbers<[1], [1], [0], [0], [0, 0, 1, 0], [], []>} : vector<8x8xf32>, vector<8x8xf32>, vector<8x8xf32> -> vector<8x8xf32>
    %cst_60 = arith.constant -1.000000e+30 : f32
    %185 = vector.broadcast %cst_60 : f32 to vector<8x8xf32>
    %186 = arith.select %119, %184, %185 : vector<8x8xi1>, vector<8x8xf32>
    %cst_61 = arith.constant dense<0xFF800000> : vector<8xf32>
    %187 = vector.multi_reduction <maximumf>, %186, %cst_61 [1] : vector<8x8xf32> to vector<8xf32>
    %188 = vector.shape_cast %187 : vector<8xf32> to vector<8x1xf32>
    %189 = vector.broadcast %188 : vector<8x1xf32> to vector<8x8xf32>
    %190 = arith.subf %186, %189 : vector<8x8xf32>
    %191 = math.exp %190 : vector<8x8xf32>
    %cst_62 = arith.constant dense<0.000000e+00> : vector<8xf32>
    %192 = vector.multi_reduction <add>, %191, %cst_62 [1] : vector<8x8xf32> to vector<8xf32>
    %193 = vector.shape_cast %192 : vector<8xf32> to vector<8x1xf32>
    %cst_63 = arith.constant dense<0.000000e+00> : vector<8x8xf32>
    %194 = tpu.matmul %191, %183, %cst_63 {dimension_numbers = #tpu.dot_dimension_numbers<[1], [0], [0], [1], [0, 0, 1, 1], [], []>} : vector<8x8xf32>, vector<8x8xf32>, vector<8x8xf32> -> vector<8x8xf32>
    %195 = tpu.reciprocal %193 : vector<8x1xf32> -> vector<8x1xf32>
    %196 = vector.broadcast %195 : vector<8x1xf32> to vector<8x8xf32>
    %197 = arith.mulf %194, %196 : vector<8x8xf32>
    %198 = vector.extract_strided_slice %9 {offsets = [24, 0], sizes = [8, 32], strides = [1, 1]} : vector<32x32xf32> to vector<8x32xf32>
    %cst_64 = arith.constant dense<0.000000e+00> : vector<8x32xf32>
    %199 = tpu.matmul %197, %198, %cst_64 {dimension_numbers = #tpu.dot_dimension_numbers<[1], [0], [0], [1], [0, 0, 1, 1], [], []>} : vector<8x8xf32>, vector<8x32xf32>, vector<8x32xf32> -> vector<8x32xf32>
    %200 = arith.addf %180, %199 : vector<8x32xf32>
    %201 = vector.broadcast %10 : vector<1x32xf32> to vector<8x32xf32>
    %202 = arith.addf %200, %201 : vector<8x32xf32>
    %203 = tpu.concatenate %108, %202 in 0 : vector<8x32xf32>, vector<8x32xf32> -> vector<16x32xf32>
    %c0_65 = arith.constant 0 : index
    %c0_66 = arith.constant 0 : index
    %204 = vector.load %arg8[%c0_65, %c0_66] : memref<16x32xf32, #tpu.memory_space<vmem>>, vector<16x32xf32>
    tpu.vector_store %arg8[%c0_65, %c0_66], %203 {strides = array<i32>} : memref<16x32xf32, #tpu.memory_space<vmem>>, vector<16x32xf32>,
    return
  }
  func.func @transform_0(%arg0: i32, %arg1: memref<2xi32, #tpu.memory_space<smem>>) -> (i32, i32) {
    %c0_i32 = arith.constant 0 : i32
    %c0_i32_0 = arith.constant 0 : i32
    return %arg0, %c0_i32 : i32, i32
  }
  func.func @transform_1(%arg0: i32, %arg1: memref<2xi32, #tpu.memory_space<smem>>) -> (i32, i32) {
    %c0_i32 = arith.constant 0 : i32
    %c0_i32_0 = arith.constant 0 : i32
    %c0_i32_1 = arith.constant 0 : i32
    return %c0_i32, %c0_i32_0 : i32, i32
  }
  func.func @transform_2(%arg0: i32, %arg1: memref<2xi32, #tpu.memory_space<smem>>) -> (i32, i32) {
    %c0_i32 = arith.constant 0 : i32
    %c0_i32_0 = arith.constant 0 : i32
    %c0_i32_1 = arith.constant 0 : i32
    return %c0_i32, %c0_i32_0 : i32, i32
  }
  func.func @transform_3(%arg0: i32, %arg1: memref<2xi32, #tpu.memory_space<smem>>) -> (i32, i32) {
    %c0_i32 = arith.constant 0 : i32
    %c0_i32_0 = arith.constant 0 : i32
    %c0_i32_1 = arith.constant 0 : i32
    return %c0_i32, %c0_i32_0 : i32, i32
  }
  func.func @transform_4(%arg0: i32, %arg1: memref<2xi32, #tpu.memory_space<smem>>) -> (i32, i32) {
    %c0_i32 = arith.constant 0 : i32
    %c0_i32_0 = arith.constant 0 : i32
    %c0_i32_1 = arith.constant 0 : i32
    return %c0_i32, %c0_i32_0 : i32, i32
  }
  func.func @transform_5(%arg0: i32, %arg1: memref<2xi32, #tpu.memory_space<smem>>) -> (i32, i32) {
    %c0_i32 = arith.constant 0 : i32
    %c0_i32_0 = arith.constant 0 : i32
    %c0_i32_1 = arith.constant 0 : i32
    return %c0_i32, %c0_i32_0 : i32, i32
  }
  func.func @transform_6(%arg0: i32, %arg1: memref<2xi32, #tpu.memory_space<smem>>) -> (i32, i32) {
    %c0_i32 = arith.constant 0 : i32
    %c0_i32_0 = arith.constant 0 : i32
    return %arg0, %c0_i32 : i32, i32
  }
}

module attributes {stable_mosaic.version = 11 : i64} {
  func.func @_mha_kernel(%arg0: i32, %arg1: memref<2xi32, #tpu.memory_space<smem>>, %arg2: memref<16x32xf32, #tpu.memory_space<vmem>>, %arg3: memref<32x32xf32, #tpu.memory_space<vmem>>, %arg4: memref<32x32xf32, #tpu.memory_space<vmem>>, %arg5: memref<32x32xf32, #tpu.memory_space<vmem>>, %arg6: memref<32x32xf32, #tpu.memory_space<vmem>>, %arg7: memref<1x32xf32, #tpu.memory_space<vmem>>, %arg8: memref<16x32xf32, #tpu.memory_space<vmem>>) attributes {dimension_semantics = [#tpu.dimension_semantics<parallel>], iteration_bounds = array<i64: 1>, scalar_prefetch = 1 : i64, scratch_operands = 0 : i64, tpu.core_type = #tpu.core_type<tc>, window_params = [{transform_indices = @transform_0, window_bounds = array<i64: 16, 32>}, {pipeline_mode = #tpu.pipeline_mode<synchronous>, transform_indices = @transform_1, window_bounds = array<i64: 32, 32>}, {pipeline_mode = #tpu.pipeline_mode<synchronous>, transform_indices = @transform_2, window_bounds = array<i64: 32, 32>}, {pipeline_mode = #tpu.pipeline_mode<synchronous>, transform_indices = @transform_3, window_bounds = array<i64: 32, 32>}, {pipeline_mode = #tpu.pipeline_mode<synchronous>, transform_indices = @transform_4, window_bounds = array<i64: 32, 32>}, {pipeline_mode = #tpu.pipeline_mode<synchronous>, transform_indices = @transform_5, window_bounds = array<i64: 1, 32>}, {transform_indices = @transform_6, window_bounds = array<i64: 16, 32>}]} {
    %c0 = arith.constant 0 : index
    %c0_0 = arith.constant 0 : index
    %0 = vector.load %arg2[%c0, %c0_0] : memref<16x32xf32, #tpu.memory_space<vmem>>, vector<16x32xf32>
    %c0_1 = arith.constant 0 : index
    %c0_2 = arith.constant 0 : index
    %1 = vector.load %arg3[%c0_1, %c0_2] : memref<32x32xf32, #tpu.memory_space<vmem>>, vector<32x32xf32>
    %cst = arith.constant dense<0.000000e+00> : vector<16x32xf32>
    %2 = tpu.matmul %0, %1, %cst {dimension_numbers = #tpu.dot_dimension_numbers<[1], [0], [0], [1], [0, 0, 1, 1], [], []>} : vector<16x32xf32>, vector<32x32xf32>, vector<16x32xf32> -> vector<16x32xf32>
    %c0_3 = arith.constant 0 : index
    %c0_4 = arith.constant 0 : index
    %3 = vector.load %arg4[%c0_3, %c0_4] : memref<32x32xf32, #tpu.memory_space<vmem>>, vector<32x32xf32>
    %cst_5 = arith.constant dense<0.000000e+00> : vector<16x32xf32>
    %4 = tpu.matmul %0, %3, %cst_5 {dimension_numbers = #tpu.dot_dimension_numbers<[1], [0], [0], [1], [0, 0, 1, 1], [], []>} : vector<16x32xf32>, vector<32x32xf32>, vector<16x32xf32> -> vector<16x32xf32>
    %c0_6 = arith.constant 0 : index
    %c0_7 = arith.constant 0 : index
    %5 = vector.load %arg5[%c0_6, %c0_7] : memref<32x32xf32, #tpu.memory_space<vmem>>, vector<32x32xf32>
    %cst_8 = arith.constant dense<0.000000e+00> : vector<16x32xf32>
    %6 = tpu.matmul %0, %5, %cst_8 {dimension_numbers = #tpu.dot_dimension_numbers<[1], [0], [0], [1], [0, 0, 1, 1], [], []>} : vector<16x32xf32>, vector<32x32xf32>, vector<16x32xf32> -> vector<16x32xf32>
    %cst_9 = arith.constant 0.353553385 : f32
    %7 = vector.broadcast %cst_9 : f32 to vector<16x32xf32>
    %8 = arith.mulf %2, %7 : vector<16x32xf32>
    %c0_10 = arith.constant 0 : index
    %c0_11 = arith.constant 0 : index
    %9 = vector.load %arg6[%c0_10, %c0_11] : memref<32x32xf32, #tpu.memory_space<vmem>>, vector<32x32xf32>
    %c0_12 = arith.constant 0 : index
    %c0_13 = arith.constant 0 : index
    %10 = vector.load %arg7[%c0_12, %c0_13] : memref<1x32xf32, #tpu.memory_space<vmem>>, vector<1x32xf32>
    %11 = tpu.iota {dimensions = array<i32: 0>} : vector<8x8xi32>
    %12 = tpu.iota {dimensions = array<i32: 1>} : vector<8x8xi32>
    %13 = arith.cmpi sle, %12, %11 : vector<8x8xi32>
    %14 = arith.cmpi eq, %11, %12 : vector<8x8xi32>
    %c2_i32 = arith.constant 2 : i32
    %15 = arith.muli %arg0, %c2_i32 : i32
    %c0_i32 = arith.constant 0 : i32
    %16 = arith.addi %15, %c0_i32 : i32
    %17 = arith.index_cast %16 : i32 to index
    %18 = memref.load %arg1[%17] : memref<2xi32, #tpu.memory_space<smem>>
    %19 = vector.broadcast %18 : i32 to vector<8x8xi32>
    %20 = arith.cmpi slt, %11, %19 : vector<8x8xi32>
    %21 = vector.broadcast %18 : i32 to vector<8x8xi32>
    %22 = arith.cmpi slt, %12, %21 : vector<8x8xi32>
    %23 = arith.andi %20, %22 : vector<8x8xi1>
    %24 = arith.ori %23, %14 : vector<8x8xi1>
    %25 = arith.andi %13, %24 : vector<8x8xi1>
    %cst_14 = arith.constant 0.000000e+00 : f32
    %26 = vector.broadcast %cst_14 : f32 to vector<8x32xf32>
    %27 = vector.extract_strided_slice %8 {offsets = [0, 0], sizes = [8, 8], strides = [1, 1]} : vector<16x32xf32> to vector<8x8xf32>
    %28 = vector.extract_strided_slice %4 {offsets = [0, 0], sizes = [8, 8], strides = [1, 1]} : vector<16x32xf32> to vector<8x8xf32>
    %29 = vector.extract_strided_slice %6 {offsets = [0, 0], sizes = [8, 8], strides = [1, 1]} : vector<16x32xf32> to vector<8x8xf32>
    %cst_15 = arith.constant dense<0.000000e+00> : vector<8x8xf32>
    %30 = tpu.matmul %27, %28, %cst_15 {dimension_numbers = #tpu.dot_dimension_numbers<[1], [1], [0], [0], [0, 0, 1, 0], [], []>} : vector<8x8xf32>, vector<8x8xf32>, vector<8x8xf32> -> vector<8x8xf32>
    %cst_16 = arith.constant -1.000000e+30 : f32
    %31 = vector.broadcast %cst_16 : f32 to vector<8x8xf32>
    %32 = arith.select %25, %30, %31 : vector<8x8xi1>, vector<8x8xf32>
    %cst_17 = arith.constant dense<0xFF800000> : vector<8xf32>
    %33 = vector.multi_reduction <maximumf>, %32, %cst_17 [1] : vector<8x8xf32> to vector<8xf32>
    %34 = vector.shape_cast %33 : vector<8xf32> to vector<8x1xf32>
    %35 = vector.broadcast %34 : vector<8x1xf32> to vector<8x8xf32>
    %36 = arith.subf %32, %35 : vector<8x8xf32>
    %37 = math.exp %36 : vector<8x8xf32>
    %cst_18 = arith.constant dense<0.000000e+00> : vector<8xf32>
    %38 = vector.multi_reduction <add>, %37, %cst_18 [1] : vector<8x8xf32> to vector<8xf32>
    %39 = vector.shape_cast %38 : vector<8xf32> to vector<8x1xf32>
    %cst_19 = arith.constant dense<0.000000e+00> : vector<8x8xf32>
    %40 = tpu.matmul %37, %29, %cst_19 {dimension_numbers = #tpu.dot_dimension_numbers<[1], [0], [0], [1], [0, 0, 1, 1], [], []>} : vector<8x8xf32>, vector<8x8xf32>, vector<8x8xf32> -> vector<8x8xf32>
    %41 = tpu.reciprocal %39 : vector<8x1xf32> -> vector<8x1xf32>
    %42 = vector.broadcast %41 : vector<8x1xf32> to vector<8x8xf32>
    %43 = arith.mulf %40, %42 : vector<8x8xf32>
    %44 = vector.extract_strided_slice %9 {offsets = [0, 0], sizes = [8, 32], strides = [1, 1]} : vector<32x32xf32> to vector<8x32xf32>
    %cst_20 = arith.constant dense<0.000000e+00> : vector<8x32xf32>
    %45 = tpu.matmul %43, %44, %cst_20 {dimension_numbers = #tpu.dot_dimension_numbers<[1], [0], [0], [1], [0, 0, 1, 1], [], []>} : vector<8x8xf32>, vector<8x32xf32>, vector<8x32xf32> -> vector<8x32xf32>
    %46 = arith.addf %26, %45 : vector<8x32xf32>
    %47 = vector.extract_strided_slice %8 {offsets = [0, 8], sizes = [8, 8], strides = [1, 1]} : vector<16x32xf32> to vector<8x8xf32>
    %48 = vector.extract_strided_slice %4 {offsets = [0, 8], sizes = [8, 8], strides = [1, 1]} : vector<16x32xf32> to vector<8x8xf32>
    %49 = vector.extract_strided_slice %6 {offsets = [0, 8], sizes = [8, 8], strides = [1, 1]} : vector<16x32xf32> to vector<8x8xf32>
    %cst_21 = arith.constant dense<0.000000e+00> : vector<8x8xf32>
    %50 = tpu.matmul %47, %48, %cst_21 {dimension_numbers = #tpu.dot_dimension_numbers<[1], [1], [0], [0], [0, 0, 1, 0], [], []>} : vector<8x8xf32>, vector<8x8xf32>, vector<8x8xf32> -> vector<8x8xf32>
    %cst_22 = arith.constant -1.000000e+30 : f32
    %51 = vector.broadcast %cst_22 : f32 to vector<8x8xf32>
    %52 = arith.select %25, %50, %51 : vector<8x8xi1>, vector<8x8xf32>
    %cst_23 = arith.constant dense<0xFF800000> : vector<8xf32>
    %53 = vector.multi_reduction <maximumf>, %52, %cst_23 [1] : vector<8x8xf32> to vector<8xf32>
    %54 = vector.shape_cast %53 : vector<8xf32> to vector<8x1xf32>
    %55 = vector.broadcast %54 : vector<8x1xf32> to vector<8x8xf32>
    %56 = arith.subf %52, %55 : vector<8x8xf32>
    %57 = math.exp %56 : vector<8x8xf32>
    %cst_24 = arith.constant dense<0.000000e+00> : vector<8xf32>
    %58 = vector.multi_reduction <add>, %57, %cst_24 [1] : vector<8x8xf32> to vector<8xf32>
    %59 = vector.shape_cast %58 : vector<8xf32> to vector<8x1xf32>
    %cst_25 = arith.constant dense<0.000000e+00> : vector<8x8xf32>
    %60 = tpu.matmul %57, %49, %cst_25 {dimension_numbers = #tpu.dot_dimension_numbers<[1], [0], [0], [1], [0, 0, 1, 1], [], []>} : vector<8x8xf32>, vector<8x8xf32>, vector<8x8xf32> -> vector<8x8xf32>
    %61 = tpu.reciprocal %59 : vector<8x1xf32> -> vector<8x1xf32>
    %62 = vector.broadcast %61 : vector<8x1xf32> to vector<8x8xf32>
    %63 = arith.mulf %60, %62 : vector<8x8xf32>
    %64 = vector.extract_strided_slice %9 {offsets = [8, 0], sizes = [8, 32], strides = [1, 1]} : vector<32x32xf32> to vector<8x32xf32>
    %cst_26 = arith.constant dense<0.000000e+00> : vector<8x32xf32>
    %65 = tpu.matmul %63, %64, %cst_26 {dimension_numbers = #tpu.dot_dimension_numbers<[1], [0], [0], [1], [0, 0, 1, 1], [], []>} : vector<8x8xf32>, vector<8x32xf32>, vector<8x32xf32> -> vector<8x32xf32>
    %66 = arith.addf %46, %65 : vector<8x32xf32>
    %67 = vector.extract_strided_slice %8 {offsets = [0, 16], sizes = [8, 8], strides = [1, 1]} : vector<16x32xf32> to vector<8x8xf32>
    %68 = vector.extract_strided_slice %4 {offsets = [0, 16], sizes = [8, 8], strides = [1, 1]} : vector<16x32xf32> to vector<8x8xf32>
    %69 = vector.extract_strided_slice %6 {offsets = [0, 16], sizes = [8, 8], strides = [1, 1]} : vector<16x32xf32> to vector<8x8xf32>
    %cst_27 = arith.constant dense<0.000000e+00> : vector<8x8xf32>
    %70 = tpu.matmul %67, %68, %cst_27 {dimension_numbers = #tpu.dot_dimension_numbers<[1], [1], [0], [0], [0, 0, 1, 0], [], []>} : vector<8x8xf32>, vector<8x8xf32>, vector<8x8xf32> -> vector<8x8xf32>
    %cst_28 = arith.constant -1.000000e+30 : f32
    %71 = vector.broadcast %cst_28 : f32 to vector<8x8xf32>
    %72 = arith.select %25, %70, %71 : vector<8x8xi1>, vector<8x8xf32>
    %cst_29 = arith.constant dense<0xFF800000> : vector<8xf32>
    %73 = vector.multi_reduction <maximumf>, %72, %cst_29 [1] : vector<8x8xf32> to vector<8xf32>
    %74 = vector.shape_cast %73 : vector<8xf32> to vector<8x1xf32>
    %75 = vector.broadcast %74 : vector<8x1xf32> to vector<8x8xf32>
    %76 = arith.subf %72, %75 : vector<8x8xf32>
    %77 = math.exp %76 : vector<8x8xf32>
    %cst_30 = arith.constant dense<0.000000e+00> : vector<8xf32>
    %78 = vector.multi_reduction <add>, %77, %cst_30 [1] : vector<8x8xf32> to vector<8xf32>
    %79 = vector.shape_cast %78 : vector<8xf32> to vector<8x1xf32>
    %cst_31 = arith.constant dense<0.000000e+00> : vector<8x8xf32>
    %80 = tpu.matmul %77, %69, %cst_31 {dimension_numbers = #tpu.dot_dimension_numbers<[1], [0], [0], [1], [0, 0, 1, 1], [], []>} : vector<8x8xf32>, vector<8x8xf32>, vector<8x8xf32> -> vector<8x8xf32>
    %81 = tpu.reciprocal %79 : vector<8x1xf32> -> vector<8x1xf32>
    %82 = vector.broadcast %81 : vector<8x1xf32> to vector<8x8xf32>
    %83 = arith.mulf %80, %82 : vector<8x8xf32>
    %84 = vector.extract_strided_slice %9 {offsets = [16, 0], sizes = [8, 32], strides = [1, 1]} : vector<32x32xf32> to vector<8x32xf32>
    %cst_32 = arith.constant dense<0.000000e+00> : vector<8x32xf32>
    %85 = tpu.matmul %83, %84, %cst_32 {dimension_numbers = #tpu.dot_dimension_numbers<[1], [0], [0], [1], [0, 0, 1, 1], [], []>} : vector<8x8xf32>, vector<8x32xf32>, vector<8x32xf32> -> vector<8x32xf32>
    %86 = arith.addf %66, %85 : vector<8x32xf32>
    %87 = vector.extract_strided_slice %8 {offsets = [0, 24], sizes = [8, 8], strides = [1, 1]} : vector<16x32xf32> to vector<8x8xf32>
    %88 = vector.extract_strided_slice %4 {offsets = [0, 24], sizes = [8, 8], strides = [1, 1]} : vector<16x32xf32> to vector<8x8xf32>
    %89 = vector.extract_strided_slice %6 {offsets = [0, 24], sizes = [8, 8], strides = [1, 1]} : vector<16x32xf32> to vector<8x8xf32>
    %cst_33 = arith.constant dense<0.000000e+00> : vector<8x8xf32>
    %90 = tpu.matmul %87, %88, %cst_33 {dimension_numbers = #tpu.dot_dimension_numbers<[1], [1], [0], [0], [0, 0, 1, 0], [], []>} : vector<8x8xf32>, vector<8x8xf32>, vector<8x8xf32> -> vector<8x8xf32>
    %cst_34 = arith.constant -1.000000e+30 : f32
    %91 = vector.broadcast %cst_34 : f32 to vector<8x8xf32>
    %92 = arith.select %25, %90, %91 : vector<8x8xi1>, vector<8x8xf32>
    %cst_35 = arith.constant dense<0xFF800000> : vector<8xf32>
    %93 = vector.multi_reduction <maximumf>, %92, %cst_35 [1] : vector<8x8xf32> to vector<8xf32>
    %94 = vector.shape_cast %93 : vector<8xf32> to vector<8x1xf32>
    %95 = vector.broadcast %94 : vector<8x1xf32> to vector<8x8xf32>
    %96 = arith.subf %92, %95 : vector<8x8xf32>
    %97 = math.exp %96 : vector<8x8xf32>
    %cst_36 = arith.constant dense<0.000000e+00> : vector<8xf32>
    %98 = vector.multi_reduction <add>, %97, %cst_36 [1] : vector<8x8xf32> to vector<8xf32>
    %99 = vector.shape_cast %98 : vector<8xf32> to vector<8x1xf32>
    %cst_37 = arith.constant dense<0.000000e+00> : vector<8x8xf32>
    %100 = tpu.matmul %97, %89, %cst_37 {dimension_numbers = #tpu.dot_dimension_numbers<[1], [0], [0], [1], [0, 0, 1, 1], [], []>} : vector<8x8xf32>, vector<8x8xf32>, vector<8x8xf32> -> vector<8x8xf32>
    %101 = tpu.reciprocal %99 : vector<8x1xf32> -> vector<8x1xf32>
    %102 = vector.broadcast %101 : vector<8x1xf32> to vector<8x8xf32>
    %103 = arith.mulf %100, %102 : vector<8x8xf32>
    %104 = vector.extract_strided_slice %9 {offsets = [24, 0], sizes = [8, 32], strides = [1, 1]} : vector<32x32xf32> to vector<8x32xf32>
    %cst_38 = arith.constant dense<0.000000e+00> : vector<8x32xf32>
    %105 = tpu.matmul %103, %104, %cst_38 {dimension_numbers = #tpu.dot_dimension_numbers<[1], [0], [0], [1], [0, 0, 1, 1], [], []>} : vector<8x8xf32>, vector<8x32xf32>, vector<8x32xf32> -> vector<8x32xf32>
    %106 = arith.addf %86, %105 : vector<8x32xf32>
    %107 = vector.broadcast %10 : vector<1x32xf32> to vector<8x32xf32>
    %108 = arith.addf %106, %107 : vector<8x32xf32>
    %c2_i32_39 = arith.constant 2 : i32
    %109 = arith.muli %arg0, %c2_i32_39 : i32
    %c1_i32 = arith.constant 1 : i32
    %110 = arith.addi %109, %c1_i32 : i32
    %111 = arith.index_cast %110 : i32 to index
    %112 = memref.load %arg1[%111] : memref<2xi32, #tpu.memory_space<smem>>
    %113 = vector.broadcast %112 : i32 to vector<8x8xi32>
    %114 = arith.cmpi slt, %11, %113 : vector<8x8xi32>
    %115 = vector.broadcast %112 : i32 to vector<8x8xi32>
    %116 = arith.cmpi slt, %12, %115 : vector<8x8xi32>
    %117 = arith.andi %114, %116 : vector<8x8xi1>
    %118 = arith.ori %117, %14 : vector<8x8xi1>
    %119 = arith.andi %13, %118 : vector<8x8xi1>
    %cst_40 = arith.constant 0.000000e+00 : f32
    %120 = vector.broadcast %cst_40 : f32 to vector<8x32xf32>
    %121 = vector.extract_strided_slice %8 {offsets = [8, 0], sizes = [8, 8], strides = [1, 1]} : vector<16x32xf32> to vector<8x8xf32>
    %122 = vector.extract_strided_slice %4 {offsets = [8, 0], sizes = [8, 8], strides = [1, 1]} : vector<16x32xf32> to vector<8x8xf32>
    %123 = vector.extract_strided_slice %6 {offsets = [8, 0], sizes = [8, 8], strides = [1, 1]} : vector<16x32xf32> to vector<8x8xf32>
    %cst_41 = arith.constant dense<0.000000e+00> : vector<8x8xf32>
    %124 = tpu.matmul %121, %122, %cst_41 {dimension_numbers = #tpu.dot_dimension_numbers<[1], [1], [0], [0], [0, 0, 1, 0], [], []>} : vector<8x8xf32>, vector<8x8xf32>, vector<8x8xf32> -> vector<8x8xf32>
    %cst_42 = arith.constant -1.000000e+30 : f32
    %125 = vector.broadcast %cst_42 : f32 to vector<8x8xf32>
    %126 = arith.select %119, %124, %125 : vector<8x8xi1>, vector<8x8xf32>
    %cst_43 = arith.constant dense<0xFF800000> : vector<8xf32>
    %127 = vector.multi_reduction <maximumf>, %126, %cst_43 [1] : vector<8x8xf32> to vector<8xf32>
    %128 = vector.shape_cast %127 : vector<8xf32> to vector<8x1xf32>
    %129 = vector.broadcast %128 : vector<8x1xf32> to vector<8x8xf32>
    %130 = arith.subf %126, %129 : vector<8x8xf32>
    %131 = math.exp %130 : vector<8x8xf32>
    %cst_44 = arith.constant dense<0.000000e+00> : vector<8xf32>
    %132 = vector.multi_reduction <add>, %131, %cst_44 [1] : vector<8x8xf32> to vector<8xf32>
    %133 = vector.shape_cast %132 : vector<8xf32> to vector<8x1xf32>
    %cst_45 = arith.constant dense<0.000000e+00> : vector<8x8xf32>
    %134 = tpu.matmul %131, %123, %cst_45 {dimension_numbers = #tpu.dot_dimension_numbers<[1], [0], [0], [1], [0, 0, 1, 1], [], []>} : vector<8x8xf32>, vector<8x8xf32>, vector<8x8xf32> -> vector<8x8xf32>
    %135 = tpu.reciprocal %133 : vector<8x1xf32> -> vector<8x1xf32>
    %136 = vector.broadcast %135 : vector<8x1xf32> to vector<8x8xf32>
    %137 = arith.mulf %134, %136 : vector<8x8xf32>
    %138 = vector.extract_strided_slice %9 {offsets = [0, 0], sizes = [8, 32], strides = [1, 1]} : vector<32x32xf32> to vector<8x32xf32>
    %cst_46 = arith.constant dense<0.000000e+00> : vector<8x32xf32>
    %139 = tpu.matmul %137, %138, %cst_46 {dimension_numbers = #tpu.dot_dimension_numbers<[1], [0], [0], [1], [0, 0, 1, 1], [], []>} : vector<8x8xf32>, vector<8x32xf32>, vector<8x32xf32> -> vector<8x32xf32>
    %140 = arith.addf %120, %139 : vector<8x32xf32>
    %141 = vector.extract_strided_slice %8 {offsets = [8, 8], sizes = [8, 8], strides = [1, 1]} : vector<16x32xf32> to vector<8x8xf32>
    %142 = vector.extract_strided_slice %4 {offsets = [8, 8], sizes = [8, 8], strides = [1, 1]} : vector<16x32xf32> to vector<8x8xf32>
    %143 = vector.extract_strided_slice %6 {offsets = [8, 8], sizes = [8, 8], strides = [1, 1]} : vector<16x32xf32> to vector<8x8xf32>
    %cst_47 = arith.constant dense<0.000000e+00> : vector<8x8xf32>
    %144 = tpu.matmul %141, %142, %cst_47 {dimension_numbers = #tpu.dot_dimension_numbers<[1], [1], [0], [0], [0, 0, 1, 0], [], []>} : vector<8x8xf32>, vector<8x8xf32>, vector<8x8xf32> -> vector<8x8xf32>
    %cst_48 = arith.constant -1.000000e+30 : f32
    %145 = vector.broadcast %cst_48 : f32 to vector<8x8xf32>
    %146 = arith.select %119, %144, %145 : vector<8x8xi1>, vector<8x8xf32>
    %cst_49 = arith.constant dense<0xFF800000> : vector<8xf32>
    %147 = vector.multi_reduction <maximumf>, %146, %cst_49 [1] : vector<8x8xf32> to vector<8xf32>
    %148 = vector.shape_cast %147 : vector<8xf32> to vector<8x1xf32>
    %149 = vector.broadcast %148 : vector<8x1xf32> to vector<8x8xf32>
    %150 = arith.subf %146, %149 : vector<8x8xf32>
    %151 = math.exp %150 : vector<8x8xf32>
    %cst_50 = arith.constant dense<0.000000e+00> : vector<8xf32>
    %152 = vector.multi_reduction <add>, %151, %cst_50 [1] : vector<8x8xf32> to vector<8xf32>
    %153 = vector.shape_cast %152 : vector<8xf32> to vector<8x1xf32>
    %cst_51 = arith.constant dense<0.000000e+00> : vector<8x8xf32>
    %154 = tpu.matmul %151, %143, %cst_51 {dimension_numbers = #tpu.dot_dimension_numbers<[1], [0], [0], [1], [0, 0, 1, 1], [], []>} : vector<8x8xf32>, vector<8x8xf32>, vector<8x8xf32> -> vector<8x8xf32>
    %155 = tpu.reciprocal %153 : vector<8x1xf32> -> vector<8x1xf32>
    %156 = vector.broadcast %155 : vector<8x1xf32> to vector<8x8xf32>
    %157 = arith.mulf %154, %156 : vector<8x8xf32>
    %158 = vector.extract_strided_slice %9 {offsets = [8, 0], sizes = [8, 32], strides = [1, 1]} : vector<32x32xf32> to vector<8x32xf32>
    %cst_52 = arith.constant dense<0.000000e+00> : vector<8x32xf32>
    %159 = tpu.matmul %157, %158, %cst_52 {dimension_numbers = #tpu.dot_dimension_numbers<[1], [0], [0], [1], [0, 0, 1, 1], [], []>} : vector<8x8xf32>, vector<8x32xf32>, vector<8x32xf32> -> vector<8x32xf32>
    %160 = arith.addf %140, %159 : vector<8x32xf32>
    %161 = vector.extract_strided_slice %8 {offsets = [8, 16], sizes = [8, 8], strides = [1, 1]} : vector<16x32xf32> to vector<8x8xf32>
    %162 = vector.extract_strided_slice %4 {offsets = [8, 16], sizes = [8, 8], strides = [1, 1]} : vector<16x32xf32> to vector<8x8xf32>
    %163 = vector.extract_strided_slice %6 {offsets = [8, 16], sizes = [8, 8], strides = [1, 1]} : vector<16x32xf32> to vector<8x8xf32>
    %cst_53 = arith.constant dense<0.000000e+00> : vector<8x8xf32>
    %164 = tpu.matmul %161, %162, %cst_53 {dimension_numbers = #tpu.dot_dimension_numbers<[1], [1], [0], [0], [0, 0, 1, 0], [], []>} : vector<8x8xf32>, vector<8x8xf32>, vector<8x8xf32> -> vector<8x8xf32>
    %cst_54 = arith.constant -1.000000e+30 : f32
    %165 = vector.broadcast %cst_54 : f32 to vector<8x8xf32>
    %166 = arith.select %119, %164, %165 : vector<8x8xi1>, vector<8x8xf32>
    %cst_55 = arith.constant dense<0xFF800000> : vector<8xf32>
    %167 = vector.multi_reduction <maximumf>, %166, %cst_55 [1] : vector<8x8xf32> to vector<8xf32>
    %168 = vector.shape_cast %167 : vector<8xf32> to vector<8x1xf32>
    %169 = vector.broadcast %168 : vector<8x1xf32> to vector<8x8xf32>
    %170 = arith.subf %166, %169 : vector<8x8xf32>
    %171 = math.exp %170 : vector<8x8xf32>
    %cst_56 = arith.constant dense<0.000000e+00> : vector<8xf32>
    %172 = vector.multi_reduction <add>, %171, %cst_56 [1] : vector<8x8xf32> to vector<8xf32>
    %173 = vector.shape_cast %172 : vector<8xf32> to vector<8x1xf32>
    %cst_57 = arith.constant dense<0.000000e+00> : vector<8x8xf32>
    %174 = tpu.matmul %171, %163, %cst_57 {dimension_numbers = #tpu.dot_dimension_numbers<[1], [0], [0], [1], [0, 0, 1, 1], [], []>} : vector<8x8xf32>, vector<8x8xf32>, vector<8x8xf32> -> vector<8x8xf32>
    %175 = tpu.reciprocal %173 : vector<8x1xf32> -> vector<8x1xf32>
    %176 = vector.broadcast %175 : vector<8x1xf32> to vector<8x8xf32>
    %177 = arith.mulf %174, %176 : vector<8x8xf32>
    %178 = vector.extract_strided_slice %9 {offsets = [16, 0], sizes = [8, 32], strides = [1, 1]} : vector<32x32xf32> to vector<8x32xf32>
    %cst_58 = arith.constant dense<0.000000e+00> : vector<8x32xf32>
    %179 = tpu.matmul %177, %178, %cst_58 {dimension_numbers = #tpu.dot_dimension_numbers<[1], [0], [0], [1], [0, 0, 1, 1], [], []>} : vector<8x8xf32>, vector<8x32xf32>, vector<8x32xf32> -> vector<8x32xf32>
    %180 = arith.addf %160, %179 : vector<8x32xf32>
    %181 = vector.extract_strided_slice %8 {offsets = [8, 24], sizes = [8, 8], strides = [1, 1]} : vector<16x32xf32> to vector<8x8xf32>
    %182 = vector.extract_strided_slice %4 {offsets = [8, 24], sizes = [8, 8], strides = [1, 1]} : vector<16x32xf32> to vector<8x8xf32>
    %183 = vector.extract_strided_slice %6 {offsets = [8, 24], sizes = [8, 8], strides = [1, 1]} : vector<16x32xf32> to vector<8x8xf32>
    %cst_59 = arith.constant dense<0.000000e+00> : vector<8x8xf32>
    %184 = tpu.matmul %181, %182, %cst_59 {dimension_numbers = #tpu.dot_dimension_numbers<[1], [1], [0], [0], [0, 0, 1, 0], [], []>} : vector<8x8xf32>, vector<8x8xf32>, vector<8x8xf32> -> vector<8x8xf32>
    %cst_60 = arith.constant -1.000000e+30 : f32
    %185 = vector.broadcast %cst_60 : f32 to vector<8x8xf32>
    %186 = arith.select %119, %184, %185 : vector<8x8xi1>, vector<8x8xf32>
    %cst_61 = arith.constant dense<0xFF800000> : vector<8xf32>
    %187 = vector.multi_reduction <maximumf>, %186, %cst_61 [1] : vector<8x8xf32> to vector<8xf32>
    %188 = vector.shape_cast %187 : vector<8xf32> to vector<8x1xf32>
    %189 = vector.broadcast %188 : vector<8x1xf32> to vector<8x8xf32>
    %190 = arith.subf %186, %189 : vector<8x8xf32>
    %191 = math.exp %190 : vector<8x8xf32>
    %cst_62 = arith.constant dense<0.000000e+00> : vector<8xf32>
    %192 = vector.multi_reduction <add>, %191, %cst_62 [1] : vector<8x8xf32> to vector<8xf32>
    %193 = vector.shape_cast %192 : vector<8xf32> to vector<8x1xf32>
    %cst_63 = arith.constant dense<0.000000e+00> : vector<8x8xf32>
    %194 = tpu.matmul %191, %183, %cst_63 {dimension_numbers = #tpu.dot_dimension_numbers<[1], [0], [0], [1], [0, 0, 1, 1], [], []>} : vector<8x8xf32>, vector<8x8xf32>, vector<8x8xf32> -> vector<8x8xf32>
    %195 = tpu.reciprocal %193 : vector<8x1xf32> -> vector<8x1xf32>
    %196 = vector.broadcast %195 : vector<8x1xf32> to vector<8x8xf32>
    %197 = arith.mulf %194, %196 : vector<8x8xf32>
    %198 = vector.extract_strided_slice %9 {offsets = [24, 0], sizes = [8, 32], strides = [1, 1]} : vector<32x32xf32> to vector<8x32xf32>
    %cst_64 = arith.constant dense<0.000000e+00> : vector<8x32xf32>
    %199 = tpu.matmul %197, %198, %cst_64 {dimension_numbers = #tpu.dot_dimension_numbers<[1], [0], [0], [1], [0, 0, 1, 1], [], []>} : vector<8x8xf32>, vector<8x32xf32>, vector<8x32xf32> -> vector<8x32xf32>
    %200 = arith.addf %180, %199 : vector<8x32xf32>
    %201 = vector.broadcast %10 : vector<1x32xf32> to vector<8x32xf32>
    %202 = arith.addf %200, %201 : vector<8x32xf32>
    %203 = tpu.concatenate %108, %202 in 0 : vector<8x32xf32>, vector<8x32xf32> -> vector<16x32xf32>
    %c0_65 = arith.constant 0 : index
    %c0_66 = arith.constant 0 : index
    %204 = vector.load %arg8[%c0_65, %c0_66] : memref<16x32xf32, #tpu.memory_space<vmem>>, vector<16x32xf32>
    tpu.vector_store %arg8[%c0_65, %c0_66], %203 {strides = array<i32>} : memref<16x32xf32, #tpu.memory_space<vmem>>, vector<16x32xf32>,
    return
  }
  func.func @transform_0(%arg0: i32, %arg1: memref<2xi32, #tpu.memory_space<smem>>) -> (i32, i32) {
    %c0_i32 = arith.constant 0 : i32
    %c0_i32_0 = arith.constant 0 : i32
    return %arg0, %c0_i32 : i32, i32
  }
  func.func @transform_1(%arg0: i32, %arg1: memref<2xi32, #tpu.memory_space<smem>>) -> (i32, i32) {
    %c0_i32 = arith.constant 0 : i32
    %c0_i32_0 = arith.constant 0 : i32
    %c0_i32_1 = arith.constant 0 : i32
    return %c0_i32, %c0_i32_0 : i32, i32
  }
  func.func @transform_2(%arg0: i32, %arg1: memref<2xi32, #tpu.memory_space<smem>>) -> (i32, i32) {
    %c0_i32 = arith.constant 0 : i32
    %c0_i32_0 = arith.constant 0 : i32
    %c0_i32_1 = arith.constant 0 : i32
    return %c0_i32, %c0_i32_0 : i32, i32
  }
  func.func @transform_3(%arg0: i32, %arg1: memref<2xi32, #tpu.memory_space<smem>>) -> (i32, i32) {
    %c0_i32 = arith.constant 0 : i32
    %c0_i32_0 = arith.constant 0 : i32
    %c0_i32_1 = arith.constant 0 : i32
    return %c0_i32, %c0_i32_0 : i32, i32
  }
  func.func @transform_4(%arg0: i32, %arg1: memref<2xi32, #tpu.memory_space<smem>>) -> (i32, i32) {
    %c0_i32 = arith.constant 0 : i32
    %c0_i32_0 = arith.constant 0 : i32
    %c0_i32_1 = arith.constant 0 : i32
    return %c0_i32, %c0_i32_0 : i32, i32
  }
  func.func @transform_5(%arg0: i32, %arg1: memref<2xi32, #tpu.memory_space<smem>>) -> (i32, i32) {
    %c0_i32 = arith.constant 0 : i32
    %c0_i32_0 = arith.constant 0 : i32
    %c0_i32_1 = arith.constant 0 : i32
    return %c0_i32, %c0_i32_0 : i32, i32
  }
  func.func @transform_6(%arg0: i32, %arg1: memref<2xi32, #tpu.memory_space<smem>>) -> (i32, i32) {
    %c0_i32 = arith.constant 0 : i32
    %c0_i32_0 = arith.constant 0 : i32
    return %arg0, %c0_i32 : i32, i32
  }
}

</mosaic_0001>

<llo_original>
// kernel: _mha_pallas.1
$region0: #{_mha_pallas.1}
  #allocation0 [shape = 'u32[]', space=smem, size = 0x4, offset = 0x4, fixed_abs, tag = 'smem constant byte address 0x4 - core index']
  #allocation1 [shape = 'u32[144,128]{1,0:T(1,128)}', space=vmem, size = 0x12000, scoped, tag = 'internal scratch']
  #allocation2 [shape = 's32[1]{0}', space=sflag, size = 0x4, scoped, tag = 'scoped memory for _mha_pallas.1']
  #allocation3 [shape = 'u8[512]{0}', space=smem, size = 0x200, scoped, tag = 'prefetched SMEM operand 0']
  %s0 = inlined_call_operand.vmem [shape: s32[2], index: 0, kind: input, shape index: {}]
  %s1 = inlined_call_operand.hbm [shape: f32[16,32], index: 1, kind: input, shape index: {}]
  %s2 = inlined_call_operand.hbm [shape: f32[32,32], index: 2, kind: input, shape index: {}]
  %s3 = inlined_call_operand.hbm [shape: f32[32,32], index: 3, kind: input, shape index: {}]
  %s4 = inlined_call_operand.hbm [shape: f32[32,32], index: 4, kind: input, shape index: {}]
  %s5 = inlined_call_operand.hbm [shape: f32[32,32], index: 5, kind: input, shape index: {}]
  %s6 = inlined_call_operand.vmem [shape: f32[1,32], index: 6, kind: input, shape index: {}]
  %s7 = inlined_call_operand.hbm [shape: f32[16,32], index: 7, kind: output, shape index: {}]
  %s8 = sld [smem:[#allocation0]]
  $region54: #{_mha_pallas.1} parent=0
    _
  %s10 = ssub.s32 1, %s8
  %s11 = scalar_select 0, %s10, %s8
  %s12 = sshll.u32 %s0, 4
  %s13 = int_to_ptr.vmem [resolvable:$true] %s12
  %15 = dma.vmem_to_smem %s13, 16, [#allocation3], [#allocation2]
  %16 = dma.done [#allocation2], 16
  %17 = sfence
  $region1: #{_mha_pallas.1} parent=0
    #allocation4 [shape = 'u8[8192]{0}', space=vmem, size = 0x2000, scoped, tag = 'input window, operand 1, single buffered']
    #allocation5 [shape = 's32[1]{0}', space=sflag, size = 0x4, scoped, tag = 'scoped memory for _mha_pallas.1']
    #allocation6 [shape = 's32[1]{0}', space=sflag, size = 0x4, scoped, tag = 'scoped memory for _mha_pallas.1']
    #allocation7 [shape = 'u8[16384]{0}', space=vmem, size = 0x4000, scoped, tag = 'input window, operand 2, single buffered']
    #allocation8 [shape = 's32[1]{0}', space=sflag, size = 0x4, scoped, tag = 'scoped memory for _mha_pallas.1']
    #allocation9 [shape = 'u8[16384]{0}', space=vmem, size = 0x4000, scoped, tag = 'input window, operand 3, single buffered']
    #allocation10 [shape = 'u8[16384]{0}', space=vmem, size = 0x4000, scoped, tag = 'input window, operand 4, single buffered']
    #allocation11 [shape = 's32[1]{0}', space=sflag, size = 0x4, scoped, tag = 'scoped memory for _mha_pallas.1']
    #allocation12 [shape = 'u8[16384]{0}', space=vmem, size = 0x4000, scoped, tag = 'input window, operand 5, single buffered']
    #allocation13 [shape = 'u8[8192]{0}', space=vmem, size = 0x2000, scoped, tag = 'output window, operand 0, single buffered']
    %18 = vsyncpa [#allocation5], 0
    %19 = vsyncpa [#allocation8], 0
    %20 = vsyncpa [#allocation11], 0
    %21 = vsyncpa [#allocation6], 0
    // Predicated region
    $region2: #{_mha_pallas.1} parent=1 // pred_check
      _
    $region3: #{_mha_pallas.1} parent=1 // pred_check_branch
      %23 = sbr.rel (0) target = $region5
    $region4: #{_mha_pallas.1} parent=1 // pred_region
      %s25 = ssub.s32 256, 256
      %26 = vsyncadd [#allocation5], %s25
      %s27 = sshll.u32 [#allocation4], 4
      %s28 = int_to_ptr.vmem [resolvable:$true] %s27
      %33 = dma.hbm_to_vmem [thread:$0]  %s1, 256, %s28, [#allocation5], 128, 128, 8
    $region5: #{_mha_pallas.1} parent=1 // pred_fallthru
      _
    // Predicated region
    $region6: #{_mha_pallas.1} parent=1 // pred_check
      _
    $region7: #{_mha_pallas.1} parent=1 // pred_check_branch
      %35 = sbr.rel (0) target = $region9
    $region8: #{_mha_pallas.1} parent=1 // pred_region
      %s37 = ssub.s32 512, 512
      %38 = vsyncadd [#allocation8], %s37
      %s39 = sshll.u32 [#allocation7], 4
      %s40 = int_to_ptr.vmem [resolvable:$true] %s39
      %45 = dma.hbm_to_vmem [thread:$0]  %s2, 512, %s40, [#allocation8], 128, 128, 8
    $region9: #{_mha_pallas.1} parent=1 // pred_fallthru
      _
    // Predicated region
    $region10: #{_mha_pallas.1} parent=1 // pred_check
      _
    $region11: #{_mha_pallas.1} parent=1 // pred_check_branch
      %47 = sbr.rel (0) target = $region13
    $region12: #{_mha_pallas.1} parent=1 // pred_region
      %s49 = ssub.s32 512, 512
      %50 = vsyncadd [#allocation8], %s49
      %s51 = sshll.u32 [#allocation9], 4
      %s52 = int_to_ptr.vmem [resolvable:$true] %s51
      %57 = dma.hbm_to_vmem [thread:$0]  %s3, 512, %s52, [#allocation8], 128, 128, 8
    $region13: #{_mha_pallas.1} parent=1 // pred_fallthru
      _
    // Predicated region
    $region14: #{_mha_pallas.1} parent=1 // pred_check
      _
    $region15: #{_mha_pallas.1} parent=1 // pred_check_branch
      %59 = sbr.rel (0) target = $region17
    $region16: #{_mha_pallas.1} parent=1 // pred_region
      %s61 = ssub.s32 512, 512
      %62 = vsyncadd [#allocation11], %s61
      %s63 = sshll.u32 [#allocation10], 4
      %s64 = int_to_ptr.vmem [resolvable:$true] %s63
      %69 = dma.hbm_to_vmem [thread:$0]  %s4, 512, %s64, [#allocation11], 128, 128, 8
    $region17: #{_mha_pallas.1} parent=1 // pred_fallthru
      _
    // Predicated region
    $region18: #{_mha_pallas.1} parent=1 // pred_check
      _
    $region19: #{_mha_pallas.1} parent=1 // pred_check_branch
      %71 = sbr.rel (0) target = $region21
    $region20: #{_mha_pallas.1} parent=1 // pred_region
      %s73 = ssub.s32 512, 512
      %74 = vsyncadd [#allocation11], %s73
      %s75 = sshll.u32 [#allocation12], 4
      %s76 = int_to_ptr.vmem [resolvable:$true] %s75
      %81 = dma.hbm_to_vmem [thread:$0]  %s5, 512, %s76, [#allocation11], 128, 128, 8
    $region21: #{_mha_pallas.1} parent=1 // pred_fallthru
      _
    // Predicated region
    $region22: #{_mha_pallas.1} parent=1 // pred_check
      _
    $region23: #{_mha_pallas.1} parent=1 // pred_check_branch
      %83 = sbr.rel (0) target = $region25
    $region24: #{_mha_pallas.1} parent=1 // pred_region
      _
    $region25: #{_mha_pallas.1} parent=1 // pred_fallthru
      _
    // Predicated region
    $region26: #{_mha_pallas.1} parent=1 // pred_check
      _
    $region27: #{_mha_pallas.1} parent=1 // pred_check_branch
      %85 = sbr.rel (0) target = $region29
    $region28: #{_mha_pallas.1} parent=1 // pred_region
      %86 = dma.done [#allocation5], 256
    $region29: #{_mha_pallas.1} parent=1 // pred_fallthru
      _
    // Predicated region
    $region30: #{_mha_pallas.1} parent=1 // pred_check
      _
    $region31: #{_mha_pallas.1} parent=1 // pred_check_branch
      %88 = sbr.rel (0) target = $region33
    $region32: #{_mha_pallas.1} parent=1 // pred_region
      %89 = dma.done [#allocation8], 512
    $region33: #{_mha_pallas.1} parent=1 // pred_fallthru
      _
    // Predicated region
    $region34: #{_mha_pallas.1} parent=1 // pred_check
      _
    $region35: #{_mha_pallas.1} parent=1 // pred_check_branch
      %91 = sbr.rel (0) target = $region37
    $region36: #{_mha_pallas.1} parent=1 // pred_region
      %92 = dma.done [#allocation8], 512
    $region37: #{_mha_pallas.1} parent=1 // pred_fallthru
      _
    // Predicated region
    $region38: #{_mha_pallas.1} parent=1 // pred_check
      _
    $region39: #{_mha_pallas.1} parent=1 // pred_check_branch
      %94 = sbr.rel (0) target = $region41
    $region40: #{_mha_pallas.1} parent=1 // pred_region
      %95 = dma.done [#allocation11], 512
    $region41: #{_mha_pallas.1} parent=1 // pred_fallthru
      _
    // Predicated region
    $region42: #{_mha_pallas.1} parent=1 // pred_check
      _
    $region43: #{_mha_pallas.1} parent=1 // pred_check_branch
      %97 = sbr.rel (0) target = $region45
    $region44: #{_mha_pallas.1} parent=1 // pred_region
      %98 = dma.done [#allocation11], 512
    $region45: #{_mha_pallas.1} parent=1 // pred_fallthru
      _
    %v99 = vld [vmem:[#allocation4] sm:$0xff]
    %v100 = vld [vmem:[#allocation4 + $0x8] sm:$0xff]
    %v101 = vld [vmem:[#allocation7] sm:$0xff]
    %v102 = vld [vmem:[#allocation7 + $0x8] sm:$0xff]
    %v103 = vld [vmem:[#allocation7 + $0x10] sm:$0xff]
    %v104 = vld [vmem:[#allocation7 + $0x18] sm:$0xff]
    %vm105 = vcmask 261120
    %v107 = vsel %vm105, %v99, 0
    %v110 = vsel %vm105, %v100, 0
    %112 = vmatprep.subr.mxu0 0.0
    %113 = vmatpush1.msra.mxu0 %v101
    %114 = vmatprep.subr.mxu0 0.0
    %115 = vmatpush1.msra.mxu0 %v102
    %116 = vmatprep.subr.mxu0 0.0
    %117 = vmatpush1.msra.mxu0 %v103
    %118 = vmatprep.subr.mxu0 0.0
    %119 = vmatpush1.msra.mxu0 %v104
    %120 = vmatprep.subr.mxu0 0.0
    %121 = vmatpush1.msra.mxu0 0.0
    %122 = vmatprep.subr.mxu0 0.0
    %123 = vmatpush1.msra.mxu0 0.0
    %124 = vmatprep.subr.mxu0 0.0
    %125 = vmatpush1.msra.mxu0 0.0
    %126 = vmatprep.subr.mxu0 0.0
    %127 = vmatpush1.msra.mxu0 0.0
    %128 = vmatprep.subr.mxu0 0.0
    %129 = vmatpush1.msra.mxu0 0.0
    %130 = vmatprep.subr.mxu0 0.0
    %131 = vmatpush1.msra.mxu0 0.0
    %132 = vmatprep.subr.mxu0 0.0
    %133 = vmatpush1.msra.mxu0 0.0
    %134 = vmatprep.subr.mxu0 0.0
    %135 = vmatpush1.msra.mxu0 0.0
    %136 = vmatprep.subr.mxu0 0.0
    %137 = vmatpush1.msra.mxu0 0.0
    %138 = vmatprep.subr.mxu0 0.0
    %139 = vmatpush1.msra.mxu0 0.0
    %140 = vmatprep.subr.mxu0 0.0
    %141 = vmatpush1.msra.mxu0 0.0
    %142 = vmatprep.subr.mxu0 0.0
    %143 = vmatpush1.msra.mxu0 0.0
    %144 = vmatprep.subr.mxu0 0.0
    %145 = vmatpush1.msra.mxu0 0.0
    %146 = vmatprep.subr.mxu0 0.0
    %147 = vmatpush1.msra.mxu0 0.0
    %148 = vmatprep.subr.mxu0 0.0
    %149 = vmatpush1.msra.mxu0 0.0
    %150 = vmatprep.subr.mxu0 0.0
    %151 = vmatpush1.msra.mxu0 0.0
    %152 = vmatprep.subr.mxu0 0.0
    %153 = vmatpush1.msra.mxu0 0.0
    %154 = vmatprep.subr.mxu0 0.0
    %155 = vmatpush1.msra.mxu0 0.0
    %156 = vmatprep.subr.mxu0 0.0
    %157 = vmatpush1.msra.mxu0 0.0
    %158 = vmatprep.subr.mxu0 0.0
    %159 = vmatpush1.msra.mxu0 0.0
    %160 = vmatprep.subr.mxu0 0.0
    %161 = vmatpush1.msra.mxu0 0.0
    %162 = vmatprep.subr.mxu0 0.0
    %163 = vmatpush1.msra.mxu0 0.0
    %164 = vmatprep.subr.mxu0 0.0
    %165 = vmatpush1.msra.mxu0 0.0
    %166 = vmatprep.subr.mxu0 0.0
    %167 = vmatpush1.msra.mxu0 0.0
    %168 = vmatprep.subr.mxu0 0.0
    %169 = vmatpush1.msra.mxu0 0.0
    %170 = vmatprep.subr.mxu0 0.0
    %171 = vmatpush1.msra.mxu0 0.0
    %172 = vmatprep.subr.mxu0 0.0
    %173 = vmatpush1.msra.mxu0 0.0
    %174 = vmatprep.subr.mxu0 0.0
    %175 = vmatpush1.msra.mxu0 0.0
    %176 = vmatprep.mubr.f32.mxu0 0.0
    %177 = vmatmul.mubr.f32.gmra.mrb[0].mxu0 %v107
    %v178 = vpop.f32.mrb[0].mxu0
    %v179 = vadd.f32 0.0, %v178
    %v180 = vpop.f32.mrb[0].mxu0
    %181 = vmatprep.mubr.f32.mxu0 0.0
    %182 = vmatmul.mubr.f32.gmra.mrb[0].mxu0 %v110
    %v183 = vpop.f32.mrb[0].mxu0
    %v184 = vadd.f32 0.0, %v183
    %v185 = vpop.f32.mrb[0].mxu0
    %186 = vdwg.mxu0
    %v187 = vld [vmem:[#allocation9] sm:$0xff]
    %v188 = vld [vmem:[#allocation9 + $0x8] sm:$0xff]
    %v189 = vld [vmem:[#allocation9 + $0x10] sm:$0xff]
    %v190 = vld [vmem:[#allocation9 + $0x18] sm:$0xff]
    %191 = vmatprep.subr.mxu0 0.0
    %192 = vmatpush1.msra.mxu0 %v187
    %193 = vmatprep.subr.mxu0 0.0
    %194 = vmatpush1.msra.mxu0 %v188
    %195 = vmatprep.subr.mxu0 0.0
    %196 = vmatpush1.msra.mxu0 %v189
    %197 = vmatprep.subr.mxu0 0.0
    %198 = vmatpush1.msra.mxu0 %v190
    %199 = vmatprep.subr.mxu0 0.0
    %200 = vmatpush1.msra.mxu0 0.0
    %201 = vmatprep.subr.mxu0 0.0
    %202 = vmatpush1.msra.mxu0 0.0
    %203 = vmatprep.subr.mxu0 0.0
    %204 = vmatpush1.msra.mxu0 0.0
    %205 = vmatprep.subr.mxu0 0.0
    %206 = vmatpush1.msra.mxu0 0.0
    %207 = vmatprep.subr.mxu0 0.0
    %208 = vmatpush1.msra.mxu0 0.0
    %209 = vmatprep.subr.mxu0 0.0
    %210 = vmatpush1.msra.mxu0 0.0
    %211 = vmatprep.subr.mxu0 0.0
    %212 = vmatpush1.msra.mxu0 0.0
    %213 = vmatprep.subr.mxu0 0.0
    %214 = vmatpush1.msra.mxu0 0.0
    %215 = vmatprep.subr.mxu0 0.0
    %216 = vmatpush1.msra.mxu0 0.0
    %217 = vmatprep.subr.mxu0 0.0
    %218 = vmatpush1.msra.mxu0 0.0
    %219 = vmatprep.subr.mxu0 0.0
    %220 = vmatpush1.msra.mxu0 0.0
    %221 = vmatprep.subr.mxu0 0.0
    %222 = vmatpush1.msra.mxu0 0.0
    %223 = vmatprep.subr.mxu0 0.0
    %224 = vmatpush1.msra.mxu0 0.0
    %225 = vmatprep.subr.mxu0 0.0
    %226 = vmatpush1.msra.mxu0 0.0
    %227 = vmatprep.subr.mxu0 0.0
    %228 = vmatpush1.msra.mxu0 0.0
    %229 = vmatprep.subr.mxu0 0.0
    %230 = vmatpush1.msra.mxu0 0.0
    %231 = vmatprep.subr.mxu0 0.0
    %232 = vmatpush1.msra.mxu0 0.0
    %233 = vmatprep.subr.mxu0 0.0
    %234 = vmatpush1.msra.mxu0 0.0
    %235 = vmatprep.subr.mxu0 0.0
    %236 = vmatpush1.msra.mxu0 0.0
    %237 = vmatprep.subr.mxu0 0.0
    %238 = vmatpush1.msra.mxu0 0.0
    %239 = vmatprep.subr.mxu0 0.0
    %240 = vmatpush1.msra.mxu0 0.0
    %241 = vmatprep.subr.mxu0 0.0
    %242 = vmatpush1.msra.mxu0 0.0
    %243 = vmatprep.subr.mxu0 0.0
    %244 = vmatpush1.msra.mxu0 0.0
    %245 = vmatprep.subr.mxu0 0.0
    %246 = vmatpush1.msra.mxu0 0.0
    %247 = vmatprep.subr.mxu0 0.0
    %248 = vmatpush1.msra.mxu0 0.0
    %249 = vmatprep.subr.mxu0 0.0
    %250 = vmatpush1.msra.mxu0 0.0
    %251 = vmatprep.subr.mxu0 0.0
    %252 = vmatpush1.msra.mxu0 0.0
    %253 = vmatprep.subr.mxu0 0.0
    %254 = vmatpush1.msra.mxu0 0.0
    %255 = vmatprep.mubr.f32.mxu0 0.0
    %256 = vmatmul.mubr.f32.gmra.mrb[0].mxu0 %v107
    %v257 = vpop.f32.mrb[0].mxu0
    %v258 = vadd.f32 0.0, %v257
    %v259 = vpop.f32.mrb[0].mxu0
    %260 = vmatprep.mubr.f32.mxu0 0.0
    %261 = vmatmul.mubr.f32.gmra.mrb[0].mxu0 %v110
    %v262 = vpop.f32.mrb[0].mxu0
    %v263 = vadd.f32 0.0, %v262
    %v264 = vpop.f32.mrb[0].mxu0
    %265 = vdwg.mxu0
    %v266 = vld [vmem:[#allocation10] sm:$0xff]
    %v267 = vld [vmem:[#allocation10 + $0x8] sm:$0xff]
    %v268 = vld [vmem:[#allocation10 + $0x10] sm:$0xff]
    %v269 = vld [vmem:[#allocation10 + $0x18] sm:$0xff]
    %270 = vmatprep.subr.mxu0 0.0
    %271 = vmatpush1.msra.mxu0 %v266
    %272 = vmatprep.subr.mxu0 0.0
    %273 = vmatpush1.msra.mxu0 %v267
    %274 = vmatprep.subr.mxu0 0.0
    %275 = vmatpush1.msra.mxu0 %v268
    %276 = vmatprep.subr.mxu0 0.0
    %277 = vmatpush1.msra.mxu0 %v269
    %278 = vmatprep.subr.mxu0 0.0
    %279 = vmatpush1.msra.mxu0 0.0
    %280 = vmatprep.subr.mxu0 0.0
    %281 = vmatpush1.msra.mxu0 0.0
    %282 = vmatprep.subr.mxu0 0.0
    %283 = vmatpush1.msra.mxu0 0.0
    %284 = vmatprep.subr.mxu0 0.0
    %285 = vmatpush1.msra.mxu0 0.0
    %286 = vmatprep.subr.mxu0 0.0
    %287 = vmatpush1.msra.mxu0 0.0
    %288 = vmatprep.subr.mxu0 0.0
    %289 = vmatpush1.msra.mxu0 0.0
    %290 = vmatprep.subr.mxu0 0.0
    %291 = vmatpush1.msra.mxu0 0.0
    %292 = vmatprep.subr.mxu0 0.0
    %293 = vmatpush1.msra.mxu0 0.0
    %294 = vmatprep.subr.mxu0 0.0
    %295 = vmatpush1.msra.mxu0 0.0
    %296 = vmatprep.subr.mxu0 0.0
    %297 = vmatpush1.msra.mxu0 0.0
    %298 = vmatprep.subr.mxu0 0.0
    %299 = vmatpush1.msra.mxu0 0.0
    %300 = vmatprep.subr.mxu0 0.0
    %301 = vmatpush1.msra.mxu0 0.0
    %302 = vmatprep.subr.mxu0 0.0
    %303 = vmatpush1.msra.mxu0 0.0
    %304 = vmatprep.subr.mxu0 0.0
    %305 = vmatpush1.msra.mxu0 0.0
    %306 = vmatprep.subr.mxu0 0.0
    %307 = vmatpush1.msra.mxu0 0.0
    %308 = vmatprep.subr.mxu0 0.0
    %309 = vmatpush1.msra.mxu0 0.0
    %310 = vmatprep.subr.mxu0 0.0
    %311 = vmatpush1.msra.mxu0 0.0
    %312 = vmatprep.subr.mxu0 0.0
    %313 = vmatpush1.msra.mxu0 0.0
    %314 = vmatprep.subr.mxu0 0.0
    %315 = vmatpush1.msra.mxu0 0.0
    %316 = vmatprep.subr.mxu0 0.0
    %317 = vmatpush1.msra.mxu0 0.0
    %318 = vmatprep.subr.mxu0 0.0
    %319 = vmatpush1.msra.mxu0 0.0
    %320 = vmatprep.subr.mxu0 0.0
    %321 = vmatpush1.msra.mxu0 0.0
    %322 = vmatprep.subr.mxu0 0.0
    %323 = vmatpush1.msra.mxu0 0.0
    %324 = vmatprep.subr.mxu0 0.0
    %325 = vmatpush1.msra.mxu0 0.0
    %326 = vmatprep.subr.mxu0 0.0
    %327 = vmatpush1.msra.mxu0 0.0
    %328 = vmatprep.subr.mxu0 0.0
    %329 = vmatpush1.msra.mxu0 0.0
    %330 = vmatprep.subr.mxu0 0.0
    %331 = vmatpush1.msra.mxu0 0.0
    %332 = vmatprep.subr.mxu0 0.0
    %333 = vmatpush1.msra.mxu0 0.0
    %334 = vmatprep.mubr.f32.mxu0 0.0
    %335 = vmatmul.mubr.f32.gmra.mrb[0].mxu0 %v107
    %v336 = vpop.f32.mrb[0].mxu0
    %v337 = vadd.f32 0.0, %v336
    %v338 = vpop.f32.mrb[0].mxu0
    %339 = vmatprep.mubr.f32.mxu0 0.0
    %340 = vmatmul.mubr.f32.gmra.mrb[0].mxu0 %v110
    %v341 = vpop.f32.mrb[0].mxu0
    %v342 = vadd.f32 0.0, %v341
    %v343 = vpop.f32.mrb[0].mxu0
    %344 = vdwg.mxu0
    %v345 = vmul.f32 %v179, 0.35355338
    %v346 = vmul.f32 %v184, 0.35355338
    %v347 = vld [vmem:[#allocation12] sm:$0xff]
    %v348 = vld [vmem:[#allocation12 + $0x8] sm:$0xff]
    %v349 = vld [vmem:[#allocation12 + $0x10] sm:$0xff]
    %v350 = vld [vmem:[#allocation12 + $0x18] sm:$0xff]
    %v351 = vld [vmem:[%s6] sm:$0x1]
    %v352 = vlaneseq
    %v353 = vshrl.u32 %v352, 7
    %v354 = vlaneseq
    %v355 = vand.u32 %v354, 127
    %vm356 = vcmp.le.s32.totalorder %v355, %v353
    %vm357 = vcmp.eq.s32.totalorder %v353, %v355
    %s358 = smul.u32 0, 2
    %s359 = sld [smem:[#allocation3 + %s358]]
    %v360 = vstv %s359
    %vm361 = vcmp.lt.s32.totalorder %v353, %v360
    %vm362 = vcmp.lt.s32.totalorder %v355, %v360
    %vm363 = vmand %vm361, %vm362
    %vm364 = vmor %vm363, %vm357
    %vm365 = vmand %vm356, %vm364
    %vm366 = vcmask 64512
    %v368 = vsel %vm366, %v345, 0
    %v371 = vsel %vm366, %v258, 0
    %373 = vmatprep.subr.mxu0 0.0
    %374 = vmatpush1.xpose.msra.mxu0 %v371
    %375 = vmatprep.subr.mxu0 0.0
    %376 = vmatpush1.xpose.msra.mxu0 0.0
    %377 = vmatprep.subr.mxu0 0.0
    %378 = vmatpush1.xpose.msra.mxu0 0.0
    %379 = vmatprep.subr.mxu0 0.0
    %380 = vmatpush1.xpose.msra.mxu0 0.0
    %381 = vmatprep.subr.mxu0 0.0
    %382 = vmatpush1.xpose.msra.mxu0 0.0
    %383 = vmatprep.subr.mxu0 0.0
    %384 = vmatpush1.xpose.msra.mxu0 0.0
    %385 = vmatprep.subr.mxu0 0.0
    %386 = vmatpush1.xpose.msra.mxu0 0.0
    %387 = vmatprep.subr.mxu0 0.0
    %388 = vmatpush1.xpose.msra.mxu0 0.0
    %389 = vmatprep.subr.mxu0 0.0
    %390 = vmatpush1.xpose.msra.mxu0 0.0
    %391 = vmatprep.subr.mxu0 0.0
    %392 = vmatpush1.xpose.msra.mxu0 0.0
    %393 = vmatprep.subr.mxu0 0.0
    %394 = vmatpush1.xpose.msra.mxu0 0.0
    %395 = vmatprep.subr.mxu0 0.0
    %396 = vmatpush1.xpose.msra.mxu0 0.0
    %397 = vmatprep.subr.mxu0 0.0
    %398 = vmatpush1.xpose.msra.mxu0 0.0
    %399 = vmatprep.subr.mxu0 0.0
    %400 = vmatpush1.xpose.msra.mxu0 0.0
    %401 = vmatprep.subr.mxu0 0.0
    %402 = vmatpush1.xpose.msra.mxu0 0.0
    %403 = vmatprep.subr.mxu0 0.0
    %404 = vmatpush1.xpose.msra.mxu0 0.0
    %405 = vmatprep.subr.mxu0 0.0
    %406 = vmatpush1.xpose.msra.mxu0 0.0
    %407 = vmatprep.subr.mxu0 0.0
    %408 = vmatpush1.xpose.msra.mxu0 0.0
    %409 = vmatprep.subr.mxu0 0.0
    %410 = vmatpush1.xpose.msra.mxu0 0.0
    %411 = vmatprep.subr.mxu0 0.0
    %412 = vmatpush1.xpose.msra.mxu0 0.0
    %413 = vmatprep.subr.mxu0 0.0
    %414 = vmatpush1.xpose.msra.mxu0 0.0
    %415 = vmatprep.subr.mxu0 0.0
    %416 = vmatpush1.xpose.msra.mxu0 0.0
    %417 = vmatprep.subr.mxu0 0.0
    %418 = vmatpush1.xpose.msra.mxu0 0.0
    %419 = vmatprep.subr.mxu0 0.0
    %420 = vmatpush1.xpose.msra.mxu0 0.0
    %421 = vmatprep.subr.mxu0 0.0
    %422 = vmatpush1.xpose.msra.mxu0 0.0
    %423 = vmatprep.subr.mxu0 0.0
    %424 = vmatpush1.xpose.msra.mxu0 0.0
    %425 = vmatprep.subr.mxu0 0.0
    %426 = vmatpush1.xpose.msra.mxu0 0.0
    %427 = vmatprep.subr.mxu0 0.0
    %428 = vmatpush1.xpose.msra.mxu0 0.0
    %429 = vmatprep.subr.mxu0 0.0
    %430 = vmatpush1.xpose.msra.mxu0 0.0
    %431 = vmatprep.subr.mxu0 0.0
    %432 = vmatpush1.xpose.msra.mxu0 0.0
    %433 = vmatprep.subr.mxu0 0.0
    %434 = vmatpush1.xpose.msra.mxu0 0.0
    %435 = vmatprep.subr.mxu0 0.0
    %436 = vmatpush1.xpose.msra.mxu0 0.0
    %437 = vmatprep.mubr.f32.mxu0 0.0
    %438 = vmatmul.mubr.f32.gmra.mrb[0].mxu0 %v368
    %v439 = vpop.f32.mrb[0].mxu0
    %v440 = vadd.f32 0.0, %v439
    %v441 = vpop.f32.mrb[0].mxu0
    %442 = vdwg.mxu0
    %v443 = vsel %vm365, %v440, -1e+30
    %v444 = vsel %vm366, %v443, -inf
    %445 = vmax.xlane.f32.xlu0 %v444
    %v446 = vpop.xlane.xlu0 %445
    %v447 = vsub.f32 %v443, %v446
    %v448 = vmul.f32 %v447, 1.442695
    %v449 = vpow.pop %v448
    %v450 = vsel %vm366, %v449, 0.0
    %451 = vadd.xlane.f32.xlu0 %v450
    %v452 = vpop.xlane.xlu0 %451
    %v454 = vsel %vm366, %v449, 0
    %456 = vmatprep.subr.mxu0 0.0
    %457 = vmatpush1.msra.mxu0 %v337
    %458 = vmatprep.subr.mxu0 0.0
    %459 = vmatpush1.msra.mxu0 0.0
    %460 = vmatprep.subr.mxu0 0.0
    %461 = vmatpush1.msra.mxu0 0.0
    %462 = vmatprep.subr.mxu0 0.0
    %463 = vmatpush1.msra.mxu0 0.0
    %464 = vmatprep.subr.mxu0 0.0
    %465 = vmatpush1.msra.mxu0 0.0
    %466 = vmatprep.subr.mxu0 0.0
    %467 = vmatpush1.msra.mxu0 0.0
    %468 = vmatprep.subr.mxu0 0.0
    %469 = vmatpush1.msra.mxu0 0.0
    %470 = vmatprep.subr.mxu0 0.0
    %471 = vmatpush1.msra.mxu0 0.0
    %472 = vmatprep.subr.mxu0 0.0
    %473 = vmatpush1.msra.mxu0 0.0
    %474 = vmatprep.subr.mxu0 0.0
    %475 = vmatpush1.msra.mxu0 0.0
    %476 = vmatprep.subr.mxu0 0.0
    %477 = vmatpush1.msra.mxu0 0.0
    %478 = vmatprep.subr.mxu0 0.0
    %479 = vmatpush1.msra.mxu0 0.0
    %480 = vmatprep.subr.mxu0 0.0
    %481 = vmatpush1.msra.mxu0 0.0
    %482 = vmatprep.subr.mxu0 0.0
    %483 = vmatpush1.msra.mxu0 0.0
    %484 = vmatprep.subr.mxu0 0.0
    %485 = vmatpush1.msra.mxu0 0.0
    %486 = vmatprep.subr.mxu0 0.0
    %487 = vmatpush1.msra.mxu0 0.0
    %488 = vmatprep.subr.mxu0 0.0
    %489 = vmatpush1.msra.mxu0 0.0
    %490 = vmatprep.subr.mxu0 0.0
    %491 = vmatpush1.msra.mxu0 0.0
    %492 = vmatprep.subr.mxu0 0.0
    %493 = vmatpush1.msra.mxu0 0.0
    %494 = vmatprep.subr.mxu0 0.0
    %495 = vmatpush1.msra.mxu0 0.0
    %496 = vmatprep.subr.mxu0 0.0
    %497 = vmatpush1.msra.mxu0 0.0
    %498 = vmatprep.subr.mxu0 0.0
    %499 = vmatpush1.msra.mxu0 0.0
    %500 = vmatprep.subr.mxu0 0.0
    %501 = vmatpush1.msra.mxu0 0.0
    %502 = vmatprep.subr.mxu0 0.0
    %503 = vmatpush1.msra.mxu0 0.0
    %504 = vmatprep.subr.mxu0 0.0
    %505 = vmatpush1.msra.mxu0 0.0
    %506 = vmatprep.subr.mxu0 0.0
    %507 = vmatpush1.msra.mxu0 0.0
    %508 = vmatprep.subr.mxu0 0.0
    %509 = vmatpush1.msra.mxu0 0.0
    %510 = vmatprep.subr.mxu0 0.0
    %511 = vmatpush1.msra.mxu0 0.0
    %512 = vmatprep.subr.mxu0 0.0
    %513 = vmatpush1.msra.mxu0 0.0
    %514 = vmatprep.subr.mxu0 0.0
    %515 = vmatpush1.msra.mxu0 0.0
    %516 = vmatprep.subr.mxu0 0.0
    %517 = vmatpush1.msra.mxu0 0.0
    %518 = vmatprep.subr.mxu0 0.0
    %519 = vmatpush1.msra.mxu0 0.0
    %520 = vmatprep.mubr.f32.mxu0 0.0
    %521 = vmatmul.mubr.f32.gmra.mrb[0].mxu0 %v454
    %v522 = vpop.f32.mrb[0].mxu0
    %v523 = vadd.f32 0.0, %v522
    %v524 = vpop.f32.mrb[0].mxu0
    %525 = vdwg.mxu0
    %v526 = vrcp.pop %v452
    %v527 = vmul.f32 %v523, %v526
    %528 = vrot.lane.b32.xlu0 %v345, 120
    %v529 = vpop.permute.xlu0 %528
    %530 = vrot.lane.b32.xlu0 %v258, 120
    %v531 = vpop.permute.xlu0 %530
    %v532 = vsel %vm366, %v529, 0
    %v534 = vsel %vm366, %v531, 0
    %536 = vmatprep.subr.mxu0 0.0
    %537 = vmatpush1.xpose.msra.mxu0 %v534
    %538 = vmatprep.subr.mxu0 0.0
    %539 = vmatpush1.xpose.msra.mxu0 0.0
    %540 = vmatprep.subr.mxu0 0.0
    %541 = vmatpush1.xpose.msra.mxu0 0.0
    %542 = vmatprep.subr.mxu0 0.0
    %543 = vmatpush1.xpose.msra.mxu0 0.0
    %544 = vmatprep.subr.mxu0 0.0
    %545 = vmatpush1.xpose.msra.mxu0 0.0
    %546 = vmatprep.subr.mxu0 0.0
    %547 = vmatpush1.xpose.msra.mxu0 0.0
    %548 = vmatprep.subr.mxu0 0.0
    %549 = vmatpush1.xpose.msra.mxu0 0.0
    %550 = vmatprep.subr.mxu0 0.0
    %551 = vmatpush1.xpose.msra.mxu0 0.0
    %552 = vmatprep.subr.mxu0 0.0
    %553 = vmatpush1.xpose.msra.mxu0 0.0
    %554 = vmatprep.subr.mxu0 0.0
    %555 = vmatpush1.xpose.msra.mxu0 0.0
    %556 = vmatprep.subr.mxu0 0.0
    %557 = vmatpush1.xpose.msra.mxu0 0.0
    %558 = vmatprep.subr.mxu0 0.0
    %559 = vmatpush1.xpose.msra.mxu0 0.0
    %560 = vmatprep.subr.mxu0 0.0
    %561 = vmatpush1.xpose.msra.mxu0 0.0
    %562 = vmatprep.subr.mxu0 0.0
    %563 = vmatpush1.xpose.msra.mxu0 0.0
    %564 = vmatprep.subr.mxu0 0.0
    %565 = vmatpush1.xpose.msra.mxu0 0.0
    %566 = vmatprep.subr.mxu0 0.0
    %567 = vmatpush1.xpose.msra.mxu0 0.0
    %568 = vmatprep.subr.mxu0 0.0
    %569 = vmatpush1.xpose.msra.mxu0 0.0
    %570 = vmatprep.subr.mxu0 0.0
    %571 = vmatpush1.xpose.msra.mxu0 0.0
    %572 = vmatprep.subr.mxu0 0.0
    %573 = vmatpush1.xpose.msra.mxu0 0.0
    %574 = vmatprep.subr.mxu0 0.0
    %575 = vmatpush1.xpose.msra.mxu0 0.0
    %576 = vmatprep.subr.mxu0 0.0
    %577 = vmatpush1.xpose.msra.mxu0 0.0
    %578 = vmatprep.subr.mxu0 0.0
    %579 = vmatpush1.xpose.msra.mxu0 0.0
    %580 = vmatprep.subr.mxu0 0.0
    %581 = vmatpush1.xpose.msra.mxu0 0.0
    %582 = vmatprep.subr.mxu0 0.0
    %583 = vmatpush1.xpose.msra.mxu0 0.0
    %584 = vmatprep.subr.mxu0 0.0
    %585 = vmatpush1.xpose.msra.mxu0 0.0
    %586 = vmatprep.subr.mxu0 0.0
    %587 = vmatpush1.xpose.msra.mxu0 0.0
    %588 = vmatprep.subr.mxu0 0.0
    %589 = vmatpush1.xpose.msra.mxu0 0.0
    %590 = vmatprep.subr.mxu0 0.0
    %591 = vmatpush1.xpose.msra.mxu0 0.0
    %592 = vmatprep.subr.mxu0 0.0
    %593 = vmatpush1.xpose.msra.mxu0 0.0
    %594 = vmatprep.subr.mxu0 0.0
    %595 = vmatpush1.xpose.msra.mxu0 0.0
    %596 = vmatprep.subr.mxu0 0.0
    %597 = vmatpush1.xpose.msra.mxu0 0.0
    %598 = vmatprep.subr.mxu0 0.0
    %599 = vmatpush1.xpose.msra.mxu0 0.0
    %600 = vmatprep.mubr.f32.mxu0 0.0
    %601 = vmatmul.mubr.f32.gmra.mrb[0].mxu0 %v532
    %v602 = vpop.f32.mrb[0].mxu0
    %v603 = vadd.f32 0.0, %v602
    %v604 = vpop.f32.mrb[0].mxu0
    %605 = vdwg.mxu0
    %v606 = vsel %vm365, %v603, -1e+30
    %v607 = vsel %vm366, %v606, -inf
    %608 = vmax.xlane.f32.xlu0 %v607
    %v609 = vpop.xlane.xlu0 %608
    %v610 = vsub.f32 %v606, %v609
    %v611 = vmul.f32 %v610, 1.442695
    %v612 = vpow.pop %v611
    %v613 = vsel %vm366, %v612, 0.0
    %614 = vadd.xlane.f32.xlu0 %v613
    %v615 = vpop.xlane.xlu0 %614
    %617 = vrot.lane.b32.xlu0 %v337, 120
    %v618 = vpop.permute.xlu0 %617
    %v621 = vsel %vm366, %v612, 0
    %623 = vmatprep.subr.mxu0 0.0
    %624 = vmatpush1.msra.mxu0 %v618
    %625 = vmatprep.subr.mxu0 0.0
    %626 = vmatpush1.msra.mxu0 0.0
    %627 = vmatprep.subr.mxu0 0.0
    %628 = vmatpush1.msra.mxu0 0.0
    %629 = vmatprep.subr.mxu0 0.0
    %630 = vmatpush1.msra.mxu0 0.0
    %631 = vmatprep.subr.mxu0 0.0
    %632 = vmatpush1.msra.mxu0 0.0
    %633 = vmatprep.subr.mxu0 0.0
    %634 = vmatpush1.msra.mxu0 0.0
    %635 = vmatprep.subr.mxu0 0.0
    %636 = vmatpush1.msra.mxu0 0.0
    %637 = vmatprep.subr.mxu0 0.0
    %638 = vmatpush1.msra.mxu0 0.0
    %639 = vmatprep.subr.mxu0 0.0
    %640 = vmatpush1.msra.mxu0 0.0
    %641 = vmatprep.subr.mxu0 0.0
    %642 = vmatpush1.msra.mxu0 0.0
    %643 = vmatprep.subr.mxu0 0.0
    %644 = vmatpush1.msra.mxu0 0.0
    %645 = vmatprep.subr.mxu0 0.0
    %646 = vmatpush1.msra.mxu0 0.0
    %647 = vmatprep.subr.mxu0 0.0
    %648 = vmatpush1.msra.mxu0 0.0
    %649 = vmatprep.subr.mxu0 0.0
    %650 = vmatpush1.msra.mxu0 0.0
    %651 = vmatprep.subr.mxu0 0.0
    %652 = vmatpush1.msra.mxu0 0.0
    %653 = vmatprep.subr.mxu0 0.0
    %654 = vmatpush1.msra.mxu0 0.0
    %655 = vmatprep.subr.mxu0 0.0
    %656 = vmatpush1.msra.mxu0 0.0
    %657 = vmatprep.subr.mxu0 0.0
    %658 = vmatpush1.msra.mxu0 0.0
    %659 = vmatprep.subr.mxu0 0.0
    %660 = vmatpush1.msra.mxu0 0.0
    %661 = vmatprep.subr.mxu0 0.0
    %662 = vmatpush1.msra.mxu0 0.0
    %663 = vmatprep.subr.mxu0 0.0
    %664 = vmatpush1.msra.mxu0 0.0
    %665 = vmatprep.subr.mxu0 0.0
    %666 = vmatpush1.msra.mxu0 0.0
    %667 = vmatprep.subr.mxu0 0.0
    %668 = vmatpush1.msra.mxu0 0.0
    %669 = vmatprep.subr.mxu0 0.0
    %670 = vmatpush1.msra.mxu0 0.0
    %671 = vmatprep.subr.mxu0 0.0
    %672 = vmatpush1.msra.mxu0 0.0
    %673 = vmatprep.subr.mxu0 0.0
    %674 = vmatpush1.msra.mxu0 0.0
    %675 = vmatprep.subr.mxu0 0.0
    %676 = vmatpush1.msra.mxu0 0.0
    %677 = vmatprep.subr.mxu0 0.0
    %678 = vmatpush1.msra.mxu0 0.0
    %679 = vmatprep.subr.mxu0 0.0
    %680 = vmatpush1.msra.mxu0 0.0
    %681 = vmatprep.subr.mxu0 0.0
    %682 = vmatpush1.msra.mxu0 0.0
    %683 = vmatprep.subr.mxu0 0.0
    %684 = vmatpush1.msra.mxu0 0.0
    %685 = vmatprep.subr.mxu0 0.0
    %686 = vmatpush1.msra.mxu0 0.0
    %687 = vmatprep.mubr.f32.mxu0 0.0
    %688 = vmatmul.mubr.f32.gmra.mrb[0].mxu0 %v621
    %v689 = vpop.f32.mrb[0].mxu0
    %v690 = vadd.f32 0.0, %v689
    %v691 = vpop.f32.mrb[0].mxu0
    %692 = vdwg.mxu0
    %v693 = vrcp.pop %v615
    %v694 = vmul.f32 %v690, %v693
    %v696 = vsel %vm366, %v694, 0
    %698 = vmatprep.subr.mxu0 0.0
    %699 = vmatpush1.msra.mxu0 %v348
    %700 = vmatprep.subr.mxu0 0.0
    %701 = vmatpush1.msra.mxu0 0.0
    %702 = vmatprep.subr.mxu0 0.0
    %703 = vmatpush1.msra.mxu0 0.0
    %704 = vmatprep.subr.mxu0 0.0
    %705 = vmatpush1.msra.mxu0 0.0
    %706 = vmatprep.subr.mxu0 0.0
    %707 = vmatpush1.msra.mxu0 0.0
    %708 = vmatprep.subr.mxu0 0.0
    %709 = vmatpush1.msra.mxu0 0.0
    %710 = vmatprep.subr.mxu0 0.0
    %711 = vmatpush1.msra.mxu0 0.0
    %712 = vmatprep.subr.mxu0 0.0
    %713 = vmatpush1.msra.mxu0 0.0
    %714 = vmatprep.subr.mxu0 0.0
    %715 = vmatpush1.msra.mxu0 0.0
    %716 = vmatprep.subr.mxu0 0.0
    %717 = vmatpush1.msra.mxu0 0.0
    %718 = vmatprep.subr.mxu0 0.0
    %719 = vmatpush1.msra.mxu0 0.0
    %720 = vmatprep.subr.mxu0 0.0
    %721 = vmatpush1.msra.mxu0 0.0
    %722 = vmatprep.subr.mxu0 0.0
    %723 = vmatpush1.msra.mxu0 0.0
    %724 = vmatprep.subr.mxu0 0.0
    %725 = vmatpush1.msra.mxu0 0.0
    %726 = vmatprep.subr.mxu0 0.0
    %727 = vmatpush1.msra.mxu0 0.0
    %728 = vmatprep.subr.mxu0 0.0
    %729 = vmatpush1.msra.mxu0 0.0
    %730 = vmatprep.subr.mxu0 0.0
    %731 = vmatpush1.msra.mxu0 0.0
    %732 = vmatprep.subr.mxu0 0.0
    %733 = vmatpush1.msra.mxu0 0.0
    %734 = vmatprep.subr.mxu0 0.0
    %735 = vmatpush1.msra.mxu0 0.0
    %736 = vmatprep.subr.mxu0 0.0
    %737 = vmatpush1.msra.mxu0 0.0
    %738 = vmatprep.subr.mxu0 0.0
    %739 = vmatpush1.msra.mxu0 0.0
    %740 = vmatprep.subr.mxu0 0.0
    %741 = vmatpush1.msra.mxu0 0.0
    %742 = vmatprep.subr.mxu0 0.0
    %743 = vmatpush1.msra.mxu0 0.0
    %744 = vmatprep.subr.mxu0 0.0
    %745 = vmatpush1.msra.mxu0 0.0
    %746 = vmatprep.subr.mxu0 0.0
    %747 = vmatpush1.msra.mxu0 0.0
    %748 = vmatprep.subr.mxu0 0.0
    %749 = vmatpush1.msra.mxu0 0.0
    %750 = vmatprep.subr.mxu0 0.0
    %751 = vmatpush1.msra.mxu0 0.0
    %752 = vmatprep.subr.mxu0 0.0
    %753 = vmatpush1.msra.mxu0 0.0
    %754 = vmatprep.subr.mxu0 0.0
    %755 = vmatpush1.msra.mxu0 0.0
    %756 = vmatprep.subr.mxu0 0.0
    %757 = vmatpush1.msra.mxu0 0.0
    %758 = vmatprep.subr.mxu0 0.0
    %759 = vmatpush1.msra.mxu0 0.0
    %760 = vmatprep.subr.mxu0 0.0
    %761 = vmatpush1.msra.mxu0 0.0
    %762 = vmatprep.mubr.f32.mxu0 0.0
    %763 = vmatmul.mubr.f32.gmra.mrb[0].mxu0 %v696
    %v764 = vpop.f32.mrb[0].mxu0
    %v765 = vadd.f32 0.0, %v764
    %v766 = vpop.f32.mrb[0].mxu0
    %767 = vdwg.mxu0
    %v769 = vsel %vm366, %v527, 0
    %771 = vmatprep.subr.mxu0 0.0
    %772 = vmatpush1.msra.mxu0 %v347
    %773 = vmatprep.subr.mxu0 0.0
    %774 = vmatpush1.msra.mxu0 0.0
    %775 = vmatprep.subr.mxu0 0.0
    %776 = vmatpush1.msra.mxu0 0.0
    %777 = vmatprep.subr.mxu0 0.0
    %778 = vmatpush1.msra.mxu0 0.0
    %779 = vmatprep.subr.mxu0 0.0
    %780 = vmatpush1.msra.mxu0 0.0
    %781 = vmatprep.subr.mxu0 0.0
    %782 = vmatpush1.msra.mxu0 0.0
    %783 = vmatprep.subr.mxu0 0.0
    %784 = vmatpush1.msra.mxu0 0.0
    %785 = vmatprep.subr.mxu0 0.0
    %786 = vmatpush1.msra.mxu0 0.0
    %787 = vmatprep.subr.mxu0 0.0
    %788 = vmatpush1.msra.mxu0 0.0
    %789 = vmatprep.subr.mxu0 0.0
    %790 = vmatpush1.msra.mxu0 0.0
    %791 = vmatprep.subr.mxu0 0.0
    %792 = vmatpush1.msra.mxu0 0.0
    %793 = vmatprep.subr.mxu0 0.0
    %794 = vmatpush1.msra.mxu0 0.0
    %795 = vmatprep.subr.mxu0 0.0
    %796 = vmatpush1.msra.mxu0 0.0
    %797 = vmatprep.subr.mxu0 0.0
    %798 = vmatpush1.msra.mxu0 0.0
    %799 = vmatprep.subr.mxu0 0.0
    %800 = vmatpush1.msra.mxu0 0.0
    %801 = vmatprep.subr.mxu0 0.0
    %802 = vmatpush1.msra.mxu0 0.0
    %803 = vmatprep.subr.mxu0 0.0
    %804 = vmatpush1.msra.mxu0 0.0
    %805 = vmatprep.subr.mxu0 0.0
    %806 = vmatpush1.msra.mxu0 0.0
    %807 = vmatprep.subr.mxu0 0.0
    %808 = vmatpush1.msra.mxu0 0.0
    %809 = vmatprep.subr.mxu0 0.0
    %810 = vmatpush1.msra.mxu0 0.0
    %811 = vmatprep.subr.mxu0 0.0
    %812 = vmatpush1.msra.mxu0 0.0
    %813 = vmatprep.subr.mxu0 0.0
    %814 = vmatpush1.msra.mxu0 0.0
    %815 = vmatprep.subr.mxu0 0.0
    %816 = vmatpush1.msra.mxu0 0.0
    %817 = vmatprep.subr.mxu0 0.0
    %818 = vmatpush1.msra.mxu0 0.0
    %819 = vmatprep.subr.mxu0 0.0
    %820 = vmatpush1.msra.mxu0 0.0
    %821 = vmatprep.subr.mxu0 0.0
    %822 = vmatpush1.msra.mxu0 0.0
    %823 = vmatprep.subr.mxu0 0.0
    %824 = vmatpush1.msra.mxu0 0.0
    %825 = vmatprep.subr.mxu0 0.0
    %826 = vmatpush1.msra.mxu0 0.0
    %827 = vmatprep.subr.mxu0 0.0
    %828 = vmatpush1.msra.mxu0 0.0
    %829 = vmatprep.subr.mxu0 0.0
    %830 = vmatpush1.msra.mxu0 0.0
    %831 = vmatprep.subr.mxu0 0.0
    %832 = vmatpush1.msra.mxu0 0.0
    %833 = vmatprep.subr.mxu0 0.0
    %834 = vmatpush1.msra.mxu0 0.0
    %835 = vmatprep.mubr.f32.mxu0 0.0
    %836 = vmatmul.mubr.f32.gmra.mrb[0].mxu0 %v769
    %v837 = vpop.f32.mrb[0].mxu0
    %v838 = vadd.f32 %v765, %v837
    %v839 = vpop.f32.mrb[0].mxu0
    %840 = vdwg.mxu0
    %841 = vrot.lane.b32.xlu0 %v345, 112
    %v842 = vpop.permute.xlu0 %841
    %843 = vrot.lane.b32.xlu0 %v258, 112
    %v844 = vpop.permute.xlu0 %843
    %v845 = vsel %vm366, %v842, 0
    %v847 = vsel %vm366, %v844, 0
    %849 = vmatprep.subr.mxu0 0.0
    %850 = vmatpush1.xpose.msra.mxu0 %v847
    %851 = vmatprep.subr.mxu0 0.0
    %852 = vmatpush1.xpose.msra.mxu0 0.0
    %853 = vmatprep.subr.mxu0 0.0
    %854 = vmatpush1.xpose.msra.mxu0 0.0
    %855 = vmatprep.subr.mxu0 0.0
    %856 = vmatpush1.xpose.msra.mxu0 0.0
    %857 = vmatprep.subr.mxu0 0.0
    %858 = vmatpush1.xpose.msra.mxu0 0.0
    %859 = vmatprep.subr.mxu0 0.0
    %860 = vmatpush1.xpose.msra.mxu0 0.0
    %861 = vmatprep.subr.mxu0 0.0
    %862 = vmatpush1.xpose.msra.mxu0 0.0
    %863 = vmatprep.subr.mxu0 0.0
    %864 = vmatpush1.xpose.msra.mxu0 0.0
    %865 = vmatprep.subr.mxu0 0.0
    %866 = vmatpush1.xpose.msra.mxu0 0.0
    %867 = vmatprep.subr.mxu0 0.0
    %868 = vmatpush1.xpose.msra.mxu0 0.0
    %869 = vmatprep.subr.mxu0 0.0
    %870 = vmatpush1.xpose.msra.mxu0 0.0
    %871 = vmatprep.subr.mxu0 0.0
    %872 = vmatpush1.xpose.msra.mxu0 0.0
    %873 = vmatprep.subr.mxu0 0.0
    %874 = vmatpush1.xpose.msra.mxu0 0.0
    %875 = vmatprep.subr.mxu0 0.0
    %876 = vmatpush1.xpose.msra.mxu0 0.0
    %877 = vmatprep.subr.mxu0 0.0
    %878 = vmatpush1.xpose.msra.mxu0 0.0
    %879 = vmatprep.subr.mxu0 0.0
    %880 = vmatpush1.xpose.msra.mxu0 0.0
    %881 = vmatprep.subr.mxu0 0.0
    %882 = vmatpush1.xpose.msra.mxu0 0.0
    %883 = vmatprep.subr.mxu0 0.0
    %884 = vmatpush1.xpose.msra.mxu0 0.0
    %885 = vmatprep.subr.mxu0 0.0
    %886 = vmatpush1.xpose.msra.mxu0 0.0
    %887 = vmatprep.subr.mxu0 0.0
    %888 = vmatpush1.xpose.msra.mxu0 0.0
    %889 = vmatprep.subr.mxu0 0.0
    %890 = vmatpush1.xpose.msra.mxu0 0.0
    %891 = vmatprep.subr.mxu0 0.0
    %892 = vmatpush1.xpose.msra.mxu0 0.0
    %893 = vmatprep.subr.mxu0 0.0
    %894 = vmatpush1.xpose.msra.mxu0 0.0
    %895 = vmatprep.subr.mxu0 0.0
    %896 = vmatpush1.xpose.msra.mxu0 0.0
    %897 = vmatprep.subr.mxu0 0.0
    %898 = vmatpush1.xpose.msra.mxu0 0.0
    %899 = vmatprep.subr.mxu0 0.0
    %900 = vmatpush1.xpose.msra.mxu0 0.0
    %901 = vmatprep.subr.mxu0 0.0
    %902 = vmatpush1.xpose.msra.mxu0 0.0
    %903 = vmatprep.subr.mxu0 0.0
    %904 = vmatpush1.xpose.msra.mxu0 0.0
    %905 = vmatprep.subr.mxu0 0.0
    %906 = vmatpush1.xpose.msra.mxu0 0.0
    %907 = vmatprep.subr.mxu0 0.0
    %908 = vmatpush1.xpose.msra.mxu0 0.0
    %909 = vmatprep.subr.mxu0 0.0
    %910 = vmatpush1.xpose.msra.mxu0 0.0
    %911 = vmatprep.subr.mxu0 0.0
    %912 = vmatpush1.xpose.msra.mxu0 0.0
    %913 = vmatprep.mubr.f32.mxu0 0.0
    %914 = vmatmul.mubr.f32.gmra.mrb[0].mxu0 %v845
    %v915 = vpop.f32.mrb[0].mxu0
    %v916 = vadd.f32 0.0, %v915
    %v917 = vpop.f32.mrb[0].mxu0
    %918 = vdwg.mxu0
    %v919 = vsel %vm365, %v916, -1e+30
    %v920 = vsel %vm366, %v919, -inf
    %921 = vmax.xlane.f32.xlu0 %v920
    %v922 = vpop.xlane.xlu0 %921
    %v923 = vsub.f32 %v919, %v922
    %v924 = vmul.f32 %v923, 1.442695
    %v925 = vpow.pop %v924
    %v926 = vsel %vm366, %v925, 0.0
    %927 = vadd.xlane.f32.xlu0 %v926
    %v928 = vpop.xlane.xlu0 %927
    %929 = vrot.lane.b32.xlu0 %v337, 112
    %v930 = vpop.permute.xlu0 %929
    %v933 = vsel %vm366, %v925, 0
    %935 = vmatprep.subr.mxu0 0.0
    %936 = vmatpush1.msra.mxu0 %v930
    %937 = vmatprep.subr.mxu0 0.0
    %938 = vmatpush1.msra.mxu0 0.0
    %939 = vmatprep.subr.mxu0 0.0
    %940 = vmatpush1.msra.mxu0 0.0
    %941 = vmatprep.subr.mxu0 0.0
    %942 = vmatpush1.msra.mxu0 0.0
    %943 = vmatprep.subr.mxu0 0.0
    %944 = vmatpush1.msra.mxu0 0.0
    %945 = vmatprep.subr.mxu0 0.0
    %946 = vmatpush1.msra.mxu0 0.0
    %947 = vmatprep.subr.mxu0 0.0
    %948 = vmatpush1.msra.mxu0 0.0
    %949 = vmatprep.subr.mxu0 0.0
    %950 = vmatpush1.msra.mxu0 0.0
    %951 = vmatprep.subr.mxu0 0.0
    %952 = vmatpush1.msra.mxu0 0.0
    %953 = vmatprep.subr.mxu0 0.0
    %954 = vmatpush1.msra.mxu0 0.0
    %955 = vmatprep.subr.mxu0 0.0
    %956 = vmatpush1.msra.mxu0 0.0
    %957 = vmatprep.subr.mxu0 0.0
    %958 = vmatpush1.msra.mxu0 0.0
    %959 = vmatprep.subr.mxu0 0.0
    %960 = vmatpush1.msra.mxu0 0.0
    %961 = vmatprep.subr.mxu0 0.0
    %962 = vmatpush1.msra.mxu0 0.0
    %963 = vmatprep.subr.mxu0 0.0
    %964 = vmatpush1.msra.mxu0 0.0
    %965 = vmatprep.subr.mxu0 0.0
    %966 = vmatpush1.msra.mxu0 0.0
    %967 = vmatprep.subr.mxu0 0.0
    %968 = vmatpush1.msra.mxu0 0.0
    %969 = vmatprep.subr.mxu0 0.0
    %970 = vmatpush1.msra.mxu0 0.0
    %971 = vmatprep.subr.mxu0 0.0
    %972 = vmatpush1.msra.mxu0 0.0
    %973 = vmatprep.subr.mxu0 0.0
    %974 = vmatpush1.msra.mxu0 0.0
    %975 = vmatprep.subr.mxu0 0.0
    %976 = vmatpush1.msra.mxu0 0.0
    %977 = vmatprep.subr.mxu0 0.0
    %978 = vmatpush1.msra.mxu0 0.0
    %979 = vmatprep.subr.mxu0 0.0
    %980 = vmatpush1.msra.mxu0 0.0
    %981 = vmatprep.subr.mxu0 0.0
    %982 = vmatpush1.msra.mxu0 0.0
    %983 = vmatprep.subr.mxu0 0.0
    %984 = vmatpush1.msra.mxu0 0.0
    %985 = vmatprep.subr.mxu0 0.0
    %986 = vmatpush1.msra.mxu0 0.0
    %987 = vmatprep.subr.mxu0 0.0
    %988 = vmatpush1.msra.mxu0 0.0
    %989 = vmatprep.subr.mxu0 0.0
    %990 = vmatpush1.msra.mxu0 0.0
    %991 = vmatprep.subr.mxu0 0.0
    %992 = vmatpush1.msra.mxu0 0.0
    %993 = vmatprep.subr.mxu0 0.0
    %994 = vmatpush1.msra.mxu0 0.0
    %995 = vmatprep.subr.mxu0 0.0
    %996 = vmatpush1.msra.mxu0 0.0
    %997 = vmatprep.subr.mxu0 0.0
    %998 = vmatpush1.msra.mxu0 0.0
    %999 = vmatprep.mubr.f32.mxu0 0.0
    %1000 = vmatmul.mubr.f32.gmra.mrb[0].mxu0 %v933
    %v1001 = vpop.f32.mrb[0].mxu0
    %v1002 = vadd.f32 0.0, %v1001
    %v1003 = vpop.f32.mrb[0].mxu0
    %1004 = vdwg.mxu0
    %v1005 = vrcp.pop %v928
    %v1006 = vmul.f32 %v1002, %v1005
    %v1008 = vsel %vm366, %v1006, 0
    %1010 = vmatprep.subr.mxu0 0.0
    %1011 = vmatpush1.msra.mxu0 %v349
    %1012 = vmatprep.subr.mxu0 0.0
    %1013 = vmatpush1.msra.mxu0 0.0
    %1014 = vmatprep.subr.mxu0 0.0
    %1015 = vmatpush1.msra.mxu0 0.0
    %1016 = vmatprep.subr.mxu0 0.0
    %1017 = vmatpush1.msra.mxu0 0.0
    %1018 = vmatprep.subr.mxu0 0.0
    %1019 = vmatpush1.msra.mxu0 0.0
    %1020 = vmatprep.subr.mxu0 0.0
    %1021 = vmatpush1.msra.mxu0 0.0
    %1022 = vmatprep.subr.mxu0 0.0
    %1023 = vmatpush1.msra.mxu0 0.0
    %1024 = vmatprep.subr.mxu0 0.0
    %1025 = vmatpush1.msra.mxu0 0.0
    %1026 = vmatprep.subr.mxu0 0.0
    %1027 = vmatpush1.msra.mxu0 0.0
    %1028 = vmatprep.subr.mxu0 0.0
    %1029 = vmatpush1.msra.mxu0 0.0
    %1030 = vmatprep.subr.mxu0 0.0
    %1031 = vmatpush1.msra.mxu0 0.0
    %1032 = vmatprep.subr.mxu0 0.0
    %1033 = vmatpush1.msra.mxu0 0.0
    %1034 = vmatprep.subr.mxu0 0.0
    %1035 = vmatpush1.msra.mxu0 0.0
    %1036 = vmatprep.subr.mxu0 0.0
    %1037 = vmatpush1.msra.mxu0 0.0
    %1038 = vmatprep.subr.mxu0 0.0
    %1039 = vmatpush1.msra.mxu0 0.0
    %1040 = vmatprep.subr.mxu0 0.0
    %1041 = vmatpush1.msra.mxu0 0.0
    %1042 = vmatprep.subr.mxu0 0.0
    %1043 = vmatpush1.msra.mxu0 0.0
    %1044 = vmatprep.subr.mxu0 0.0
    %1045 = vmatpush1.msra.mxu0 0.0
    %1046 = vmatprep.subr.mxu0 0.0
    %1047 = vmatpush1.msra.mxu0 0.0
    %1048 = vmatprep.subr.mxu0 0.0
    %1049 = vmatpush1.msra.mxu0 0.0
    %1050 = vmatprep.subr.mxu0 0.0
    %1051 = vmatpush1.msra.mxu0 0.0
    %1052 = vmatprep.subr.mxu0 0.0
    %1053 = vmatpush1.msra.mxu0 0.0
    %1054 = vmatprep.subr.mxu0 0.0
    %1055 = vmatpush1.msra.mxu0 0.0
    %1056 = vmatprep.subr.mxu0 0.0
    %1057 = vmatpush1.msra.mxu0 0.0
    %1058 = vmatprep.subr.mxu0 0.0
    %1059 = vmatpush1.msra.mxu0 0.0
    %1060 = vmatprep.subr.mxu0 0.0
    %1061 = vmatpush1.msra.mxu0 0.0
    %1062 = vmatprep.subr.mxu0 0.0
    %1063 = vmatpush1.msra.mxu0 0.0
    %1064 = vmatprep.subr.mxu0 0.0
    %1065 = vmatpush1.msra.mxu0 0.0
    %1066 = vmatprep.subr.mxu0 0.0
    %1067 = vmatpush1.msra.mxu0 0.0
    %1068 = vmatprep.subr.mxu0 0.0
    %1069 = vmatpush1.msra.mxu0 0.0
    %1070 = vmatprep.subr.mxu0 0.0
    %1071 = vmatpush1.msra.mxu0 0.0
    %1072 = vmatprep.subr.mxu0 0.0
    %1073 = vmatpush1.msra.mxu0 0.0
    %1074 = vmatprep.mubr.f32.mxu0 0.0
    %1075 = vmatmul.mubr.f32.gmra.mrb[0].mxu0 %v1008
    %v1076 = vpop.f32.mrb[0].mxu0
    %v1077 = vadd.f32 0.0, %v1076
    %v1078 = vpop.f32.mrb[0].mxu0
    %1079 = vdwg.mxu0
    %v1080 = vadd.f32 %v838, %v1077
    %1081 = vrot.lane.b32.xlu0 %v345, 104
    %v1082 = vpop.permute.xlu0 %1081
    %1083 = vrot.lane.b32.xlu0 %v258, 104
    %v1084 = vpop.permute.xlu0 %1083
    %v1085 = vsel %vm366, %v1082, 0
    %v1087 = vsel %vm366, %v1084, 0
    %1089 = vmatprep.subr.mxu0 0.0
    %1090 = vmatpush1.xpose.msra.mxu0 %v1087
    %1091 = vmatprep.subr.mxu0 0.0
    %1092 = vmatpush1.xpose.msra.mxu0 0.0
    %1093 = vmatprep.subr.mxu0 0.0
    %1094 = vmatpush1.xpose.msra.mxu0 0.0
    %1095 = vmatprep.subr.mxu0 0.0
    %1096 = vmatpush1.xpose.msra.mxu0 0.0
    %1097 = vmatprep.subr.mxu0 0.0
    %1098 = vmatpush1.xpose.msra.mxu0 0.0
    %1099 = vmatprep.subr.mxu0 0.0
    %1100 = vmatpush1.xpose.msra.mxu0 0.0
    %1101 = vmatprep.subr.mxu0 0.0
    %1102 = vmatpush1.xpose.msra.mxu0 0.0
    %1103 = vmatprep.subr.mxu0 0.0
    %1104 = vmatpush1.xpose.msra.mxu0 0.0
    %1105 = vmatprep.subr.mxu0 0.0
    %1106 = vmatpush1.xpose.msra.mxu0 0.0
    %1107 = vmatprep.subr.mxu0 0.0
    %1108 = vmatpush1.xpose.msra.mxu0 0.0
    %1109 = vmatprep.subr.mxu0 0.0
    %1110 = vmatpush1.xpose.msra.mxu0 0.0
    %1111 = vmatprep.subr.mxu0 0.0
    %1112 = vmatpush1.xpose.msra.mxu0 0.0
    %1113 = vmatprep.subr.mxu0 0.0
    %1114 = vmatpush1.xpose.msra.mxu0 0.0
    %1115 = vmatprep.subr.mxu0 0.0
    %1116 = vmatpush1.xpose.msra.mxu0 0.0
    %1117 = vmatprep.subr.mxu0 0.0
    %1118 = vmatpush1.xpose.msra.mxu0 0.0
    %1119 = vmatprep.subr.mxu0 0.0
    %1120 = vmatpush1.xpose.msra.mxu0 0.0
    %1121 = vmatprep.subr.mxu0 0.0
    %1122 = vmatpush1.xpose.msra.mxu0 0.0
    %1123 = vmatprep.subr.mxu0 0.0
    %1124 = vmatpush1.xpose.msra.mxu0 0.0
    %1125 = vmatprep.subr.mxu0 0.0
    %1126 = vmatpush1.xpose.msra.mxu0 0.0
    %1127 = vmatprep.subr.mxu0 0.0
    %1128 = vmatpush1.xpose.msra.mxu0 0.0
    %1129 = vmatprep.subr.mxu0 0.0
    %1130 = vmatpush1.xpose.msra.mxu0 0.0
    %1131 = vmatprep.subr.mxu0 0.0
    %1132 = vmatpush1.xpose.msra.mxu0 0.0
    %1133 = vmatprep.subr.mxu0 0.0
    %1134 = vmatpush1.xpose.msra.mxu0 0.0
    %1135 = vmatprep.subr.mxu0 0.0
    %1136 = vmatpush1.xpose.msra.mxu0 0.0
    %1137 = vmatprep.subr.mxu0 0.0
    %1138 = vmatpush1.xpose.msra.mxu0 0.0
    %1139 = vmatprep.subr.mxu0 0.0
    %1140 = vmatpush1.xpose.msra.mxu0 0.0
    %1141 = vmatprep.subr.mxu0 0.0
    %1142 = vmatpush1.xpose.msra.mxu0 0.0
    %1143 = vmatprep.subr.mxu0 0.0
    %1144 = vmatpush1.xpose.msra.mxu0 0.0
    %1145 = vmatprep.subr.mxu0 0.0
    %1146 = vmatpush1.xpose.msra.mxu0 0.0
    %1147 = vmatprep.subr.mxu0 0.0
    %1148 = vmatpush1.xpose.msra.mxu0 0.0
    %1149 = vmatprep.subr.mxu0 0.0
    %1150 = vmatpush1.xpose.msra.mxu0 0.0
    %1151 = vmatprep.subr.mxu0 0.0
    %1152 = vmatpush1.xpose.msra.mxu0 0.0
    %1153 = vmatprep.mubr.f32.mxu0 0.0
    %1154 = vmatmul.mubr.f32.gmra.mrb[0].mxu0 %v1085
    %v1155 = vpop.f32.mrb[0].mxu0
    %v1156 = vadd.f32 0.0, %v1155
    %v1157 = vpop.f32.mrb[0].mxu0
    %1158 = vdwg.mxu0
    %v1159 = vsel %vm365, %v1156, -1e+30
    %v1160 = vsel %vm366, %v1159, -inf
    %1161 = vmax.xlane.f32.xlu0 %v1160
    %v1162 = vpop.xlane.xlu0 %1161
    %v1163 = vsub.f32 %v1159, %v1162
    %v1164 = vmul.f32 %v1163, 1.442695
    %v1165 = vpow.pop %v1164
    %v1166 = vsel %vm366, %v1165, 0.0
    %1167 = vadd.xlane.f32.xlu0 %v1166
    %v1168 = vpop.xlane.xlu0 %1167
    %1169 = vrot.lane.b32.xlu0 %v337, 104
    %v1170 = vpop.permute.xlu0 %1169
    %v1173 = vsel %vm366, %v1165, 0
    %1175 = vmatprep.subr.mxu0 0.0
    %1176 = vmatpush1.msra.mxu0 %v1170
    %1177 = vmatprep.subr.mxu0 0.0
    %1178 = vmatpush1.msra.mxu0 0.0
    %1179 = vmatprep.subr.mxu0 0.0
    %1180 = vmatpush1.msra.mxu0 0.0
    %1181 = vmatprep.subr.mxu0 0.0
    %1182 = vmatpush1.msra.mxu0 0.0
    %1183 = vmatprep.subr.mxu0 0.0
    %1184 = vmatpush1.msra.mxu0 0.0
    %1185 = vmatprep.subr.mxu0 0.0
    %1186 = vmatpush1.msra.mxu0 0.0
    %1187 = vmatprep.subr.mxu0 0.0
    %1188 = vmatpush1.msra.mxu0 0.0
    %1189 = vmatprep.subr.mxu0 0.0
    %1190 = vmatpush1.msra.mxu0 0.0
    %1191 = vmatprep.subr.mxu0 0.0
    %1192 = vmatpush1.msra.mxu0 0.0
    %1193 = vmatprep.subr.mxu0 0.0
    %1194 = vmatpush1.msra.mxu0 0.0
    %1195 = vmatprep.subr.mxu0 0.0
    %1196 = vmatpush1.msra.mxu0 0.0
    %1197 = vmatprep.subr.mxu0 0.0
    %1198 = vmatpush1.msra.mxu0 0.0
    %1199 = vmatprep.subr.mxu0 0.0
    %1200 = vmatpush1.msra.mxu0 0.0
    %1201 = vmatprep.subr.mxu0 0.0
    %1202 = vmatpush1.msra.mxu0 0.0
    %1203 = vmatprep.subr.mxu0 0.0
    %1204 = vmatpush1.msra.mxu0 0.0
    %1205 = vmatprep.subr.mxu0 0.0
    %1206 = vmatpush1.msra.mxu0 0.0
    %1207 = vmatprep.subr.mxu0 0.0
    %1208 = vmatpush1.msra.mxu0 0.0
    %1209 = vmatprep.subr.mxu0 0.0
    %1210 = vmatpush1.msra.mxu0 0.0
    %1211 = vmatprep.subr.mxu0 0.0
    %1212 = vmatpush1.msra.mxu0 0.0
    %1213 = vmatprep.subr.mxu0 0.0
    %1214 = vmatpush1.msra.mxu0 0.0
    %1215 = vmatprep.subr.mxu0 0.0
    %1216 = vmatpush1.msra.mxu0 0.0
    %1217 = vmatprep.subr.mxu0 0.0
    %1218 = vmatpush1.msra.mxu0 0.0
    %1219 = vmatprep.subr.mxu0 0.0
    %1220 = vmatpush1.msra.mxu0 0.0
    %1221 = vmatprep.subr.mxu0 0.0
    %1222 = vmatpush1.msra.mxu0 0.0
    %1223 = vmatprep.subr.mxu0 0.0
    %1224 = vmatpush1.msra.mxu0 0.0
    %1225 = vmatprep.subr.mxu0 0.0
    %1226 = vmatpush1.msra.mxu0 0.0
    %1227 = vmatprep.subr.mxu0 0.0
    %1228 = vmatpush1.msra.mxu0 0.0
    %1229 = vmatprep.subr.mxu0 0.0
    %1230 = vmatpush1.msra.mxu0 0.0
    %1231 = vmatprep.subr.mxu0 0.0
    %1232 = vmatpush1.msra.mxu0 0.0
    %1233 = vmatprep.subr.mxu0 0.0
    %1234 = vmatpush1.msra.mxu0 0.0
    %1235 = vmatprep.subr.mxu0 0.0
    %1236 = vmatpush1.msra.mxu0 0.0
    %1237 = vmatprep.subr.mxu0 0.0
    %1238 = vmatpush1.msra.mxu0 0.0
    %1239 = vmatprep.mubr.f32.mxu0 0.0
    %1240 = vmatmul.mubr.f32.gmra.mrb[0].mxu0 %v1173
    %v1241 = vpop.f32.mrb[0].mxu0
    %v1242 = vadd.f32 0.0, %v1241
    %v1243 = vpop.f32.mrb[0].mxu0
    %1244 = vdwg.mxu0
    %v1245 = vrcp.pop %v1168
    %v1246 = vmul.f32 %v1242, %v1245
    %v1248 = vsel %vm366, %v1246, 0
    %1250 = vmatprep.subr.mxu0 0.0
    %1251 = vmatpush1.msra.mxu0 %v350
    %1252 = vmatprep.subr.mxu0 0.0
    %1253 = vmatpush1.msra.mxu0 0.0
    %1254 = vmatprep.subr.mxu0 0.0
    %1255 = vmatpush1.msra.mxu0 0.0
    %1256 = vmatprep.subr.mxu0 0.0
    %1257 = vmatpush1.msra.mxu0 0.0
    %1258 = vmatprep.subr.mxu0 0.0
    %1259 = vmatpush1.msra.mxu0 0.0
    %1260 = vmatprep.subr.mxu0 0.0
    %1261 = vmatpush1.msra.mxu0 0.0
    %1262 = vmatprep.subr.mxu0 0.0
    %1263 = vmatpush1.msra.mxu0 0.0
    %1264 = vmatprep.subr.mxu0 0.0
    %1265 = vmatpush1.msra.mxu0 0.0
    %1266 = vmatprep.subr.mxu0 0.0
    %1267 = vmatpush1.msra.mxu0 0.0
    %1268 = vmatprep.subr.mxu0 0.0
    %1269 = vmatpush1.msra.mxu0 0.0
    %1270 = vmatprep.subr.mxu0 0.0
    %1271 = vmatpush1.msra.mxu0 0.0
    %1272 = vmatprep.subr.mxu0 0.0
    %1273 = vmatpush1.msra.mxu0 0.0
    %1274 = vmatprep.subr.mxu0 0.0
    %1275 = vmatpush1.msra.mxu0 0.0
    %1276 = vmatprep.subr.mxu0 0.0
    %1277 = vmatpush1.msra.mxu0 0.0
    %1278 = vmatprep.subr.mxu0 0.0
    %1279 = vmatpush1.msra.mxu0 0.0
    %1280 = vmatprep.subr.mxu0 0.0
    %1281 = vmatpush1.msra.mxu0 0.0
    %1282 = vmatprep.subr.mxu0 0.0
    %1283 = vmatpush1.msra.mxu0 0.0
    %1284 = vmatprep.subr.mxu0 0.0
    %1285 = vmatpush1.msra.mxu0 0.0
    %1286 = vmatprep.subr.mxu0 0.0
    %1287 = vmatpush1.msra.mxu0 0.0
    %1288 = vmatprep.subr.mxu0 0.0
    %1289 = vmatpush1.msra.mxu0 0.0
    %1290 = vmatprep.subr.mxu0 0.0
    %1291 = vmatpush1.msra.mxu0 0.0
    %1292 = vmatprep.subr.mxu0 0.0
    %1293 = vmatpush1.msra.mxu0 0.0
    %1294 = vmatprep.subr.mxu0 0.0
    %1295 = vmatpush1.msra.mxu0 0.0
    %1296 = vmatprep.subr.mxu0 0.0
    %1297 = vmatpush1.msra.mxu0 0.0
    %1298 = vmatprep.subr.mxu0 0.0
    %1299 = vmatpush1.msra.mxu0 0.0
    %1300 = vmatprep.subr.mxu0 0.0
    %1301 = vmatpush1.msra.mxu0 0.0
    %1302 = vmatprep.subr.mxu0 0.0
    %1303 = vmatpush1.msra.mxu0 0.0
    %1304 = vmatprep.subr.mxu0 0.0
    %1305 = vmatpush1.msra.mxu0 0.0
    %1306 = vmatprep.subr.mxu0 0.0
    %1307 = vmatpush1.msra.mxu0 0.0
    %1308 = vmatprep.subr.mxu0 0.0
    %1309 = vmatpush1.msra.mxu0 0.0
    %1310 = vmatprep.subr.mxu0 0.0
    %1311 = vmatpush1.msra.mxu0 0.0
    %1312 = vmatprep.subr.mxu0 0.0
    %1313 = vmatpush1.msra.mxu0 0.0
    %1314 = vmatprep.mubr.f32.mxu0 0.0
    %1315 = vmatmul.mubr.f32.gmra.mrb[0].mxu0 %v1248
    %v1316 = vpop.f32.mrb[0].mxu0
    %v1317 = vadd.f32 0.0, %v1316
    %v1318 = vpop.f32.mrb[0].mxu0
    %1319 = vdwg.mxu0
    %v1320 = vadd.f32 %v1080, %v1317
    %v1322 = vlaneseq
    %v1323 = vshrl.u32 %v1322, 7
    %v1324 = vsub.s32 0, %v1323
    %v1325 = vrot.slane %v351, %v1324
    %v1327 = vadd.f32 %v1320, %v1325
    %s1328 = sadd.s32 %s358, 1
    %s1329 = sld [smem:[#allocation3 + %s1328]]
    %v1330 = vstv %s1329
    %vm1331 = vcmp.lt.s32.totalorder %v353, %v1330
    %vm1332 = vcmp.lt.s32.totalorder %v355, %v1330
    %vm1333 = vmand %vm1331, %vm1332
    %vm1334 = vmor %vm1333, %vm357
    %vm1335 = vmand %vm356, %vm1334
    %v1337 = vsel %vm366, %v346, 0
    %v1340 = vsel %vm366, %v263, 0
    %1342 = vmatprep.subr.mxu0 0.0
    %1343 = vmatpush1.xpose.msra.mxu0 %v1340
    %1344 = vmatprep.subr.mxu0 0.0
    %1345 = vmatpush1.xpose.msra.mxu0 0.0
    %1346 = vmatprep.subr.mxu0 0.0
    %1347 = vmatpush1.xpose.msra.mxu0 0.0
    %1348 = vmatprep.subr.mxu0 0.0
    %1349 = vmatpush1.xpose.msra.mxu0 0.0
    %1350 = vmatprep.subr.mxu0 0.0
    %1351 = vmatpush1.xpose.msra.mxu0 0.0
    %1352 = vmatprep.subr.mxu0 0.0
    %1353 = vmatpush1.xpose.msra.mxu0 0.0
    %1354 = vmatprep.subr.mxu0 0.0
    %1355 = vmatpush1.xpose.msra.mxu0 0.0
    %1356 = vmatprep.subr.mxu0 0.0
    %1357 = vmatpush1.xpose.msra.mxu0 0.0
    %1358 = vmatprep.subr.mxu0 0.0
    %1359 = vmatpush1.xpose.msra.mxu0 0.0
    %1360 = vmatprep.subr.mxu0 0.0
    %1361 = vmatpush1.xpose.msra.mxu0 0.0
    %1362 = vmatprep.subr.mxu0 0.0
    %1363 = vmatpush1.xpose.msra.mxu0 0.0
    %1364 = vmatprep.subr.mxu0 0.0
    %1365 = vmatpush1.xpose.msra.mxu0 0.0
    %1366 = vmatprep.subr.mxu0 0.0
    %1367 = vmatpush1.xpose.msra.mxu0 0.0
    %1368 = vmatprep.subr.mxu0 0.0
    %1369 = vmatpush1.xpose.msra.mxu0 0.0
    %1370 = vmatprep.subr.mxu0 0.0
    %1371 = vmatpush1.xpose.msra.mxu0 0.0
    %1372 = vmatprep.subr.mxu0 0.0
    %1373 = vmatpush1.xpose.msra.mxu0 0.0
    %1374 = vmatprep.subr.mxu0 0.0
    %1375 = vmatpush1.xpose.msra.mxu0 0.0
    %1376 = vmatprep.subr.mxu0 0.0
    %1377 = vmatpush1.xpose.msra.mxu0 0.0
    %1378 = vmatprep.subr.mxu0 0.0
    %1379 = vmatpush1.xpose.msra.mxu0 0.0
    %1380 = vmatprep.subr.mxu0 0.0
    %1381 = vmatpush1.xpose.msra.mxu0 0.0
    %1382 = vmatprep.subr.mxu0 0.0
    %1383 = vmatpush1.xpose.msra.mxu0 0.0
    %1384 = vmatprep.subr.mxu0 0.0
    %1385 = vmatpush1.xpose.msra.mxu0 0.0
    %1386 = vmatprep.subr.mxu0 0.0
    %1387 = vmatpush1.xpose.msra.mxu0 0.0
    %1388 = vmatprep.subr.mxu0 0.0
    %1389 = vmatpush1.xpose.msra.mxu0 0.0
    %1390 = vmatprep.subr.mxu0 0.0
    %1391 = vmatpush1.xpose.msra.mxu0 0.0
    %1392 = vmatprep.subr.mxu0 0.0
    %1393 = vmatpush1.xpose.msra.mxu0 0.0
    %1394 = vmatprep.subr.mxu0 0.0
    %1395 = vmatpush1.xpose.msra.mxu0 0.0
    %1396 = vmatprep.subr.mxu0 0.0
    %1397 = vmatpush1.xpose.msra.mxu0 0.0
    %1398 = vmatprep.subr.mxu0 0.0
    %1399 = vmatpush1.xpose.msra.mxu0 0.0
    %1400 = vmatprep.subr.mxu0 0.0
    %1401 = vmatpush1.xpose.msra.mxu0 0.0
    %1402 = vmatprep.subr.mxu0 0.0
    %1403 = vmatpush1.xpose.msra.mxu0 0.0
    %1404 = vmatprep.subr.mxu0 0.0
    %1405 = vmatpush1.xpose.msra.mxu0 0.0
    %1406 = vmatprep.mubr.f32.mxu0 0.0
    %1407 = vmatmul.mubr.f32.gmra.mrb[0].mxu0 %v1337
    %v1408 = vpop.f32.mrb[0].mxu0
    %v1409 = vadd.f32 0.0, %v1408
    %v1410 = vpop.f32.mrb[0].mxu0
    %1411 = vdwg.mxu0
    %v1412 = vsel %vm1335, %v1409, -1e+30
    %v1413 = vsel %vm366, %v1412, -inf
    %1414 = vmax.xlane.f32.xlu0 %v1413
    %v1415 = vpop.xlane.xlu0 %1414
    %v1416 = vsub.f32 %v1412, %v1415
    %v1417 = vmul.f32 %v1416, 1.442695
    %v1418 = vpow.pop %v1417
    %v1419 = vsel %vm366, %v1418, 0.0
    %1420 = vadd.xlane.f32.xlu0 %v1419
    %v1421 = vpop.xlane.xlu0 %1420
    %v1423 = vsel %vm366, %v1418, 0
    %1425 = vmatprep.subr.mxu0 0.0
    %1426 = vmatpush1.msra.mxu0 %v342
    %1427 = vmatprep.subr.mxu0 0.0
    %1428 = vmatpush1.msra.mxu0 0.0
    %1429 = vmatprep.subr.mxu0 0.0
    %1430 = vmatpush1.msra.mxu0 0.0
    %1431 = vmatprep.subr.mxu0 0.0
    %1432 = vmatpush1.msra.mxu0 0.0
    %1433 = vmatprep.subr.mxu0 0.0
    %1434 = vmatpush1.msra.mxu0 0.0
    %1435 = vmatprep.subr.mxu0 0.0
    %1436 = vmatpush1.msra.mxu0 0.0
    %1437 = vmatprep.subr.mxu0 0.0
    %1438 = vmatpush1.msra.mxu0 0.0
    %1439 = vmatprep.subr.mxu0 0.0
    %1440 = vmatpush1.msra.mxu0 0.0
    %1441 = vmatprep.subr.mxu0 0.0
    %1442 = vmatpush1.msra.mxu0 0.0
    %1443 = vmatprep.subr.mxu0 0.0
    %1444 = vmatpush1.msra.mxu0 0.0
    %1445 = vmatprep.subr.mxu0 0.0
    %1446 = vmatpush1.msra.mxu0 0.0
    %1447 = vmatprep.subr.mxu0 0.0
    %1448 = vmatpush1.msra.mxu0 0.0
    %1449 = vmatprep.subr.mxu0 0.0
    %1450 = vmatpush1.msra.mxu0 0.0
    %1451 = vmatprep.subr.mxu0 0.0
    %1452 = vmatpush1.msra.mxu0 0.0
    %1453 = vmatprep.subr.mxu0 0.0
    %1454 = vmatpush1.msra.mxu0 0.0
    %1455 = vmatprep.subr.mxu0 0.0
    %1456 = vmatpush1.msra.mxu0 0.0
    %1457 = vmatprep.subr.mxu0 0.0
    %1458 = vmatpush1.msra.mxu0 0.0
    %1459 = vmatprep.subr.mxu0 0.0
    %1460 = vmatpush1.msra.mxu0 0.0
    %1461 = vmatprep.subr.mxu0 0.0
    %1462 = vmatpush1.msra.mxu0 0.0
    %1463 = vmatprep.subr.mxu0 0.0
    %1464 = vmatpush1.msra.mxu0 0.0
    %1465 = vmatprep.subr.mxu0 0.0
    %1466 = vmatpush1.msra.mxu0 0.0
    %1467 = vmatprep.subr.mxu0 0.0
    %1468 = vmatpush1.msra.mxu0 0.0
    %1469 = vmatprep.subr.mxu0 0.0
    %1470 = vmatpush1.msra.mxu0 0.0
    %1471 = vmatprep.subr.mxu0 0.0
    %1472 = vmatpush1.msra.mxu0 0.0
    %1473 = vmatprep.subr.mxu0 0.0
    %1474 = vmatpush1.msra.mxu0 0.0
    %1475 = vmatprep.subr.mxu0 0.0
    %1476 = vmatpush1.msra.mxu0 0.0
    %1477 = vmatprep.subr.mxu0 0.0
    %1478 = vmatpush1.msra.mxu0 0.0
    %1479 = vmatprep.subr.mxu0 0.0
    %1480 = vmatpush1.msra.mxu0 0.0
    %1481 = vmatprep.subr.mxu0 0.0
    %1482 = vmatpush1.msra.mxu0 0.0
    %1483 = vmatprep.subr.mxu0 0.0
    %1484 = vmatpush1.msra.mxu0 0.0
    %1485 = vmatprep.subr.mxu0 0.0
    %1486 = vmatpush1.msra.mxu0 0.0
    %1487 = vmatprep.subr.mxu0 0.0
    %1488 = vmatpush1.msra.mxu0 0.0
    %1489 = vmatprep.mubr.f32.mxu0 0.0
    %1490 = vmatmul.mubr.f32.gmra.mrb[0].mxu0 %v1423
    %v1491 = vpop.f32.mrb[0].mxu0
    %v1492 = vadd.f32 0.0, %v1491
    %v1493 = vpop.f32.mrb[0].mxu0
    %1494 = vdwg.mxu0
    %v1495 = vrcp.pop %v1421
    %v1496 = vmul.f32 %v1492, %v1495
    %1497 = vrot.lane.b32.xlu0 %v346, 120
    %v1498 = vpop.permute.xlu0 %1497
    %1499 = vrot.lane.b32.xlu0 %v263, 120
    %v1500 = vpop.permute.xlu0 %1499
    %v1501 = vsel %vm366, %v1498, 0
    %v1503 = vsel %vm366, %v1500, 0
    %1505 = vmatprep.subr.mxu0 0.0
    %1506 = vmatpush1.xpose.msra.mxu0 %v1503
    %1507 = vmatprep.subr.mxu0 0.0
    %1508 = vmatpush1.xpose.msra.mxu0 0.0
    %1509 = vmatprep.subr.mxu0 0.0
    %1510 = vmatpush1.xpose.msra.mxu0 0.0
    %1511 = vmatprep.subr.mxu0 0.0
    %1512 = vmatpush1.xpose.msra.mxu0 0.0
    %1513 = vmatprep.subr.mxu0 0.0
    %1514 = vmatpush1.xpose.msra.mxu0 0.0
    %1515 = vmatprep.subr.mxu0 0.0
    %1516 = vmatpush1.xpose.msra.mxu0 0.0
    %1517 = vmatprep.subr.mxu0 0.0
    %1518 = vmatpush1.xpose.msra.mxu0 0.0
    %1519 = vmatprep.subr.mxu0 0.0
    %1520 = vmatpush1.xpose.msra.mxu0 0.0
    %1521 = vmatprep.subr.mxu0 0.0
    %1522 = vmatpush1.xpose.msra.mxu0 0.0
    %1523 = vmatprep.subr.mxu0 0.0
    %1524 = vmatpush1.xpose.msra.mxu0 0.0
    %1525 = vmatprep.subr.mxu0 0.0
    %1526 = vmatpush1.xpose.msra.mxu0 0.0
    %1527 = vmatprep.subr.mxu0 0.0
    %1528 = vmatpush1.xpose.msra.mxu0 0.0
    %1529 = vmatprep.subr.mxu0 0.0
    %1530 = vmatpush1.xpose.msra.mxu0 0.0
    %1531 = vmatprep.subr.mxu0 0.0
    %1532 = vmatpush1.xpose.msra.mxu0 0.0
    %1533 = vmatprep.subr.mxu0 0.0
    %1534 = vmatpush1.xpose.msra.mxu0 0.0
    %1535 = vmatprep.subr.mxu0 0.0
    %1536 = vmatpush1.xpose.msra.mxu0 0.0
    %1537 = vmatprep.subr.mxu0 0.0
    %1538 = vmatpush1.xpose.msra.mxu0 0.0
    %1539 = vmatprep.subr.mxu0 0.0
    %1540 = vmatpush1.xpose.msra.mxu0 0.0
    %1541 = vmatprep.subr.mxu0 0.0
    %1542 = vmatpush1.xpose.msra.mxu0 0.0
    %1543 = vmatprep.subr.mxu0 0.0
    %1544 = vmatpush1.xpose.msra.mxu0 0.0
    %1545 = vmatprep.subr.mxu0 0.0
    %1546 = vmatpush1.xpose.msra.mxu0 0.0
    %1547 = vmatprep.subr.mxu0 0.0
    %1548 = vmatpush1.xpose.msra.mxu0 0.0
    %1549 = vmatprep.subr.mxu0 0.0
    %1550 = vmatpush1.xpose.msra.mxu0 0.0
    %1551 = vmatprep.subr.mxu0 0.0
    %1552 = vmatpush1.xpose.msra.mxu0 0.0
    %1553 = vmatprep.subr.mxu0 0.0
    %1554 = vmatpush1.xpose.msra.mxu0 0.0
    %1555 = vmatprep.subr.mxu0 0.0
    %1556 = vmatpush1.xpose.msra.mxu0 0.0
    %1557 = vmatprep.subr.mxu0 0.0
    %1558 = vmatpush1.xpose.msra.mxu0 0.0
    %1559 = vmatprep.subr.mxu0 0.0
    %1560 = vmatpush1.xpose.msra.mxu0 0.0
    %1561 = vmatprep.subr.mxu0 0.0
    %1562 = vmatpush1.xpose.msra.mxu0 0.0
    %1563 = vmatprep.subr.mxu0 0.0
    %1564 = vmatpush1.xpose.msra.mxu0 0.0
    %1565 = vmatprep.subr.mxu0 0.0
    %1566 = vmatpush1.xpose.msra.mxu0 0.0
    %1567 = vmatprep.subr.mxu0 0.0
    %1568 = vmatpush1.xpose.msra.mxu0 0.0
    %1569 = vmatprep.mubr.f32.mxu0 0.0
    %1570 = vmatmul.mubr.f32.gmra.mrb[0].mxu0 %v1501
    %v1571 = vpop.f32.mrb[0].mxu0
    %v1572 = vadd.f32 0.0, %v1571
    %v1573 = vpop.f32.mrb[0].mxu0
    %1574 = vdwg.mxu0
    %v1575 = vsel %vm1335, %v1572, -1e+30
    %v1576 = vsel %vm366, %v1575, -inf
    %1577 = vmax.xlane.f32.xlu0 %v1576
    %v1578 = vpop.xlane.xlu0 %1577
    %v1579 = vsub.f32 %v1575, %v1578
    %v1580 = vmul.f32 %v1579, 1.442695
    %v1581 = vpow.pop %v1580
    %v1582 = vsel %vm366, %v1581, 0.0
    %1583 = vadd.xlane.f32.xlu0 %v1582
    %v1584 = vpop.xlane.xlu0 %1583
    %1586 = vrot.lane.b32.xlu0 %v342, 120
    %v1587 = vpop.permute.xlu0 %1586
    %v1590 = vsel %vm366, %v1581, 0
    %1592 = vmatprep.subr.mxu0 0.0
    %1593 = vmatpush1.msra.mxu0 %v1587
    %1594 = vmatprep.subr.mxu0 0.0
    %1595 = vmatpush1.msra.mxu0 0.0
    %1596 = vmatprep.subr.mxu0 0.0
    %1597 = vmatpush1.msra.mxu0 0.0
    %1598 = vmatprep.subr.mxu0 0.0
    %1599 = vmatpush1.msra.mxu0 0.0
    %1600 = vmatprep.subr.mxu0 0.0
    %1601 = vmatpush1.msra.mxu0 0.0
    %1602 = vmatprep.subr.mxu0 0.0
    %1603 = vmatpush1.msra.mxu0 0.0
    %1604 = vmatprep.subr.mxu0 0.0
    %1605 = vmatpush1.msra.mxu0 0.0
    %1606 = vmatprep.subr.mxu0 0.0
    %1607 = vmatpush1.msra.mxu0 0.0
    %1608 = vmatprep.subr.mxu0 0.0
    %1609 = vmatpush1.msra.mxu0 0.0
    %1610 = vmatprep.subr.mxu0 0.0
    %1611 = vmatpush1.msra.mxu0 0.0
    %1612 = vmatprep.subr.mxu0 0.0
    %1613 = vmatpush1.msra.mxu0 0.0
    %1614 = vmatprep.subr.mxu0 0.0
    %1615 = vmatpush1.msra.mxu0 0.0
    %1616 = vmatprep.subr.mxu0 0.0
    %1617 = vmatpush1.msra.mxu0 0.0
    %1618 = vmatprep.subr.mxu0 0.0
    %1619 = vmatpush1.msra.mxu0 0.0
    %1620 = vmatprep.subr.mxu0 0.0
    %1621 = vmatpush1.msra.mxu0 0.0
    %1622 = vmatprep.subr.mxu0 0.0
    %1623 = vmatpush1.msra.mxu0 0.0
    %1624 = vmatprep.subr.mxu0 0.0
    %1625 = vmatpush1.msra.mxu0 0.0
    %1626 = vmatprep.subr.mxu0 0.0
    %1627 = vmatpush1.msra.mxu0 0.0
    %1628 = vmatprep.subr.mxu0 0.0
    %1629 = vmatpush1.msra.mxu0 0.0
    %1630 = vmatprep.subr.mxu0 0.0
    %1631 = vmatpush1.msra.mxu0 0.0
    %1632 = vmatprep.subr.mxu0 0.0
    %1633 = vmatpush1.msra.mxu0 0.0
    %1634 = vmatprep.subr.mxu0 0.0
    %1635 = vmatpush1.msra.mxu0 0.0
    %1636 = vmatprep.subr.mxu0 0.0
    %1637 = vmatpush1.msra.mxu0 0.0
    %1638 = vmatprep.subr.mxu0 0.0
    %1639 = vmatpush1.msra.mxu0 0.0
    %1640 = vmatprep.subr.mxu0 0.0
    %1641 = vmatpush1.msra.mxu0 0.0
    %1642 = vmatprep.subr.mxu0 0.0
    %1643 = vmatpush1.msra.mxu0 0.0
    %1644 = vmatprep.subr.mxu0 0.0
    %1645 = vmatpush1.msra.mxu0 0.0
    %1646 = vmatprep.subr.mxu0 0.0
    %1647 = vmatpush1.msra.mxu0 0.0
    %1648 = vmatprep.subr.mxu0 0.0
    %1649 = vmatpush1.msra.mxu0 0.0
    %1650 = vmatprep.subr.mxu0 0.0
    %1651 = vmatpush1.msra.mxu0 0.0
    %1652 = vmatprep.subr.mxu0 0.0
    %1653 = vmatpush1.msra.mxu0 0.0
    %1654 = vmatprep.subr.mxu0 0.0
    %1655 = vmatpush1.msra.mxu0 0.0
    %1656 = vmatprep.mubr.f32.mxu0 0.0
    %1657 = vmatmul.mubr.f32.gmra.mrb[0].mxu0 %v1590
    %v1658 = vpop.f32.mrb[0].mxu0
    %v1659 = vadd.f32 0.0, %v1658
    %v1660 = vpop.f32.mrb[0].mxu0
    %1661 = vdwg.mxu0
    %v1662 = vrcp.pop %v1584
    %v1663 = vmul.f32 %v1659, %v1662
    %v1665 = vsel %vm366, %v1663, 0
    %1667 = vmatprep.subr.mxu0 0.0
    %1668 = vmatpush1.msra.mxu0 %v348
    %1669 = vmatprep.subr.mxu0 0.0
    %1670 = vmatpush1.msra.mxu0 0.0
    %1671 = vmatprep.subr.mxu0 0.0
    %1672 = vmatpush1.msra.mxu0 0.0
    %1673 = vmatprep.subr.mxu0 0.0
    %1674 = vmatpush1.msra.mxu0 0.0
    %1675 = vmatprep.subr.mxu0 0.0
    %1676 = vmatpush1.msra.mxu0 0.0
    %1677 = vmatprep.subr.mxu0 0.0
    %1678 = vmatpush1.msra.mxu0 0.0
    %1679 = vmatprep.subr.mxu0 0.0
    %1680 = vmatpush1.msra.mxu0 0.0
    %1681 = vmatprep.subr.mxu0 0.0
    %1682 = vmatpush1.msra.mxu0 0.0
    %1683 = vmatprep.subr.mxu0 0.0
    %1684 = vmatpush1.msra.mxu0 0.0
    %1685 = vmatprep.subr.mxu0 0.0
    %1686 = vmatpush1.msra.mxu0 0.0
    %1687 = vmatprep.subr.mxu0 0.0
    %1688 = vmatpush1.msra.mxu0 0.0
    %1689 = vmatprep.subr.mxu0 0.0
    %1690 = vmatpush1.msra.mxu0 0.0
    %1691 = vmatprep.subr.mxu0 0.0
    %1692 = vmatpush1.msra.mxu0 0.0
    %1693 = vmatprep.subr.mxu0 0.0
    %1694 = vmatpush1.msra.mxu0 0.0
    %1695 = vmatprep.subr.mxu0 0.0
    %1696 = vmatpush1.msra.mxu0 0.0
    %1697 = vmatprep.subr.mxu0 0.0
    %1698 = vmatpush1.msra.mxu0 0.0
    %1699 = vmatprep.subr.mxu0 0.0
    %1700 = vmatpush1.msra.mxu0 0.0
    %1701 = vmatprep.subr.mxu0 0.0
    %1702 = vmatpush1.msra.mxu0 0.0
    %1703 = vmatprep.subr.mxu0 0.0
    %1704 = vmatpush1.msra.mxu0 0.0
    %1705 = vmatprep.subr.mxu0 0.0
    %1706 = vmatpush1.msra.mxu0 0.0
    %1707 = vmatprep.subr.mxu0 0.0
    %1708 = vmatpush1.msra.mxu0 0.0
    %1709 = vmatprep.subr.mxu0 0.0
    %1710 = vmatpush1.msra.mxu0 0.0
    %1711 = vmatprep.subr.mxu0 0.0
    %1712 = vmatpush1.msra.mxu0 0.0
    %1713 = vmatprep.subr.mxu0 0.0
    %1714 = vmatpush1.msra.mxu0 0.0
    %1715 = vmatprep.subr.mxu0 0.0
    %1716 = vmatpush1.msra.mxu0 0.0
    %1717 = vmatprep.subr.mxu0 0.0
    %1718 = vmatpush1.msra.mxu0 0.0
    %1719 = vmatprep.subr.mxu0 0.0
    %1720 = vmatpush1.msra.mxu0 0.0
    %1721 = vmatprep.subr.mxu0 0.0
    %1722 = vmatpush1.msra.mxu0 0.0
    %1723 = vmatprep.subr.mxu0 0.0
    %1724 = vmatpush1.msra.mxu0 0.0
    %1725 = vmatprep.subr.mxu0 0.0
    %1726 = vmatpush1.msra.mxu0 0.0
    %1727 = vmatprep.subr.mxu0 0.0
    %1728 = vmatpush1.msra.mxu0 0.0
    %1729 = vmatprep.subr.mxu0 0.0
    %1730 = vmatpush1.msra.mxu0 0.0
    %1731 = vmatprep.mubr.f32.mxu0 0.0
    %1732 = vmatmul.mubr.f32.gmra.mrb[0].mxu0 %v1665
    %v1733 = vpop.f32.mrb[0].mxu0
    %v1734 = vadd.f32 0.0, %v1733
    %v1735 = vpop.f32.mrb[0].mxu0
    %1736 = vdwg.mxu0
    %v1738 = vsel %vm366, %v1496, 0
    %1740 = vmatprep.subr.mxu0 0.0
    %1741 = vmatpush1.msra.mxu0 %v347
    %1742 = vmatprep.subr.mxu0 0.0
    %1743 = vmatpush1.msra.mxu0 0.0
    %1744 = vmatprep.subr.mxu0 0.0
    %1745 = vmatpush1.msra.mxu0 0.0
    %1746 = vmatprep.subr.mxu0 0.0
    %1747 = vmatpush1.msra.mxu0 0.0
    %1748 = vmatprep.subr.mxu0 0.0
    %1749 = vmatpush1.msra.mxu0 0.0
    %1750 = vmatprep.subr.mxu0 0.0
    %1751 = vmatpush1.msra.mxu0 0.0
    %1752 = vmatprep.subr.mxu0 0.0
    %1753 = vmatpush1.msra.mxu0 0.0
    %1754 = vmatprep.subr.mxu0 0.0
    %1755 = vmatpush1.msra.mxu0 0.0
    %1756 = vmatprep.subr.mxu0 0.0
    %1757 = vmatpush1.msra.mxu0 0.0
    %1758 = vmatprep.subr.mxu0 0.0
    %1759 = vmatpush1.msra.mxu0 0.0
    %1760 = vmatprep.subr.mxu0 0.0
    %1761 = vmatpush1.msra.mxu0 0.0
    %1762 = vmatprep.subr.mxu0 0.0
    %1763 = vmatpush1.msra.mxu0 0.0
    %1764 = vmatprep.subr.mxu0 0.0
    %1765 = vmatpush1.msra.mxu0 0.0
    %1766 = vmatprep.subr.mxu0 0.0
    %1767 = vmatpush1.msra.mxu0 0.0
    %1768 = vmatprep.subr.mxu0 0.0
    %1769 = vmatpush1.msra.mxu0 0.0
    %1770 = vmatprep.subr.mxu0 0.0
    %1771 = vmatpush1.msra.mxu0 0.0
    %1772 = vmatprep.subr.mxu0 0.0
    %1773 = vmatpush1.msra.mxu0 0.0
    %1774 = vmatprep.subr.mxu0 0.0
    %1775 = vmatpush1.msra.mxu0 0.0
    %1776 = vmatprep.subr.mxu0 0.0
    %1777 = vmatpush1.msra.mxu0 0.0
    %1778 = vmatprep.subr.mxu0 0.0
    %1779 = vmatpush1.msra.mxu0 0.0
    %1780 = vmatprep.subr.mxu0 0.0
    %1781 = vmatpush1.msra.mxu0 0.0
    %1782 = vmatprep.subr.mxu0 0.0
    %1783 = vmatpush1.msra.mxu0 0.0
    %1784 = vmatprep.subr.mxu0 0.0
    %1785 = vmatpush1.msra.mxu0 0.0
    %1786 = vmatprep.subr.mxu0 0.0
    %1787 = vmatpush1.msra.mxu0 0.0
    %1788 = vmatprep.subr.mxu0 0.0
    %1789 = vmatpush1.msra.mxu0 0.0
    %1790 = vmatprep.subr.mxu0 0.0
    %1791 = vmatpush1.msra.mxu0 0.0
    %1792 = vmatprep.subr.mxu0 0.0
    %1793 = vmatpush1.msra.mxu0 0.0
    %1794 = vmatprep.subr.mxu0 0.0
    %1795 = vmatpush1.msra.mxu0 0.0
    %1796 = vmatprep.subr.mxu0 0.0
    %1797 = vmatpush1.msra.mxu0 0.0
    %1798 = vmatprep.subr.mxu0 0.0
    %1799 = vmatpush1.msra.mxu0 0.0
    %1800 = vmatprep.subr.mxu0 0.0
    %1801 = vmatpush1.msra.mxu0 0.0
    %1802 = vmatprep.subr.mxu0 0.0
    %1803 = vmatpush1.msra.mxu0 0.0
    %1804 = vmatprep.mubr.f32.mxu0 0.0
    %1805 = vmatmul.mubr.f32.gmra.mrb[0].mxu0 %v1738
    %v1806 = vpop.f32.mrb[0].mxu0
    %v1807 = vadd.f32 %v1734, %v1806
    %v1808 = vpop.f32.mrb[0].mxu0
    %1809 = vdwg.mxu0
    %1810 = vrot.lane.b32.xlu0 %v346, 112
    %v1811 = vpop.permute.xlu0 %1810
    %1812 = vrot.lane.b32.xlu0 %v263, 112
    %v1813 = vpop.permute.xlu0 %1812
    %v1814 = vsel %vm366, %v1811, 0
    %v1816 = vsel %vm366, %v1813, 0
    %1818 = vmatprep.subr.mxu0 0.0
    %1819 = vmatpush1.xpose.msra.mxu0 %v1816
    %1820 = vmatprep.subr.mxu0 0.0
    %1821 = vmatpush1.xpose.msra.mxu0 0.0
    %1822 = vmatprep.subr.mxu0 0.0
    %1823 = vmatpush1.xpose.msra.mxu0 0.0
    %1824 = vmatprep.subr.mxu0 0.0
    %1825 = vmatpush1.xpose.msra.mxu0 0.0
    %1826 = vmatprep.subr.mxu0 0.0
    %1827 = vmatpush1.xpose.msra.mxu0 0.0
    %1828 = vmatprep.subr.mxu0 0.0
    %1829 = vmatpush1.xpose.msra.mxu0 0.0
    %1830 = vmatprep.subr.mxu0 0.0
    %1831 = vmatpush1.xpose.msra.mxu0 0.0
    %1832 = vmatprep.subr.mxu0 0.0
    %1833 = vmatpush1.xpose.msra.mxu0 0.0
    %1834 = vmatprep.subr.mxu0 0.0
    %1835 = vmatpush1.xpose.msra.mxu0 0.0
    %1836 = vmatprep.subr.mxu0 0.0
    %1837 = vmatpush1.xpose.msra.mxu0 0.0
    %1838 = vmatprep.subr.mxu0 0.0
    %1839 = vmatpush1.xpose.msra.mxu0 0.0
    %1840 = vmatprep.subr.mxu0 0.0
    %1841 = vmatpush1.xpose.msra.mxu0 0.0
    %1842 = vmatprep.subr.mxu0 0.0
    %1843 = vmatpush1.xpose.msra.mxu0 0.0
    %1844 = vmatprep.subr.mxu0 0.0
    %1845 = vmatpush1.xpose.msra.mxu0 0.0
    %1846 = vmatprep.subr.mxu0 0.0
    %1847 = vmatpush1.xpose.msra.mxu0 0.0
    %1848 = vmatprep.subr.mxu0 0.0
    %1849 = vmatpush1.xpose.msra.mxu0 0.0
    %1850 = vmatprep.subr.mxu0 0.0
    %1851 = vmatpush1.xpose.msra.mxu0 0.0
    %1852 = vmatprep.subr.mxu0 0.0
    %1853 = vmatpush1.xpose.msra.mxu0 0.0
    %1854 = vmatprep.subr.mxu0 0.0
    %1855 = vmatpush1.xpose.msra.mxu0 0.0
    %1856 = vmatprep.subr.mxu0 0.0
    %1857 = vmatpush1.xpose.msra.mxu0 0.0
    %1858 = vmatprep.subr.mxu0 0.0
    %1859 = vmatpush1.xpose.msra.mxu0 0.0
    %1860 = vmatprep.subr.mxu0 0.0
    %1861 = vmatpush1.xpose.msra.mxu0 0.0
    %1862 = vmatprep.subr.mxu0 0.0
    %1863 = vmatpush1.xpose.msra.mxu0 0.0
    %1864 = vmatprep.subr.mxu0 0.0
    %1865 = vmatpush1.xpose.msra.mxu0 0.0
    %1866 = vmatprep.subr.mxu0 0.0
    %1867 = vmatpush1.xpose.msra.mxu0 0.0
    %1868 = vmatprep.subr.mxu0 0.0
    %1869 = vmatpush1.xpose.msra.mxu0 0.0
    %1870 = vmatprep.subr.mxu0 0.0
    %1871 = vmatpush1.xpose.msra.mxu0 0.0
    %1872 = vmatprep.subr.mxu0 0.0
    %1873 = vmatpush1.xpose.msra.mxu0 0.0
    %1874 = vmatprep.subr.mxu0 0.0
    %1875 = vmatpush1.xpose.msra.mxu0 0.0
    %1876 = vmatprep.subr.mxu0 0.0
    %1877 = vmatpush1.xpose.msra.mxu0 0.0
    %1878 = vmatprep.subr.mxu0 0.0
    %1879 = vmatpush1.xpose.msra.mxu0 0.0
    %1880 = vmatprep.subr.mxu0 0.0
    %1881 = vmatpush1.xpose.msra.mxu0 0.0
    %1882 = vmatprep.mubr.f32.mxu0 0.0
    %1883 = vmatmul.mubr.f32.gmra.mrb[0].mxu0 %v1814
    %v1884 = vpop.f32.mrb[0].mxu0
    %v1885 = vadd.f32 0.0, %v1884
    %v1886 = vpop.f32.mrb[0].mxu0
    %1887 = vdwg.mxu0
    %v1888 = vsel %vm1335, %v1885, -1e+30
    %v1889 = vsel %vm366, %v1888, -inf
    %1890 = vmax.xlane.f32.xlu0 %v1889
    %v1891 = vpop.xlane.xlu0 %1890
    %v1892 = vsub.f32 %v1888, %v1891
    %v1893 = vmul.f32 %v1892, 1.442695
    %v1894 = vpow.pop %v1893
    %v1895 = vsel %vm366, %v1894, 0.0
    %1896 = vadd.xlane.f32.xlu0 %v1895
    %v1897 = vpop.xlane.xlu0 %1896
    %1898 = vrot.lane.b32.xlu0 %v342, 112
    %v1899 = vpop.permute.xlu0 %1898
    %v1902 = vsel %vm366, %v1894, 0
    %1904 = vmatprep.subr.mxu0 0.0
    %1905 = vmatpush1.msra.mxu0 %v1899
    %1906 = vmatprep.subr.mxu0 0.0
    %1907 = vmatpush1.msra.mxu0 0.0
    %1908 = vmatprep.subr.mxu0 0.0
    %1909 = vmatpush1.msra.mxu0 0.0
    %1910 = vmatprep.subr.mxu0 0.0
    %1911 = vmatpush1.msra.mxu0 0.0
    %1912 = vmatprep.subr.mxu0 0.0
    %1913 = vmatpush1.msra.mxu0 0.0
    %1914 = vmatprep.subr.mxu0 0.0
    %1915 = vmatpush1.msra.mxu0 0.0
    %1916 = vmatprep.subr.mxu0 0.0
    %1917 = vmatpush1.msra.mxu0 0.0
    %1918 = vmatprep.subr.mxu0 0.0
    %1919 = vmatpush1.msra.mxu0 0.0
    %1920 = vmatprep.subr.mxu0 0.0
    %1921 = vmatpush1.msra.mxu0 0.0
    %1922 = vmatprep.subr.mxu0 0.0
    %1923 = vmatpush1.msra.mxu0 0.0
    %1924 = vmatprep.subr.mxu0 0.0
    %1925 = vmatpush1.msra.mxu0 0.0
    %1926 = vmatprep.subr.mxu0 0.0
    %1927 = vmatpush1.msra.mxu0 0.0
    %1928 = vmatprep.subr.mxu0 0.0
    %1929 = vmatpush1.msra.mxu0 0.0
    %1930 = vmatprep.subr.mxu0 0.0
    %1931 = vmatpush1.msra.mxu0 0.0
    %1932 = vmatprep.subr.mxu0 0.0
    %1933 = vmatpush1.msra.mxu0 0.0
    %1934 = vmatprep.subr.mxu0 0.0
    %1935 = vmatpush1.msra.mxu0 0.0
    %1936 = vmatprep.subr.mxu0 0.0
    %1937 = vmatpush1.msra.mxu0 0.0
    %1938 = vmatprep.subr.mxu0 0.0
    %1939 = vmatpush1.msra.mxu0 0.0
    %1940 = vmatprep.subr.mxu0 0.0
    %1941 = vmatpush1.msra.mxu0 0.0
    %1942 = vmatprep.subr.mxu0 0.0
    %1943 = vmatpush1.msra.mxu0 0.0
    %1944 = vmatprep.subr.mxu0 0.0
    %1945 = vmatpush1.msra.mxu0 0.0
    %1946 = vmatprep.subr.mxu0 0.0
    %1947 = vmatpush1.msra.mxu0 0.0
    %1948 = vmatprep.subr.mxu0 0.0
    %1949 = vmatpush1.msra.mxu0 0.0
    %1950 = vmatprep.subr.mxu0 0.0
    %1951 = vmatpush1.msra.mxu0 0.0
    %1952 = vmatprep.subr.mxu0 0.0
    %1953 = vmatpush1.msra.mxu0 0.0
    %1954 = vmatprep.subr.mxu0 0.0
    %1955 = vmatpush1.msra.mxu0 0.0
    %1956 = vmatprep.subr.mxu0 0.0
    %1957 = vmatpush1.msra.mxu0 0.0
    %1958 = vmatprep.subr.mxu0 0.0
    %1959 = vmatpush1.msra.mxu0 0.0
    %1960 = vmatprep.subr.mxu0 0.0
    %1961 = vmatpush1.msra.mxu0 0.0
    %1962 = vmatprep.subr.mxu0 0.0
    %1963 = vmatpush1.msra.mxu0 0.0
    %1964 = vmatprep.subr.mxu0 0.0
    %1965 = vmatpush1.msra.mxu0 0.0
    %1966 = vmatprep.subr.mxu0 0.0
    %1967 = vmatpush1.msra.mxu0 0.0
    %1968 = vmatprep.mubr.f32.mxu0 0.0
    %1969 = vmatmul.mubr.f32.gmra.mrb[0].mxu0 %v1902
    %v1970 = vpop.f32.mrb[0].mxu0
    %v1971 = vadd.f32 0.0, %v1970
    %v1972 = vpop.f32.mrb[0].mxu0
    %1973 = vdwg.mxu0
    %v1974 = vrcp.pop %v1897
    %v1975 = vmul.f32 %v1971, %v1974
    %v1977 = vsel %vm366, %v1975, 0
    %1979 = vmatprep.subr.mxu0 0.0
    %1980 = vmatpush1.msra.mxu0 %v349
    %1981 = vmatprep.subr.mxu0 0.0
    %1982 = vmatpush1.msra.mxu0 0.0
    %1983 = vmatprep.subr.mxu0 0.0
    %1984 = vmatpush1.msra.mxu0 0.0
    %1985 = vmatprep.subr.mxu0 0.0
    %1986 = vmatpush1.msra.mxu0 0.0
    %1987 = vmatprep.subr.mxu0 0.0
    %1988 = vmatpush1.msra.mxu0 0.0
    %1989 = vmatprep.subr.mxu0 0.0
    %1990 = vmatpush1.msra.mxu0 0.0
    %1991 = vmatprep.subr.mxu0 0.0
    %1992 = vmatpush1.msra.mxu0 0.0
    %1993 = vmatprep.subr.mxu0 0.0
    %1994 = vmatpush1.msra.mxu0 0.0
    %1995 = vmatprep.subr.mxu0 0.0
    %1996 = vmatpush1.msra.mxu0 0.0
    %1997 = vmatprep.subr.mxu0 0.0
    %1998 = vmatpush1.msra.mxu0 0.0
    %1999 = vmatprep.subr.mxu0 0.0
    %2000 = vmatpush1.msra.mxu0 0.0
    %2001 = vmatprep.subr.mxu0 0.0
    %2002 = vmatpush1.msra.mxu0 0.0
    %2003 = vmatprep.subr.mxu0 0.0
    %2004 = vmatpush1.msra.mxu0 0.0
    %2005 = vmatprep.subr.mxu0 0.0
    %2006 = vmatpush1.msra.mxu0 0.0
    %2007 = vmatprep.subr.mxu0 0.0
    %2008 = vmatpush1.msra.mxu0 0.0
    %2009 = vmatprep.subr.mxu0 0.0
    %2010 = vmatpush1.msra.mxu0 0.0
    %2011 = vmatprep.subr.mxu0 0.0
    %2012 = vmatpush1.msra.mxu0 0.0
    %2013 = vmatprep.subr.mxu0 0.0
    %2014 = vmatpush1.msra.mxu0 0.0
    %2015 = vmatprep.subr.mxu0 0.0
    %2016 = vmatpush1.msra.mxu0 0.0
    %2017 = vmatprep.subr.mxu0 0.0
    %2018 = vmatpush1.msra.mxu0 0.0
    %2019 = vmatprep.subr.mxu0 0.0
    %2020 = vmatpush1.msra.mxu0 0.0
    %2021 = vmatprep.subr.mxu0 0.0
    %2022 = vmatpush1.msra.mxu0 0.0
    %2023 = vmatprep.subr.mxu0 0.0
    %2024 = vmatpush1.msra.mxu0 0.0
    %2025 = vmatprep.subr.mxu0 0.0
    %2026 = vmatpush1.msra.mxu0 0.0
    %2027 = vmatprep.subr.mxu0 0.0
    %2028 = vmatpush1.msra.mxu0 0.0
    %2029 = vmatprep.subr.mxu0 0.0
    %2030 = vmatpush1.msra.mxu0 0.0
    %2031 = vmatprep.subr.mxu0 0.0
    %2032 = vmatpush1.msra.mxu0 0.0
    %2033 = vmatprep.subr.mxu0 0.0
    %2034 = vmatpush1.msra.mxu0 0.0
    %2035 = vmatprep.subr.mxu0 0.0
    %2036 = vmatpush1.msra.mxu0 0.0
    %2037 = vmatprep.subr.mxu0 0.0
    %2038 = vmatpush1.msra.mxu0 0.0
    %2039 = vmatprep.subr.mxu0 0.0
    %2040 = vmatpush1.msra.mxu0 0.0
    %2041 = vmatprep.subr.mxu0 0.0
    %2042 = vmatpush1.msra.mxu0 0.0
    %2043 = vmatprep.mubr.f32.mxu0 0.0
    %2044 = vmatmul.mubr.f32.gmra.mrb[0].mxu0 %v1977
    %v2045 = vpop.f32.mrb[0].mxu0
    %v2046 = vadd.f32 0.0, %v2045
    %v2047 = vpop.f32.mrb[0].mxu0
    %2048 = vdwg.mxu0
    %v2049 = vadd.f32 %v1807, %v2046
    %2050 = vrot.lane.b32.xlu0 %v346, 104
    %v2051 = vpop.permute.xlu0 %2050
    %2052 = vrot.lane.b32.xlu0 %v263, 104
    %v2053 = vpop.permute.xlu0 %2052
    %v2054 = vsel %vm366, %v2051, 0
    %v2056 = vsel %vm366, %v2053, 0
    %2058 = vmatprep.subr.mxu0 0.0
    %2059 = vmatpush1.xpose.msra.mxu0 %v2056
    %2060 = vmatprep.subr.mxu0 0.0
    %2061 = vmatpush1.xpose.msra.mxu0 0.0
    %2062 = vmatprep.subr.mxu0 0.0
    %2063 = vmatpush1.xpose.msra.mxu0 0.0
    %2064 = vmatprep.subr.mxu0 0.0
    %2065 = vmatpush1.xpose.msra.mxu0 0.0
    %2066 = vmatprep.subr.mxu0 0.0
    %2067 = vmatpush1.xpose.msra.mxu0 0.0
    %2068 = vmatprep.subr.mxu0 0.0
    %2069 = vmatpush1.xpose.msra.mxu0 0.0
    %2070 = vmatprep.subr.mxu0 0.0
    %2071 = vmatpush1.xpose.msra.mxu0 0.0
    %2072 = vmatprep.subr.mxu0 0.0
    %2073 = vmatpush1.xpose.msra.mxu0 0.0
    %2074 = vmatprep.subr.mxu0 0.0
    %2075 = vmatpush1.xpose.msra.mxu0 0.0
    %2076 = vmatprep.subr.mxu0 0.0
    %2077 = vmatpush1.xpose.msra.mxu0 0.0
    %2078 = vmatprep.subr.mxu0 0.0
    %2079 = vmatpush1.xpose.msra.mxu0 0.0
    %2080 = vmatprep.subr.mxu0 0.0
    %2081 = vmatpush1.xpose.msra.mxu0 0.0
    %2082 = vmatprep.subr.mxu0 0.0
    %2083 = vmatpush1.xpose.msra.mxu0 0.0
    %2084 = vmatprep.subr.mxu0 0.0
    %2085 = vmatpush1.xpose.msra.mxu0 0.0
    %2086 = vmatprep.subr.mxu0 0.0
    %2087 = vmatpush1.xpose.msra.mxu0 0.0
    %2088 = vmatprep.subr.mxu0 0.0
    %2089 = vmatpush1.xpose.msra.mxu0 0.0
    %2090 = vmatprep.subr.mxu0 0.0
    %2091 = vmatpush1.xpose.msra.mxu0 0.0
    %2092 = vmatprep.subr.mxu0 0.0
    %2093 = vmatpush1.xpose.msra.mxu0 0.0
    %2094 = vmatprep.subr.mxu0 0.0
    %2095 = vmatpush1.xpose.msra.mxu0 0.0
    %2096 = vmatprep.subr.mxu0 0.0
    %2097 = vmatpush1.xpose.msra.mxu0 0.0
    %2098 = vmatprep.subr.mxu0 0.0
    %2099 = vmatpush1.xpose.msra.mxu0 0.0
    %2100 = vmatprep.subr.mxu0 0.0
    %2101 = vmatpush1.xpose.msra.mxu0 0.0
    %2102 = vmatprep.subr.mxu0 0.0
    %2103 = vmatpush1.xpose.msra.mxu0 0.0
    %2104 = vmatprep.subr.mxu0 0.0
    %2105 = vmatpush1.xpose.msra.mxu0 0.0
    %2106 = vmatprep.subr.mxu0 0.0
    %2107 = vmatpush1.xpose.msra.mxu0 0.0
    %2108 = vmatprep.subr.mxu0 0.0
    %2109 = vmatpush1.xpose.msra.mxu0 0.0
    %2110 = vmatprep.subr.mxu0 0.0
    %2111 = vmatpush1.xpose.msra.mxu0 0.0
    %2112 = vmatprep.subr.mxu0 0.0
    %2113 = vmatpush1.xpose.msra.mxu0 0.0
    %2114 = vmatprep.subr.mxu0 0.0
    %2115 = vmatpush1.xpose.msra.mxu0 0.0
    %2116 = vmatprep.subr.mxu0 0.0
    %2117 = vmatpush1.xpose.msra.mxu0 0.0
    %2118 = vmatprep.subr.mxu0 0.0
    %2119 = vmatpush1.xpose.msra.mxu0 0.0
    %2120 = vmatprep.subr.mxu0 0.0
    %2121 = vmatpush1.xpose.msra.mxu0 0.0
    %2122 = vmatprep.mubr.f32.mxu0 0.0
    %2123 = vmatmul.mubr.f32.gmra.mrb[0].mxu0 %v2054
    %v2124 = vpop.f32.mrb[0].mxu0
    %v2125 = vadd.f32 0.0, %v2124
    %v2126 = vpop.f32.mrb[0].mxu0
    %2127 = vdwg.mxu0
    %v2128 = vsel %vm1335, %v2125, -1e+30
    %v2129 = vsel %vm366, %v2128, -inf
    %2130 = vmax.xlane.f32.xlu0 %v2129
    %v2131 = vpop.xlane.xlu0 %2130
    %v2132 = vsub.f32 %v2128, %v2131
    %v2133 = vmul.f32 %v2132, 1.442695
    %v2134 = vpow.pop %v2133
    %v2135 = vsel %vm366, %v2134, 0.0
    %2136 = vadd.xlane.f32.xlu0 %v2135
    %v2137 = vpop.xlane.xlu0 %2136
    %2138 = vrot.lane.b32.xlu0 %v342, 104
    %v2139 = vpop.permute.xlu0 %2138
    %v2142 = vsel %vm366, %v2134, 0
    %2144 = vmatprep.subr.mxu0 0.0
    %2145 = vmatpush1.msra.mxu0 %v2139
    %2146 = vmatprep.subr.mxu0 0.0
    %2147 = vmatpush1.msra.mxu0 0.0
    %2148 = vmatprep.subr.mxu0 0.0
    %2149 = vmatpush1.msra.mxu0 0.0
    %2150 = vmatprep.subr.mxu0 0.0
    %2151 = vmatpush1.msra.mxu0 0.0
    %2152 = vmatprep.subr.mxu0 0.0
    %2153 = vmatpush1.msra.mxu0 0.0
    %2154 = vmatprep.subr.mxu0 0.0
    %2155 = vmatpush1.msra.mxu0 0.0
    %2156 = vmatprep.subr.mxu0 0.0
    %2157 = vmatpush1.msra.mxu0 0.0
    %2158 = vmatprep.subr.mxu0 0.0
    %2159 = vmatpush1.msra.mxu0 0.0
    %2160 = vmatprep.subr.mxu0 0.0
    %2161 = vmatpush1.msra.mxu0 0.0
    %2162 = vmatprep.subr.mxu0 0.0
    %2163 = vmatpush1.msra.mxu0 0.0
    %2164 = vmatprep.subr.mxu0 0.0
    %2165 = vmatpush1.msra.mxu0 0.0
    %2166 = vmatprep.subr.mxu0 0.0
    %2167 = vmatpush1.msra.mxu0 0.0
    %2168 = vmatprep.subr.mxu0 0.0
    %2169 = vmatpush1.msra.mxu0 0.0
    %2170 = vmatprep.subr.mxu0 0.0
    %2171 = vmatpush1.msra.mxu0 0.0
    %2172 = vmatprep.subr.mxu0 0.0
    %2173 = vmatpush1.msra.mxu0 0.0
    %2174 = vmatprep.subr.mxu0 0.0
    %2175 = vmatpush1.msra.mxu0 0.0
    %2176 = vmatprep.subr.mxu0 0.0
    %2177 = vmatpush1.msra.mxu0 0.0
    %2178 = vmatprep.subr.mxu0 0.0
    %2179 = vmatpush1.msra.mxu0 0.0
    %2180 = vmatprep.subr.mxu0 0.0
    %2181 = vmatpush1.msra.mxu0 0.0
    %2182 = vmatprep.subr.mxu0 0.0
    %2183 = vmatpush1.msra.mxu0 0.0
    %2184 = vmatprep.subr.mxu0 0.0
    %2185 = vmatpush1.msra.mxu0 0.0
    %2186 = vmatprep.subr.mxu0 0.0
    %2187 = vmatpush1.msra.mxu0 0.0
    %2188 = vmatprep.subr.mxu0 0.0
    %2189 = vmatpush1.msra.mxu0 0.0
    %2190 = vmatprep.subr.mxu0 0.0
    %2191 = vmatpush1.msra.mxu0 0.0
    %2192 = vmatprep.subr.mxu0 0.0
    %2193 = vmatpush1.msra.mxu0 0.0
    %2194 = vmatprep.subr.mxu0 0.0
    %2195 = vmatpush1.msra.mxu0 0.0
    %2196 = vmatprep.subr.mxu0 0.0
    %2197 = vmatpush1.msra.mxu0 0.0
    %2198 = vmatprep.subr.mxu0 0.0
    %2199 = vmatpush1.msra.mxu0 0.0
    %2200 = vmatprep.subr.mxu0 0.0
    %2201 = vmatpush1.msra.mxu0 0.0
    %2202 = vmatprep.subr.mxu0 0.0
    %2203 = vmatpush1.msra.mxu0 0.0
    %2204 = vmatprep.subr.mxu0 0.0
    %2205 = vmatpush1.msra.mxu0 0.0
    %2206 = vmatprep.subr.mxu0 0.0
    %2207 = vmatpush1.msra.mxu0 0.0
    %2208 = vmatprep.mubr.f32.mxu0 0.0
    %2209 = vmatmul.mubr.f32.gmra.mrb[0].mxu0 %v2142
    %v2210 = vpop.f32.mrb[0].mxu0
    %v2211 = vadd.f32 0.0, %v2210
    %v2212 = vpop.f32.mrb[0].mxu0
    %2213 = vdwg.mxu0
    %v2214 = vrcp.pop %v2137
    %v2215 = vmul.f32 %v2211, %v2214
    %v2217 = vsel %vm366, %v2215, 0
    %2219 = vmatprep.subr.mxu0 0.0
    %2220 = vmatpush1.msra.mxu0 %v350
    %2221 = vmatprep.subr.mxu0 0.0
    %2222 = vmatpush1.msra.mxu0 0.0
    %2223 = vmatprep.subr.mxu0 0.0
    %2224 = vmatpush1.msra.mxu0 0.0
    %2225 = vmatprep.subr.mxu0 0.0
    %2226 = vmatpush1.msra.mxu0 0.0
    %2227 = vmatprep.subr.mxu0 0.0
    %2228 = vmatpush1.msra.mxu0 0.0
    %2229 = vmatprep.subr.mxu0 0.0
    %2230 = vmatpush1.msra.mxu0 0.0
    %2231 = vmatprep.subr.mxu0 0.0
    %2232 = vmatpush1.msra.mxu0 0.0
    %2233 = vmatprep.subr.mxu0 0.0
    %2234 = vmatpush1.msra.mxu0 0.0
    %2235 = vmatprep.subr.mxu0 0.0
    %2236 = vmatpush1.msra.mxu0 0.0
    %2237 = vmatprep.subr.mxu0 0.0
    %2238 = vmatpush1.msra.mxu0 0.0
    %2239 = vmatprep.subr.mxu0 0.0
    %2240 = vmatpush1.msra.mxu0 0.0
    %2241 = vmatprep.subr.mxu0 0.0
    %2242 = vmatpush1.msra.mxu0 0.0
    %2243 = vmatprep.subr.mxu0 0.0
    %2244 = vmatpush1.msra.mxu0 0.0
    %2245 = vmatprep.subr.mxu0 0.0
    %2246 = vmatpush1.msra.mxu0 0.0
    %2247 = vmatprep.subr.mxu0 0.0
    %2248 = vmatpush1.msra.mxu0 0.0
    %2249 = vmatprep.subr.mxu0 0.0
    %2250 = vmatpush1.msra.mxu0 0.0
    %2251 = vmatprep.subr.mxu0 0.0
    %2252 = vmatpush1.msra.mxu0 0.0
    %2253 = vmatprep.subr.mxu0 0.0
    %2254 = vmatpush1.msra.mxu0 0.0
    %2255 = vmatprep.subr.mxu0 0.0
    %2256 = vmatpush1.msra.mxu0 0.0
    %2257 = vmatprep.subr.mxu0 0.0
    %2258 = vmatpush1.msra.mxu0 0.0
    %2259 = vmatprep.subr.mxu0 0.0
    %2260 = vmatpush1.msra.mxu0 0.0
    %2261 = vmatprep.subr.mxu0 0.0
    %2262 = vmatpush1.msra.mxu0 0.0
    %2263 = vmatprep.subr.mxu0 0.0
    %2264 = vmatpush1.msra.mxu0 0.0
    %2265 = vmatprep.subr.mxu0 0.0
    %2266 = vmatpush1.msra.mxu0 0.0
    %2267 = vmatprep.subr.mxu0 0.0
    %2268 = vmatpush1.msra.mxu0 0.0
    %2269 = vmatprep.subr.mxu0 0.0
    %2270 = vmatpush1.msra.mxu0 0.0
    %2271 = vmatprep.subr.mxu0 0.0
    %2272 = vmatpush1.msra.mxu0 0.0
    %2273 = vmatprep.subr.mxu0 0.0
    %2274 = vmatpush1.msra.mxu0 0.0
    %2275 = vmatprep.subr.mxu0 0.0
    %2276 = vmatpush1.msra.mxu0 0.0
    %2277 = vmatprep.subr.mxu0 0.0
    %2278 = vmatpush1.msra.mxu0 0.0
    %2279 = vmatprep.subr.mxu0 0.0
    %2280 = vmatpush1.msra.mxu0 0.0
    %2281 = vmatprep.subr.mxu0 0.0
    %2282 = vmatpush1.msra.mxu0 0.0
    %2283 = vmatprep.mubr.f32.mxu0 0.0
    %2284 = vmatmul.mubr.f32.gmra.mrb[0].mxu0 %v2217
    %v2285 = vpop.f32.mrb[0].mxu0
    %v2286 = vadd.f32 0.0, %v2285
    %v2287 = vpop.f32.mrb[0].mxu0
    %2288 = vdwg.mxu0
    %v2289 = vadd.f32 %v2049, %v2286
    %v2290 = vadd.f32 %v2289, %v1325
    %2291 = vst.msk [vmem:[#allocation13] sm:$0xff] %vm105, %v1327
    %2292 = vst.msk [vmem:[#allocation13 + $0x8] sm:$0xff] %vm105, %v2290
    // Predicated region
    $region46: #{_mha_pallas.1} parent=1 // pred_check
      _
    $region47: #{_mha_pallas.1} parent=1 // pred_check_branch
      %2294 = sbr.rel (0) target = $region49
    $region48: #{_mha_pallas.1} parent=1 // pred_region
      %s2296 = ssub.s32 256, 256
      %2297 = vsyncadd [#allocation6], %s2296
      %s2298 = sshll.u32 [#allocation13], 4
      %s2299 = int_to_ptr.vmem [resolvable:$true] %s2298
      %2304 = dma.vmem_to_hbm [thread:$0]  %s2299, 256, %s7, [#allocation6], 128, 128, 8
    $region49: #{_mha_pallas.1} parent=1 // pred_fallthru
      _
    // Predicated region
    $region50: #{_mha_pallas.1} parent=1 // pred_check
      _
    $region51: #{_mha_pallas.1} parent=1 // pred_check_branch
      %2306 = sbr.rel (0) target = $region53
    $region52: #{_mha_pallas.1} parent=1 // pred_region
      %2307 = dma.done [#allocation6], 256
    $region53: #{_mha_pallas.1} parent=1 // pred_fallthru
      _
    %2308 = vsyncpa [#allocation5], 1
    %2309 = vsyncpa [#allocation8], 1
    %2310 = vsyncpa [#allocation11], 1
    %2311 = vsyncpa [#allocation6], 1

// kernel: _mha_pallas.1
$region0: #{_mha_pallas.1}
  #allocation0 [shape = 'u32[]', space=smem, size = 0x4, offset = 0x4, fixed_abs, tag = 'smem constant byte address 0x4 - core index']
  #allocation1 [shape = 'u32[144,128]{1,0:T(1,128)}', space=vmem, size = 0x12000, scoped, tag = 'internal scratch']
  #allocation2 [shape = 's32[1]{0}', space=sflag, size = 0x4, scoped, tag = 'scoped memory for _mha_pallas.1']
  #allocation3 [shape = 'u8[512]{0}', space=smem, size = 0x200, scoped, tag = 'prefetched SMEM operand 0']
  %s0 = inlined_call_operand.vmem [shape: s32[2], index: 0, kind: input, shape index: {}]
  %s1 = inlined_call_operand.hbm [shape: f32[16,32], index: 1, kind: input, shape index: {}]
  %s2 = inlined_call_operand.hbm [shape: f32[32,32], index: 2, kind: input, shape index: {}]
  %s3 = inlined_call_operand.hbm [shape: f32[32,32], index: 3, kind: input, shape index: {}]
  %s4 = inlined_call_operand.hbm [shape: f32[32,32], index: 4, kind: input, shape index: {}]
  %s5 = inlined_call_operand.hbm [shape: f32[32,32], index: 5, kind: input, shape index: {}]
  %s6 = inlined_call_operand.vmem [shape: f32[1,32], index: 6, kind: input, shape index: {}]
  %s7 = inlined_call_operand.hbm [shape: f32[16,32], index: 7, kind: output, shape index: {}]
  %s8 = sld [smem:[#allocation0]]
  $region54: #{_mha_pallas.1} parent=0
    _
  %s10 = ssub.s32 1, %s8
  %s11 = scalar_select 0, %s10, %s8
  %s12 = sshll.u32 %s0, 4
  %s13 = int_to_ptr.vmem [resolvable:$true] %s12
  %15 = dma.vmem_to_smem %s13, 16, [#allocation3], [#allocation2]
  %16 = dma.done [#allocation2], 16
  %17 = sfence
  $region1: #{_mha_pallas.1} parent=0
    #allocation4 [shape = 'u8[8192]{0}', space=vmem, size = 0x2000, scoped, tag = 'input window, operand 1, single buffered']
    #allocation5 [shape = 's32[1]{0}', space=sflag, size = 0x4, scoped, tag = 'scoped memory for _mha_pallas.1']
    #allocation6 [shape = 's32[1]{0}', space=sflag, size = 0x4, scoped, tag = 'scoped memory for _mha_pallas.1']
    #allocation7 [shape = 'u8[16384]{0}', space=vmem, size = 0x4000, scoped, tag = 'input window, operand 2, single buffered']
    #allocation8 [shape = 's32[1]{0}', space=sflag, size = 0x4, scoped, tag = 'scoped memory for _mha_pallas.1']
    #allocation9 [shape = 'u8[16384]{0}', space=vmem, size = 0x4000, scoped, tag = 'input window, operand 3, single buffered']
    #allocation10 [shape = 'u8[16384]{0}', space=vmem, size = 0x4000, scoped, tag = 'input window, operand 4, single buffered']
    #allocation11 [shape = 's32[1]{0}', space=sflag, size = 0x4, scoped, tag = 'scoped memory for _mha_pallas.1']
    #allocation12 [shape = 'u8[16384]{0}', space=vmem, size = 0x4000, scoped, tag = 'input window, operand 5, single buffered']
    #allocation13 [shape = 'u8[8192]{0}', space=vmem, size = 0x2000, scoped, tag = 'output window, operand 0, single buffered']
    %18 = vsyncpa [#allocation5], 0
    %19 = vsyncpa [#allocation8], 0
    %20 = vsyncpa [#allocation11], 0
    %21 = vsyncpa [#allocation6], 0
    // Predicated region
    $region2: #{_mha_pallas.1} parent=1 // pred_check
      _
    $region3: #{_mha_pallas.1} parent=1 // pred_check_branch
      %23 = sbr.rel (0) target = $region5
    $region4: #{_mha_pallas.1} parent=1 // pred_region
      %s25 = ssub.s32 256, 256
      %26 = vsyncadd [#allocation5], %s25
      %s27 = sshll.u32 [#allocation4], 4
      %s28 = int_to_ptr.vmem [resolvable:$true] %s27
      %33 = dma.hbm_to_vmem [thread:$0]  %s1, 256, %s28, [#allocation5], 128, 128, 8
    $region5: #{_mha_pallas.1} parent=1 // pred_fallthru
      _
    // Predicated region
    $region6: #{_mha_pallas.1} parent=1 // pred_check
      _
    $region7: #{_mha_pallas.1} parent=1 // pred_check_branch
      %35 = sbr.rel (0) target = $region9
    $region8: #{_mha_pallas.1} parent=1 // pred_region
      %s37 = ssub.s32 512, 512
      %38 = vsyncadd [#allocation8], %s37
      %s39 = sshll.u32 [#allocation7], 4
      %s40 = int_to_ptr.vmem [resolvable:$true] %s39
      %45 = dma.hbm_to_vmem [thread:$0]  %s2, 512, %s40, [#allocation8], 128, 128, 8
    $region9: #{_mha_pallas.1} parent=1 // pred_fallthru
      _
    // Predicated region
    $region10: #{_mha_pallas.1} parent=1 // pred_check
      _
    $region11: #{_mha_pallas.1} parent=1 // pred_check_branch
      %47 = sbr.rel (0) target = $region13
    $region12: #{_mha_pallas.1} parent=1 // pred_region
      %s49 = ssub.s32 512, 512
      %50 = vsyncadd [#allocation8], %s49
      %s51 = sshll.u32 [#allocation9], 4
      %s52 = int_to_ptr.vmem [resolvable:$true] %s51
      %57 = dma.hbm_to_vmem [thread:$0]  %s3, 512, %s52, [#allocation8], 128, 128, 8
    $region13: #{_mha_pallas.1} parent=1 // pred_fallthru
      _
    // Predicated region
    $region14: #{_mha_pallas.1} parent=1 // pred_check
      _
    $region15: #{_mha_pallas.1} parent=1 // pred_check_branch
      %59 = sbr.rel (0) target = $region17
    $region16: #{_mha_pallas.1} parent=1 // pred_region
      %s61 = ssub.s32 512, 512
      %62 = vsyncadd [#allocation11], %s61
      %s63 = sshll.u32 [#allocation10], 4
      %s64 = int_to_ptr.vmem [resolvable:$true] %s63
      %69 = dma.hbm_to_vmem [thread:$0]  %s4, 512, %s64, [#allocation11], 128, 128, 8
    $region17: #{_mha_pallas.1} parent=1 // pred_fallthru
      _
    // Predicated region
    $region18: #{_mha_pallas.1} parent=1 // pred_check
      _
    $region19: #{_mha_pallas.1} parent=1 // pred_check_branch
      %71 = sbr.rel (0) target = $region21
    $region20: #{_mha_pallas.1} parent=1 // pred_region
      %s73 = ssub.s32 512, 512
      %74 = vsyncadd [#allocation11], %s73
      %s75 = sshll.u32 [#allocation12], 4
      %s76 = int_to_ptr.vmem [resolvable:$true] %s75
      %81 = dma.hbm_to_vmem [thread:$0]  %s5, 512, %s76, [#allocation11], 128, 128, 8
    $region21: #{_mha_pallas.1} parent=1 // pred_fallthru
      _
    // Predicated region
    $region22: #{_mha_pallas.1} parent=1 // pred_check
      _
    $region23: #{_mha_pallas.1} parent=1 // pred_check_branch
      %83 = sbr.rel (0) target = $region25
    $region24: #{_mha_pallas.1} parent=1 // pred_region
      _
    $region25: #{_mha_pallas.1} parent=1 // pred_fallthru
      _
    // Predicated region
    $region26: #{_mha_pallas.1} parent=1 // pred_check
      _
    $region27: #{_mha_pallas.1} parent=1 // pred_check_branch
      %85 = sbr.rel (0) target = $region29
    $region28: #{_mha_pallas.1} parent=1 // pred_region
      %86 = dma.done [#allocation5], 256
    $region29: #{_mha_pallas.1} parent=1 // pred_fallthru
      _
    // Predicated region
    $region30: #{_mha_pallas.1} parent=1 // pred_check
      _
    $region31: #{_mha_pallas.1} parent=1 // pred_check_branch
      %88 = sbr.rel (0) target = $region33
    $region32: #{_mha_pallas.1} parent=1 // pred_region
      %89 = dma.done [#allocation8], 512
    $region33: #{_mha_pallas.1} parent=1 // pred_fallthru
      _
    // Predicated region
    $region34: #{_mha_pallas.1} parent=1 // pred_check
      _
    $region35: #{_mha_pallas.1} parent=1 // pred_check_branch
      %91 = sbr.rel (0) target = $region37
    $region36: #{_mha_pallas.1} parent=1 // pred_region
      %92 = dma.done [#allocation8], 512
    $region37: #{_mha_pallas.1} parent=1 // pred_fallthru
      _
    // Predicated region
    $region38: #{_mha_pallas.1} parent=1 // pred_check
      _
    $region39: #{_mha_pallas.1} parent=1 // pred_check_branch
      %94 = sbr.rel (0) target = $region41
    $region40: #{_mha_pallas.1} parent=1 // pred_region
      %95 = dma.done [#allocation11], 512
    $region41: #{_mha_pallas.1} parent=1 // pred_fallthru
      _
    // Predicated region
    $region42: #{_mha_pallas.1} parent=1 // pred_check
      _
    $region43: #{_mha_pallas.1} parent=1 // pred_check_branch
      %97 = sbr.rel (0) target = $region45
    $region44: #{_mha_pallas.1} parent=1 // pred_region
      %98 = dma.done [#allocation11], 512
    $region45: #{_mha_pallas.1} parent=1 // pred_fallthru
      _
    %v99 = vld [vmem:[#allocation4] sm:$0xff]
    %v100 = vld [vmem:[#allocation4 + $0x8] sm:$0xff]
    %v101 = vld [vmem:[#allocation7] sm:$0xff]
    %v102 = vld [vmem:[#allocation7 + $0x8] sm:$0xff]
    %v103 = vld [vmem:[#allocation7 + $0x10] sm:$0xff]
    %v104 = vld [vmem:[#allocation7 + $0x18] sm:$0xff]
    %vm105 = vcmask 261120
    %v107 = vsel %vm105, %v99, 0
    %v110 = vsel %vm105, %v100, 0
    %112 = vmatprep.subr.mxu0 0.0
    %113 = vmatpush1.msra.mxu0 %v101
    %114 = vmatprep.subr.mxu0 0.0
    %115 = vmatpush1.msra.mxu0 %v102
    %116 = vmatprep.subr.mxu0 0.0
    %117 = vmatpush1.msra.mxu0 %v103
    %118 = vmatprep.subr.mxu0 0.0
    %119 = vmatpush1.msra.mxu0 %v104
    %120 = vmatprep.subr.mxu0 0.0
    %121 = vmatpush1.msra.mxu0 0.0
    %122 = vmatprep.subr.mxu0 0.0
    %123 = vmatpush1.msra.mxu0 0.0
    %124 = vmatprep.subr.mxu0 0.0
    %125 = vmatpush1.msra.mxu0 0.0
    %126 = vmatprep.subr.mxu0 0.0
    %127 = vmatpush1.msra.mxu0 0.0
    %128 = vmatprep.subr.mxu0 0.0
    %129 = vmatpush1.msra.mxu0 0.0
    %130 = vmatprep.subr.mxu0 0.0
    %131 = vmatpush1.msra.mxu0 0.0
    %132 = vmatprep.subr.mxu0 0.0
    %133 = vmatpush1.msra.mxu0 0.0
    %134 = vmatprep.subr.mxu0 0.0
    %135 = vmatpush1.msra.mxu0 0.0
    %136 = vmatprep.subr.mxu0 0.0
    %137 = vmatpush1.msra.mxu0 0.0
    %138 = vmatprep.subr.mxu0 0.0
    %139 = vmatpush1.msra.mxu0 0.0
    %140 = vmatprep.subr.mxu0 0.0
    %141 = vmatpush1.msra.mxu0 0.0
    %142 = vmatprep.subr.mxu0 0.0
    %143 = vmatpush1.msra.mxu0 0.0
    %144 = vmatprep.subr.mxu0 0.0
    %145 = vmatpush1.msra.mxu0 0.0
    %146 = vmatprep.subr.mxu0 0.0
    %147 = vmatpush1.msra.mxu0 0.0
    %148 = vmatprep.subr.mxu0 0.0
    %149 = vmatpush1.msra.mxu0 0.0
    %150 = vmatprep.subr.mxu0 0.0
    %151 = vmatpush1.msra.mxu0 0.0
    %152 = vmatprep.subr.mxu0 0.0
    %153 = vmatpush1.msra.mxu0 0.0
    %154 = vmatprep.subr.mxu0 0.0
    %155 = vmatpush1.msra.mxu0 0.0
    %156 = vmatprep.subr.mxu0 0.0
    %157 = vmatpush1.msra.mxu0 0.0
    %158 = vmatprep.subr.mxu0 0.0
    %159 = vmatpush1.msra.mxu0 0.0
    %160 = vmatprep.subr.mxu0 0.0
    %161 = vmatpush1.msra.mxu0 0.0
    %162 = vmatprep.subr.mxu0 0.0
    %163 = vmatpush1.msra.mxu0 0.0
    %164 = vmatprep.subr.mxu0 0.0
    %165 = vmatpush1.msra.mxu0 0.0
    %166 = vmatprep.subr.mxu0 0.0
    %167 = vmatpush1.msra.mxu0 0.0
    %168 = vmatprep.subr.mxu0 0.0
    %169 = vmatpush1.msra.mxu0 0.0
    %170 = vmatprep.subr.mxu0 0.0
    %171 = vmatpush1.msra.mxu0 0.0
    %172 = vmatprep.subr.mxu0 0.0
    %173 = vmatpush1.msra.mxu0 0.0
    %174 = vmatprep.subr.mxu0 0.0
    %175 = vmatpush1.msra.mxu0 0.0
    %176 = vmatprep.mubr.f32.mxu0 0.0
    %177 = vmatmul.mubr.f32.gmra.mrb[0].mxu0 %v107
    %v178 = vpop.f32.mrb[0].mxu0
    %v179 = vadd.f32 0.0, %v178
    %v180 = vpop.f32.mrb[0].mxu0
    %181 = vmatprep.mubr.f32.mxu0 0.0
    %182 = vmatmul.mubr.f32.gmra.mrb[0].mxu0 %v110
    %v183 = vpop.f32.mrb[0].mxu0
    %v184 = vadd.f32 0.0, %v183
    %v185 = vpop.f32.mrb[0].mxu0
    %186 = vdwg.mxu0
    %v187 = vld [vmem:[#allocation9] sm:$0xff]
    %v188 = vld [vmem:[#allocation9 + $0x8] sm:$0xff]
    %v189 = vld [vmem:[#allocation9 + $0x10] sm:$0xff]
    %v190 = vld [vmem:[#allocation9 + $0x18] sm:$0xff]
    %191 = vmatprep.subr.mxu0 0.0
    %192 = vmatpush1.msra.mxu0 %v187
    %193 = vmatprep.subr.mxu0 0.0
    %194 = vmatpush1.msra.mxu0 %v188
    %195 = vmatprep.subr.mxu0 0.0
    %196 = vmatpush1.msra.mxu0 %v189
    %197 = vmatprep.subr.mxu0 0.0
    %198 = vmatpush1.msra.mxu0 %v190
    %199 = vmatprep.subr.mxu0 0.0
    %200 = vmatpush1.msra.mxu0 0.0
    %201 = vmatprep.subr.mxu0 0.0
    %202 = vmatpush1.msra.mxu0 0.0
    %203 = vmatprep.subr.mxu0 0.0
    %204 = vmatpush1.msra.mxu0 0.0
    %205 = vmatprep.subr.mxu0 0.0
    %206 = vmatpush1.msra.mxu0 0.0
    %207 = vmatprep.subr.mxu0 0.0
    %208 = vmatpush1.msra.mxu0 0.0
    %209 = vmatprep.subr.mxu0 0.0
    %210 = vmatpush1.msra.mxu0 0.0
    %211 = vmatprep.subr.mxu0 0.0
    %212 = vmatpush1.msra.mxu0 0.0
    %213 = vmatprep.subr.mxu0 0.0
    %214 = vmatpush1.msra.mxu0 0.0
    %215 = vmatprep.subr.mxu0 0.0
    %216 = vmatpush1.msra.mxu0 0.0
    %217 = vmatprep.subr.mxu0 0.0
    %218 = vmatpush1.msra.mxu0 0.0
    %219 = vmatprep.subr.mxu0 0.0
    %220 = vmatpush1.msra.mxu0 0.0
    %221 = vmatprep.subr.mxu0 0.0
    %222 = vmatpush1.msra.mxu0 0.0
    %223 = vmatprep.subr.mxu0 0.0
    %224 = vmatpush1.msra.mxu0 0.0
    %225 = vmatprep.subr.mxu0 0.0
    %226 = vmatpush1.msra.mxu0 0.0
    %227 = vmatprep.subr.mxu0 0.0
    %228 = vmatpush1.msra.mxu0 0.0
    %229 = vmatprep.subr.mxu0 0.0
    %230 = vmatpush1.msra.mxu0 0.0
    %231 = vmatprep.subr.mxu0 0.0
    %232 = vmatpush1.msra.mxu0 0.0
    %233 = vmatprep.subr.mxu0 0.0
    %234 = vmatpush1.msra.mxu0 0.0
    %235 = vmatprep.subr.mxu0 0.0
    %236 = vmatpush1.msra.mxu0 0.0
    %237 = vmatprep.subr.mxu0 0.0
    %238 = vmatpush1.msra.mxu0 0.0
    %239 = vmatprep.subr.mxu0 0.0
    %240 = vmatpush1.msra.mxu0 0.0
    %241 = vmatprep.subr.mxu0 0.0
    %242 = vmatpush1.msra.mxu0 0.0
    %243 = vmatprep.subr.mxu0 0.0
    %244 = vmatpush1.msra.mxu0 0.0
    %245 = vmatprep.subr.mxu0 0.0
    %246 = vmatpush1.msra.mxu0 0.0
    %247 = vmatprep.subr.mxu0 0.0
    %248 = vmatpush1.msra.mxu0 0.0
    %249 = vmatprep.subr.mxu0 0.0
    %250 = vmatpush1.msra.mxu0 0.0
    %251 = vmatprep.subr.mxu0 0.0
    %252 = vmatpush1.msra.mxu0 0.0
    %253 = vmatprep.subr.mxu0 0.0
    %254 = vmatpush1.msra.mxu0 0.0
    %255 = vmatprep.mubr.f32.mxu0 0.0
    %256 = vmatmul.mubr.f32.gmra.mrb[0].mxu0 %v107
    %v257 = vpop.f32.mrb[0].mxu0
    %v258 = vadd.f32 0.0, %v257
    %v259 = vpop.f32.mrb[0].mxu0
    %260 = vmatprep.mubr.f32.mxu0 0.0
    %261 = vmatmul.mubr.f32.gmra.mrb[0].mxu0 %v110
    %v262 = vpop.f32.mrb[0].mxu0
    %v263 = vadd.f32 0.0, %v262
    %v264 = vpop.f32.mrb[0].mxu0
    %265 = vdwg.mxu0
    %v266 = vld [vmem:[#allocation10] sm:$0xff]
    %v267 = vld [vmem:[#allocation10 + $0x8] sm:$0xff]
    %v268 = vld [vmem:[#allocation10 + $0x10] sm:$0xff]
    %v269 = vld [vmem:[#allocation10 + $0x18] sm:$0xff]
    %270 = vmatprep.subr.mxu0 0.0
    %271 = vmatpush1.msra.mxu0 %v266
    %272 = vmatprep.subr.mxu0 0.0
    %273 = vmatpush1.msra.mxu0 %v267
    %274 = vmatprep.subr.mxu0 0.0
    %275 = vmatpush1.msra.mxu0 %v268
    %276 = vmatprep.subr.mxu0 0.0
    %277 = vmatpush1.msra.mxu0 %v269
    %278 = vmatprep.subr.mxu0 0.0
    %279 = vmatpush1.msra.mxu0 0.0
    %280 = vmatprep.subr.mxu0 0.0
    %281 = vmatpush1.msra.mxu0 0.0
    %282 = vmatprep.subr.mxu0 0.0
    %283 = vmatpush1.msra.mxu0 0.0
    %284 = vmatprep.subr.mxu0 0.0
    %285 = vmatpush1.msra.mxu0 0.0
    %286 = vmatprep.subr.mxu0 0.0
    %287 = vmatpush1.msra.mxu0 0.0
    %288 = vmatprep.subr.mxu0 0.0
    %289 = vmatpush1.msra.mxu0 0.0
    %290 = vmatprep.subr.mxu0 0.0
    %291 = vmatpush1.msra.mxu0 0.0
    %292 = vmatprep.subr.mxu0 0.0
    %293 = vmatpush1.msra.mxu0 0.0
    %294 = vmatprep.subr.mxu0 0.0
    %295 = vmatpush1.msra.mxu0 0.0
    %296 = vmatprep.subr.mxu0 0.0
    %297 = vmatpush1.msra.mxu0 0.0
    %298 = vmatprep.subr.mxu0 0.0
    %299 = vmatpush1.msra.mxu0 0.0
    %300 = vmatprep.subr.mxu0 0.0
    %301 = vmatpush1.msra.mxu0 0.0
    %302 = vmatprep.subr.mxu0 0.0
    %303 = vmatpush1.msra.mxu0 0.0
    %304 = vmatprep.subr.mxu0 0.0
    %305 = vmatpush1.msra.mxu0 0.0
    %306 = vmatprep.subr.mxu0 0.0
    %307 = vmatpush1.msra.mxu0 0.0
    %308 = vmatprep.subr.mxu0 0.0
    %309 = vmatpush1.msra.mxu0 0.0
    %310 = vmatprep.subr.mxu0 0.0
    %311 = vmatpush1.msra.mxu0 0.0
    %312 = vmatprep.subr.mxu0 0.0
    %313 = vmatpush1.msra.mxu0 0.0
    %314 = vmatprep.subr.mxu0 0.0
    %315 = vmatpush1.msra.mxu0 0.0
    %316 = vmatprep.subr.mxu0 0.0
    %317 = vmatpush1.msra.mxu0 0.0
    %318 = vmatprep.subr.mxu0 0.0
    %319 = vmatpush1.msra.mxu0 0.0
    %320 = vmatprep.subr.mxu0 0.0
    %321 = vmatpush1.msra.mxu0 0.0
    %322 = vmatprep.subr.mxu0 0.0
    %323 = vmatpush1.msra.mxu0 0.0
    %324 = vmatprep.subr.mxu0 0.0
    %325 = vmatpush1.msra.mxu0 0.0
    %326 = vmatprep.subr.mxu0 0.0
    %327 = vmatpush1.msra.mxu0 0.0
    %328 = vmatprep.subr.mxu0 0.0
    %329 = vmatpush1.msra.mxu0 0.0
    %330 = vmatprep.subr.mxu0 0.0
    %331 = vmatpush1.msra.mxu0 0.0
    %332 = vmatprep.subr.mxu0 0.0
    %333 = vmatpush1.msra.mxu0 0.0
    %334 = vmatprep.mubr.f32.mxu0 0.0
    %335 = vmatmul.mubr.f32.gmra.mrb[0].mxu0 %v107
    %v336 = vpop.f32.mrb[0].mxu0
    %v337 = vadd.f32 0.0, %v336
    %v338 = vpop.f32.mrb[0].mxu0
    %339 = vmatprep.mubr.f32.mxu0 0.0
    %340 = vmatmul.mubr.f32.gmra.mrb[0].mxu0 %v110
    %v341 = vpop.f32.mrb[0].mxu0
    %v342 = vadd.f32 0.0, %v341
    %v343 = vpop.f32.mrb[0].mxu0
    %344 = vdwg.mxu0
    %v345 = vmul.f32 %v179, 0.35355338
    %v346 = vmul.f32 %v184, 0.35355338
    %v347 = vld [vmem:[#allocation12] sm:$0xff]
    %v348 = vld [vmem:[#allocation12 + $0x8] sm:$0xff]
    %v349 = vld [vmem:[#allocation12 + $0x10] sm:$0xff]
    %v350 = vld [vmem:[#allocation12 + $0x18] sm:$0xff]
    %v351 = vld [vmem:[%s6] sm:$0x1]
    %v352 = vlaneseq
    %v353 = vshrl.u32 %v352, 7
    %v354 = vlaneseq
    %v355 = vand.u32 %v354, 127
    %vm356 = vcmp.le.s32.totalorder %v355, %v353
    %vm357 = vcmp.eq.s32.totalorder %v353, %v355
    %s358 = smul.u32 0, 2
    %s359 = sld [smem:[#allocation3 + %s358]]
    %v360 = vstv %s359
    %vm361 = vcmp.lt.s32.totalorder %v353, %v360
    %vm362 = vcmp.lt.s32.totalorder %v355, %v360
    %vm363 = vmand %vm361, %vm362
    %vm364 = vmor %vm363, %vm357
    %vm365 = vmand %vm356, %vm364
    %vm366 = vcmask 64512
    %v368 = vsel %vm366, %v345, 0
    %v371 = vsel %vm366, %v258, 0
    %373 = vmatprep.subr.mxu0 0.0
    %374 = vmatpush1.xpose.msra.mxu0 %v371
    %375 = vmatprep.subr.mxu0 0.0
    %376 = vmatpush1.xpose.msra.mxu0 0.0
    %377 = vmatprep.subr.mxu0 0.0
    %378 = vmatpush1.xpose.msra.mxu0 0.0
    %379 = vmatprep.subr.mxu0 0.0
    %380 = vmatpush1.xpose.msra.mxu0 0.0
    %381 = vmatprep.subr.mxu0 0.0
    %382 = vmatpush1.xpose.msra.mxu0 0.0
    %383 = vmatprep.subr.mxu0 0.0
    %384 = vmatpush1.xpose.msra.mxu0 0.0
    %385 = vmatprep.subr.mxu0 0.0
    %386 = vmatpush1.xpose.msra.mxu0 0.0
    %387 = vmatprep.subr.mxu0 0.0
    %388 = vmatpush1.xpose.msra.mxu0 0.0
    %389 = vmatprep.subr.mxu0 0.0
    %390 = vmatpush1.xpose.msra.mxu0 0.0
    %391 = vmatprep.subr.mxu0 0.0
    %392 = vmatpush1.xpose.msra.mxu0 0.0
    %393 = vmatprep.subr.mxu0 0.0
    %394 = vmatpush1.xpose.msra.mxu0 0.0
    %395 = vmatprep.subr.mxu0 0.0
    %396 = vmatpush1.xpose.msra.mxu0 0.0
    %397 = vmatprep.subr.mxu0 0.0
    %398 = vmatpush1.xpose.msra.mxu0 0.0
    %399 = vmatprep.subr.mxu0 0.0
    %400 = vmatpush1.xpose.msra.mxu0 0.0
    %401 = vmatprep.subr.mxu0 0.0
    %402 = vmatpush1.xpose.msra.mxu0 0.0
    %403 = vmatprep.subr.mxu0 0.0
    %404 = vmatpush1.xpose.msra.mxu0 0.0
    %405 = vmatprep.subr.mxu0 0.0
    %406 = vmatpush1.xpose.msra.mxu0 0.0
    %407 = vmatprep.subr.mxu0 0.0
    %408 = vmatpush1.xpose.msra.mxu0 0.0
    %409 = vmatprep.subr.mxu0 0.0
    %410 = vmatpush1.xpose.msra.mxu0 0.0
    %411 = vmatprep.subr.mxu0 0.0
    %412 = vmatpush1.xpose.msra.mxu0 0.0
    %413 = vmatprep.subr.mxu0 0.0
    %414 = vmatpush1.xpose.msra.mxu0 0.0
    %415 = vmatprep.subr.mxu0 0.0
    %416 = vmatpush1.xpose.msra.mxu0 0.0
    %417 = vmatprep.subr.mxu0 0.0
    %418 = vmatpush1.xpose.msra.mxu0 0.0
    %419 = vmatprep.subr.mxu0 0.0
    %420 = vmatpush1.xpose.msra.mxu0 0.0
    %421 = vmatprep.subr.mxu0 0.0
    %422 = vmatpush1.xpose.msra.mxu0 0.0
    %423 = vmatprep.subr.mxu0 0.0
    %424 = vmatpush1.xpose.msra.mxu0 0.0
    %425 = vmatprep.subr.mxu0 0.0
    %426 = vmatpush1.xpose.msra.mxu0 0.0
    %427 = vmatprep.subr.mxu0 0.0
    %428 = vmatpush1.xpose.msra.mxu0 0.0
    %429 = vmatprep.subr.mxu0 0.0
    %430 = vmatpush1.xpose.msra.mxu0 0.0
    %431 = vmatprep.subr.mxu0 0.0
    %432 = vmatpush1.xpose.msra.mxu0 0.0
    %433 = vmatprep.subr.mxu0 0.0
    %434 = vmatpush1.xpose.msra.mxu0 0.0
    %435 = vmatprep.subr.mxu0 0.0
    %436 = vmatpush1.xpose.msra.mxu0 0.0
    %437 = vmatprep.mubr.f32.mxu0 0.0
    %438 = vmatmul.mubr.f32.gmra.mrb[0].mxu0 %v368
    %v439 = vpop.f32.mrb[0].mxu0
    %v440 = vadd.f32 0.0, %v439
    %v441 = vpop.f32.mrb[0].mxu0
    %442 = vdwg.mxu0
    %v443 = vsel %vm365, %v440, -1e+30
    %v444 = vsel %vm366, %v443, -inf
    %445 = vmax.xlane.f32.xlu0 %v444
    %v446 = vpop.xlane.xlu0 %445
    %v447 = vsub.f32 %v443, %v446
    %v448 = vmul.f32 %v447, 1.442695
    %v449 = vpow.pop %v448
    %v450 = vsel %vm366, %v449, 0.0
    %451 = vadd.xlane.f32.xlu0 %v450
    %v452 = vpop.xlane.xlu0 %451
    %v454 = vsel %vm366, %v449, 0
    %456 = vmatprep.subr.mxu0 0.0
    %457 = vmatpush1.msra.mxu0 %v337
    %458 = vmatprep.subr.mxu0 0.0
    %459 = vmatpush1.msra.mxu0 0.0
    %460 = vmatprep.subr.mxu0 0.0
    %461 = vmatpush1.msra.mxu0 0.0
    %462 = vmatprep.subr.mxu0 0.0
    %463 = vmatpush1.msra.mxu0 0.0
    %464 = vmatprep.subr.mxu0 0.0
    %465 = vmatpush1.msra.mxu0 0.0
    %466 = vmatprep.subr.mxu0 0.0
    %467 = vmatpush1.msra.mxu0 0.0
    %468 = vmatprep.subr.mxu0 0.0
    %469 = vmatpush1.msra.mxu0 0.0
    %470 = vmatprep.subr.mxu0 0.0
    %471 = vmatpush1.msra.mxu0 0.0
    %472 = vmatprep.subr.mxu0 0.0
    %473 = vmatpush1.msra.mxu0 0.0
    %474 = vmatprep.subr.mxu0 0.0
    %475 = vmatpush1.msra.mxu0 0.0
    %476 = vmatprep.subr.mxu0 0.0
    %477 = vmatpush1.msra.mxu0 0.0
    %478 = vmatprep.subr.mxu0 0.0
    %479 = vmatpush1.msra.mxu0 0.0
    %480 = vmatprep.subr.mxu0 0.0
    %481 = vmatpush1.msra.mxu0 0.0
    %482 = vmatprep.subr.mxu0 0.0
    %483 = vmatpush1.msra.mxu0 0.0
    %484 = vmatprep.subr.mxu0 0.0
    %485 = vmatpush1.msra.mxu0 0.0
    %486 = vmatprep.subr.mxu0 0.0
    %487 = vmatpush1.msra.mxu0 0.0
    %488 = vmatprep.subr.mxu0 0.0
    %489 = vmatpush1.msra.mxu0 0.0
    %490 = vmatprep.subr.mxu0 0.0
    %491 = vmatpush1.msra.mxu0 0.0
    %492 = vmatprep.subr.mxu0 0.0
    %493 = vmatpush1.msra.mxu0 0.0
    %494 = vmatprep.subr.mxu0 0.0
    %495 = vmatpush1.msra.mxu0 0.0
    %496 = vmatprep.subr.mxu0 0.0
    %497 = vmatpush1.msra.mxu0 0.0
    %498 = vmatprep.subr.mxu0 0.0
    %499 = vmatpush1.msra.mxu0 0.0
    %500 = vmatprep.subr.mxu0 0.0
    %501 = vmatpush1.msra.mxu0 0.0
    %502 = vmatprep.subr.mxu0 0.0
    %503 = vmatpush1.msra.mxu0 0.0
    %504 = vmatprep.subr.mxu0 0.0
    %505 = vmatpush1.msra.mxu0 0.0
    %506 = vmatprep.subr.mxu0 0.0
    %507 = vmatpush1.msra.mxu0 0.0
    %508 = vmatprep.subr.mxu0 0.0
    %509 = vmatpush1.msra.mxu0 0.0
    %510 = vmatprep.subr.mxu0 0.0
    %511 = vmatpush1.msra.mxu0 0.0
    %512 = vmatprep.subr.mxu0 0.0
    %513 = vmatpush1.msra.mxu0 0.0
    %514 = vmatprep.subr.mxu0 0.0
    %515 = vmatpush1.msra.mxu0 0.0
    %516 = vmatprep.subr.mxu0 0.0
    %517 = vmatpush1.msra.mxu0 0.0
    %518 = vmatprep.subr.mxu0 0.0
    %519 = vmatpush1.msra.mxu0 0.0
    %520 = vmatprep.mubr.f32.mxu0 0.0
    %521 = vmatmul.mubr.f32.gmra.mrb[0].mxu0 %v454
    %v522 = vpop.f32.mrb[0].mxu0
    %v523 = vadd.f32 0.0, %v522
    %v524 = vpop.f32.mrb[0].mxu0
    %525 = vdwg.mxu0
    %v526 = vrcp.pop %v452
    %v527 = vmul.f32 %v523, %v526
    %528 = vrot.lane.b32.xlu0 %v345, 120
    %v529 = vpop.permute.xlu0 %528
    %530 = vrot.lane.b32.xlu0 %v258, 120
    %v531 = vpop.permute.xlu0 %530
    %v532 = vsel %vm366, %v529, 0
    %v534 = vsel %vm366, %v531, 0
    %536 = vmatprep.subr.mxu0 0.0
    %537 = vmatpush1.xpose.msra.mxu0 %v534
    %538 = vmatprep.subr.mxu0 0.0
    %539 = vmatpush1.xpose.msra.mxu0 0.0
    %540 = vmatprep.subr.mxu0 0.0
    %541 = vmatpush1.xpose.msra.mxu0 0.0
    %542 = vmatprep.subr.mxu0 0.0
    %543 = vmatpush1.xpose.msra.mxu0 0.0
    %544 = vmatprep.subr.mxu0 0.0
    %545 = vmatpush1.xpose.msra.mxu0 0.0
    %546 = vmatprep.subr.mxu0 0.0
    %547 = vmatpush1.xpose.msra.mxu0 0.0
    %548 = vmatprep.subr.mxu0 0.0
    %549 = vmatpush1.xpose.msra.mxu0 0.0
    %550 = vmatprep.subr.mxu0 0.0
    %551 = vmatpush1.xpose.msra.mxu0 0.0
    %552 = vmatprep.subr.mxu0 0.0
    %553 = vmatpush1.xpose.msra.mxu0 0.0
    %554 = vmatprep.subr.mxu0 0.0
    %555 = vmatpush1.xpose.msra.mxu0 0.0
    %556 = vmatprep.subr.mxu0 0.0
    %557 = vmatpush1.xpose.msra.mxu0 0.0
    %558 = vmatprep.subr.mxu0 0.0
    %559 = vmatpush1.xpose.msra.mxu0 0.0
    %560 = vmatprep.subr.mxu0 0.0
    %561 = vmatpush1.xpose.msra.mxu0 0.0
    %562 = vmatprep.subr.mxu0 0.0
    %563 = vmatpush1.xpose.msra.mxu0 0.0
    %564 = vmatprep.subr.mxu0 0.0
    %565 = vmatpush1.xpose.msra.mxu0 0.0
    %566 = vmatprep.subr.mxu0 0.0
    %567 = vmatpush1.xpose.msra.mxu0 0.0
    %568 = vmatprep.subr.mxu0 0.0
    %569 = vmatpush1.xpose.msra.mxu0 0.0
    %570 = vmatprep.subr.mxu0 0.0
    %571 = vmatpush1.xpose.msra.mxu0 0.0
    %572 = vmatprep.subr.mxu0 0.0
    %573 = vmatpush1.xpose.msra.mxu0 0.0
    %574 = vmatprep.subr.mxu0 0.0
    %575 = vmatpush1.xpose.msra.mxu0 0.0
    %576 = vmatprep.subr.mxu0 0.0
    %577 = vmatpush1.xpose.msra.mxu0 0.0
    %578 = vmatprep.subr.mxu0 0.0
    %579 = vmatpush1.xpose.msra.mxu0 0.0
    %580 = vmatprep.subr.mxu0 0.0
    %581 = vmatpush1.xpose.msra.mxu0 0.0
    %582 = vmatprep.subr.mxu0 0.0
    %583 = vmatpush1.xpose.msra.mxu0 0.0
    %584 = vmatprep.subr.mxu0 0.0
    %585 = vmatpush1.xpose.msra.mxu0 0.0
    %586 = vmatprep.subr.mxu0 0.0
    %587 = vmatpush1.xpose.msra.mxu0 0.0
    %588 = vmatprep.subr.mxu0 0.0
    %589 = vmatpush1.xpose.msra.mxu0 0.0
    %590 = vmatprep.subr.mxu0 0.0
    %591 = vmatpush1.xpose.msra.mxu0 0.0
    %592 = vmatprep.subr.mxu0 0.0
    %593 = vmatpush1.xpose.msra.mxu0 0.0
    %594 = vmatprep.subr.mxu0 0.0
    %595 = vmatpush1.xpose.msra.mxu0 0.0
    %596 = vmatprep.subr.mxu0 0.0
    %597 = vmatpush1.xpose.msra.mxu0 0.0
    %598 = vmatprep.subr.mxu0 0.0
    %599 = vmatpush1.xpose.msra.mxu0 0.0
    %600 = vmatprep.mubr.f32.mxu0 0.0
    %601 = vmatmul.mubr.f32.gmra.mrb[0].mxu0 %v532
    %v602 = vpop.f32.mrb[0].mxu0
    %v603 = vadd.f32 0.0, %v602
    %v604 = vpop.f32.mrb[0].mxu0
    %605 = vdwg.mxu0
    %v606 = vsel %vm365, %v603, -1e+30
    %v607 = vsel %vm366, %v606, -inf
    %608 = vmax.xlane.f32.xlu0 %v607
    %v609 = vpop.xlane.xlu0 %608
    %v610 = vsub.f32 %v606, %v609
    %v611 = vmul.f32 %v610, 1.442695
    %v612 = vpow.pop %v611
    %v613 = vsel %vm366, %v612, 0.0
    %614 = vadd.xlane.f32.xlu0 %v613
    %v615 = vpop.xlane.xlu0 %614
    %617 = vrot.lane.b32.xlu0 %v337, 120
    %v618 = vpop.permute.xlu0 %617
    %v621 = vsel %vm366, %v612, 0
    %623 = vmatprep.subr.mxu0 0.0
    %624 = vmatpush1.msra.mxu0 %v618
    %625 = vmatprep.subr.mxu0 0.0
    %626 = vmatpush1.msra.mxu0 0.0
    %627 = vmatprep.subr.mxu0 0.0
    %628 = vmatpush1.msra.mxu0 0.0
    %629 = vmatprep.subr.mxu0 0.0
    %630 = vmatpush1.msra.mxu0 0.0
    %631 = vmatprep.subr.mxu0 0.0
    %632 = vmatpush1.msra.mxu0 0.0
    %633 = vmatprep.subr.mxu0 0.0
    %634 = vmatpush1.msra.mxu0 0.0
    %635 = vmatprep.subr.mxu0 0.0
    %636 = vmatpush1.msra.mxu0 0.0
    %637 = vmatprep.subr.mxu0 0.0
    %638 = vmatpush1.msra.mxu0 0.0
    %639 = vmatprep.subr.mxu0 0.0
    %640 = vmatpush1.msra.mxu0 0.0
    %641 = vmatprep.subr.mxu0 0.0
    %642 = vmatpush1.msra.mxu0 0.0
    %643 = vmatprep.subr.mxu0 0.0
    %644 = vmatpush1.msra.mxu0 0.0
    %645 = vmatprep.subr.mxu0 0.0
    %646 = vmatpush1.msra.mxu0 0.0
    %647 = vmatprep.subr.mxu0 0.0
    %648 = vmatpush1.msra.mxu0 0.0
    %649 = vmatprep.subr.mxu0 0.0
    %650 = vmatpush1.msra.mxu0 0.0
    %651 = vmatprep.subr.mxu0 0.0
    %652 = vmatpush1.msra.mxu0 0.0
    %653 = vmatprep.subr.mxu0 0.0
    %654 = vmatpush1.msra.mxu0 0.0
    %655 = vmatprep.subr.mxu0 0.0
    %656 = vmatpush1.msra.mxu0 0.0
    %657 = vmatprep.subr.mxu0 0.0
    %658 = vmatpush1.msra.mxu0 0.0
    %659 = vmatprep.subr.mxu0 0.0
    %660 = vmatpush1.msra.mxu0 0.0
    %661 = vmatprep.subr.mxu0 0.0
    %662 = vmatpush1.msra.mxu0 0.0
    %663 = vmatprep.subr.mxu0 0.0
    %664 = vmatpush1.msra.mxu0 0.0
    %665 = vmatprep.subr.mxu0 0.0
    %666 = vmatpush1.msra.mxu0 0.0
    %667 = vmatprep.subr.mxu0 0.0
    %668 = vmatpush1.msra.mxu0 0.0
    %669 = vmatprep.subr.mxu0 0.0
    %670 = vmatpush1.msra.mxu0 0.0
    %671 = vmatprep.subr.mxu0 0.0
    %672 = vmatpush1.msra.mxu0 0.0
    %673 = vmatprep.subr.mxu0 0.0
    %674 = vmatpush1.msra.mxu0 0.0
    %675 = vmatprep.subr.mxu0 0.0
    %676 = vmatpush1.msra.mxu0 0.0
    %677 = vmatprep.subr.mxu0 0.0
    %678 = vmatpush1.msra.mxu0 0.0
    %679 = vmatprep.subr.mxu0 0.0
    %680 = vmatpush1.msra.mxu0 0.0
    %681 = vmatprep.subr.mxu0 0.0
    %682 = vmatpush1.msra.mxu0 0.0
    %683 = vmatprep.subr.mxu0 0.0
    %684 = vmatpush1.msra.mxu0 0.0
    %685 = vmatprep.subr.mxu0 0.0
    %686 = vmatpush1.msra.mxu0 0.0
    %687 = vmatprep.mubr.f32.mxu0 0.0
    %688 = vmatmul.mubr.f32.gmra.mrb[0].mxu0 %v621
    %v689 = vpop.f32.mrb[0].mxu0
    %v690 = vadd.f32 0.0, %v689
    %v691 = vpop.f32.mrb[0].mxu0
    %692 = vdwg.mxu0
    %v693 = vrcp.pop %v615
    %v694 = vmul.f32 %v690, %v693
    %v696 = vsel %vm366, %v694, 0
    %698 = vmatprep.subr.mxu0 0.0
    %699 = vmatpush1.msra.mxu0 %v348
    %700 = vmatprep.subr.mxu0 0.0
    %701 = vmatpush1.msra.mxu0 0.0
    %702 = vmatprep.subr.mxu0 0.0
    %703 = vmatpush1.msra.mxu0 0.0
    %704 = vmatprep.subr.mxu0 0.0
    %705 = vmatpush1.msra.mxu0 0.0
    %706 = vmatprep.subr.mxu0 0.0
    %707 = vmatpush1.msra.mxu0 0.0
    %708 = vmatprep.subr.mxu0 0.0
    %709 = vmatpush1.msra.mxu0 0.0
    %710 = vmatprep.subr.mxu0 0.0
    %711 = vmatpush1.msra.mxu0 0.0
    %712 = vmatprep.subr.mxu0 0.0
    %713 = vmatpush1.msra.mxu0 0.0
    %714 = vmatprep.subr.mxu0 0.0
    %715 = vmatpush1.msra.mxu0 0.0
    %716 = vmatprep.subr.mxu0 0.0
    %717 = vmatpush1.msra.mxu0 0.0
    %718 = vmatprep.subr.mxu0 0.0
    %719 = vmatpush1.msra.mxu0 0.0
    %720 = vmatprep.subr.mxu0 0.0
    %721 = vmatpush1.msra.mxu0 0.0
    %722 = vmatprep.subr.mxu0 0.0
    %723 = vmatpush1.msra.mxu0 0.0
    %724 = vmatprep.subr.mxu0 0.0
    %725 = vmatpush1.msra.mxu0 0.0
    %726 = vmatprep.subr.mxu0 0.0
    %727 = vmatpush1.msra.mxu0 0.0
    %728 = vmatprep.subr.mxu0 0.0
    %729 = vmatpush1.msra.mxu0 0.0
    %730 = vmatprep.subr.mxu0 0.0
    %731 = vmatpush1.msra.mxu0 0.0
    %732 = vmatprep.subr.mxu0 0.0
    %733 = vmatpush1.msra.mxu0 0.0
    %734 = vmatprep.subr.mxu0 0.0
    %735 = vmatpush1.msra.mxu0 0.0
    %736 = vmatprep.subr.mxu0 0.0
    %737 = vmatpush1.msra.mxu0 0.0
    %738 = vmatprep.subr.mxu0 0.0
    %739 = vmatpush1.msra.mxu0 0.0
    %740 = vmatprep.subr.mxu0 0.0
    %741 = vmatpush1.msra.mxu0 0.0
    %742 = vmatprep.subr.mxu0 0.0
    %743 = vmatpush1.msra.mxu0 0.0
    %744 = vmatprep.subr.mxu0 0.0
    %745 = vmatpush1.msra.mxu0 0.0
    %746 = vmatprep.subr.mxu0 0.0
    %747 = vmatpush1.msra.mxu0 0.0
    %748 = vmatprep.subr.mxu0 0.0
    %749 = vmatpush1.msra.mxu0 0.0
    %750 = vmatprep.subr.mxu0 0.0
    %751 = vmatpush1.msra.mxu0 0.0
    %752 = vmatprep.subr.mxu0 0.0
    %753 = vmatpush1.msra.mxu0 0.0
    %754 = vmatprep.subr.mxu0 0.0
    %755 = vmatpush1.msra.mxu0 0.0
    %756 = vmatprep.subr.mxu0 0.0
    %757 = vmatpush1.msra.mxu0 0.0
    %758 = vmatprep.subr.mxu0 0.0
    %759 = vmatpush1.msra.mxu0 0.0
    %760 = vmatprep.subr.mxu0 0.0
    %761 = vmatpush1.msra.mxu0 0.0
    %762 = vmatprep.mubr.f32.mxu0 0.0
    %763 = vmatmul.mubr.f32.gmra.mrb[0].mxu0 %v696
    %v764 = vpop.f32.mrb[0].mxu0
    %v765 = vadd.f32 0.0, %v764
    %v766 = vpop.f32.mrb[0].mxu0
    %767 = vdwg.mxu0
    %v769 = vsel %vm366, %v527, 0
    %771 = vmatprep.subr.mxu0 0.0
    %772 = vmatpush1.msra.mxu0 %v347
    %773 = vmatprep.subr.mxu0 0.0
    %774 = vmatpush1.msra.mxu0 0.0
    %775 = vmatprep.subr.mxu0 0.0
    %776 = vmatpush1.msra.mxu0 0.0
    %777 = vmatprep.subr.mxu0 0.0
    %778 = vmatpush1.msra.mxu0 0.0
    %779 = vmatprep.subr.mxu0 0.0
    %780 = vmatpush1.msra.mxu0 0.0
    %781 = vmatprep.subr.mxu0 0.0
    %782 = vmatpush1.msra.mxu0 0.0
    %783 = vmatprep.subr.mxu0 0.0
    %784 = vmatpush1.msra.mxu0 0.0
    %785 = vmatprep.subr.mxu0 0.0
    %786 = vmatpush1.msra.mxu0 0.0
    %787 = vmatprep.subr.mxu0 0.0
    %788 = vmatpush1.msra.mxu0 0.0
    %789 = vmatprep.subr.mxu0 0.0
    %790 = vmatpush1.msra.mxu0 0.0
    %791 = vmatprep.subr.mxu0 0.0
    %792 = vmatpush1.msra.mxu0 0.0
    %793 = vmatprep.subr.mxu0 0.0
    %794 = vmatpush1.msra.mxu0 0.0
    %795 = vmatprep.subr.mxu0 0.0
    %796 = vmatpush1.msra.mxu0 0.0
    %797 = vmatprep.subr.mxu0 0.0
    %798 = vmatpush1.msra.mxu0 0.0
    %799 = vmatprep.subr.mxu0 0.0
    %800 = vmatpush1.msra.mxu0 0.0
    %801 = vmatprep.subr.mxu0 0.0
    %802 = vmatpush1.msra.mxu0 0.0
    %803 = vmatprep.subr.mxu0 0.0
    %804 = vmatpush1.msra.mxu0 0.0
    %805 = vmatprep.subr.mxu0 0.0
    %806 = vmatpush1.msra.mxu0 0.0
    %807 = vmatprep.subr.mxu0 0.0
    %808 = vmatpush1.msra.mxu0 0.0
    %809 = vmatprep.subr.mxu0 0.0
    %810 = vmatpush1.msra.mxu0 0.0
    %811 = vmatprep.subr.mxu0 0.0
    %812 = vmatpush1.msra.mxu0 0.0
    %813 = vmatprep.subr.mxu0 0.0
    %814 = vmatpush1.msra.mxu0 0.0
    %815 = vmatprep.subr.mxu0 0.0
    %816 = vmatpush1.msra.mxu0 0.0
    %817 = vmatprep.subr.mxu0 0.0
    %818 = vmatpush1.msra.mxu0 0.0
    %819 = vmatprep.subr.mxu0 0.0
    %820 = vmatpush1.msra.mxu0 0.0
    %821 = vmatprep.subr.mxu0 0.0
    %822 = vmatpush1.msra.mxu0 0.0
    %823 = vmatprep.subr.mxu0 0.0
    %824 = vmatpush1.msra.mxu0 0.0
    %825 = vmatprep.subr.mxu0 0.0
    %826 = vmatpush1.msra.mxu0 0.0
    %827 = vmatprep.subr.mxu0 0.0
    %828 = vmatpush1.msra.mxu0 0.0
    %829 = vmatprep.subr.mxu0 0.0
    %830 = vmatpush1.msra.mxu0 0.0
    %831 = vmatprep.subr.mxu0 0.0
    %832 = vmatpush1.msra.mxu0 0.0
    %833 = vmatprep.subr.mxu0 0.0
    %834 = vmatpush1.msra.mxu0 0.0
    %835 = vmatprep.mubr.f32.mxu0 0.0
    %836 = vmatmul.mubr.f32.gmra.mrb[0].mxu0 %v769
    %v837 = vpop.f32.mrb[0].mxu0
    %v838 = vadd.f32 %v765, %v837
    %v839 = vpop.f32.mrb[0].mxu0
    %840 = vdwg.mxu0
    %841 = vrot.lane.b32.xlu0 %v345, 112
    %v842 = vpop.permute.xlu0 %841
    %843 = vrot.lane.b32.xlu0 %v258, 112
    %v844 = vpop.permute.xlu0 %843
    %v845 = vsel %vm366, %v842, 0
    %v847 = vsel %vm366, %v844, 0
    %849 = vmatprep.subr.mxu0 0.0
    %850 = vmatpush1.xpose.msra.mxu0 %v847
    %851 = vmatprep.subr.mxu0 0.0
    %852 = vmatpush1.xpose.msra.mxu0 0.0
    %853 = vmatprep.subr.mxu0 0.0
    %854 = vmatpush1.xpose.msra.mxu0 0.0
    %855 = vmatprep.subr.mxu0 0.0
    %856 = vmatpush1.xpose.msra.mxu0 0.0
    %857 = vmatprep.subr.mxu0 0.0
    %858 = vmatpush1.xpose.msra.mxu0 0.0
    %859 = vmatprep.subr.mxu0 0.0
    %860 = vmatpush1.xpose.msra.mxu0 0.0
    %861 = vmatprep.subr.mxu0 0.0
    %862 = vmatpush1.xpose.msra.mxu0 0.0
    %863 = vmatprep.subr.mxu0 0.0
    %864 = vmatpush1.xpose.msra.mxu0 0.0
    %865 = vmatprep.subr.mxu0 0.0
    %866 = vmatpush1.xpose.msra.mxu0 0.0
    %867 = vmatprep.subr.mxu0 0.0
    %868 = vmatpush1.xpose.msra.mxu0 0.0
    %869 = vmatprep.subr.mxu0 0.0
    %870 = vmatpush1.xpose.msra.mxu0 0.0
    %871 = vmatprep.subr.mxu0 0.0
    %872 = vmatpush1.xpose.msra.mxu0 0.0
    %873 = vmatprep.subr.mxu0 0.0
    %874 = vmatpush1.xpose.msra.mxu0 0.0
    %875 = vmatprep.subr.mxu0 0.0
    %876 = vmatpush1.xpose.msra.mxu0 0.0
    %877 = vmatprep.subr.mxu0 0.0
    %878 = vmatpush1.xpose.msra.mxu0 0.0
    %879 = vmatprep.subr.mxu0 0.0
    %880 = vmatpush1.xpose.msra.mxu0 0.0
    %881 = vmatprep.subr.mxu0 0.0
    %882 = vmatpush1.xpose.msra.mxu0 0.0
    %883 = vmatprep.subr.mxu0 0.0
    %884 = vmatpush1.xpose.msra.mxu0 0.0
    %885 = vmatprep.subr.mxu0 0.0
    %886 = vmatpush1.xpose.msra.mxu0 0.0
    %887 = vmatprep.subr.mxu0 0.0
    %888 = vmatpush1.xpose.msra.mxu0 0.0
    %889 = vmatprep.subr.mxu0 0.0
    %890 = vmatpush1.xpose.msra.mxu0 0.0
    %891 = vmatprep.subr.mxu0 0.0
    %892 = vmatpush1.xpose.msra.mxu0 0.0
    %893 = vmatprep.subr.mxu0 0.0
    %894 = vmatpush1.xpose.msra.mxu0 0.0
    %895 = vmatprep.subr.mxu0 0.0
    %896 = vmatpush1.xpose.msra.mxu0 0.0
    %897 = vmatprep.subr.mxu0 0.0
    %898 = vmatpush1.xpose.msra.mxu0 0.0
    %899 = vmatprep.subr.mxu0 0.0
    %900 = vmatpush1.xpose.msra.mxu0 0.0
    %901 = vmatprep.subr.mxu0 0.0
    %902 = vmatpush1.xpose.msra.mxu0 0.0
    %903 = vmatprep.subr.mxu0 0.0
    %904 = vmatpush1.xpose.msra.mxu0 0.0
    %905 = vmatprep.subr.mxu0 0.0
    %906 = vmatpush1.xpose.msra.mxu0 0.0
    %907 = vmatprep.subr.mxu0 0.0
    %908 = vmatpush1.xpose.msra.mxu0 0.0
    %909 = vmatprep.subr.mxu0 0.0
    %910 = vmatpush1.xpose.msra.mxu0 0.0
    %911 = vmatprep.subr.mxu0 0.0
    %912 = vmatpush1.xpose.msra.mxu0 0.0
    %913 = vmatprep.mubr.f32.mxu0 0.0
    %914 = vmatmul.mubr.f32.gmra.mrb[0].mxu0 %v845
    %v915 = vpop.f32.mrb[0].mxu0
    %v916 = vadd.f32 0.0, %v915
    %v917 = vpop.f32.mrb[0].mxu0
    %918 = vdwg.mxu0
    %v919 = vsel %vm365, %v916, -1e+30
    %v920 = vsel %vm366, %v919, -inf
    %921 = vmax.xlane.f32.xlu0 %v920
    %v922 = vpop.xlane.xlu0 %921
    %v923 = vsub.f32 %v919, %v922
    %v924 = vmul.f32 %v923, 1.442695
    %v925 = vpow.pop %v924
    %v926 = vsel %vm366, %v925, 0.0
    %927 = vadd.xlane.f32.xlu0 %v926
    %v928 = vpop.xlane.xlu0 %927
    %929 = vrot.lane.b32.xlu0 %v337, 112
    %v930 = vpop.permute.xlu0 %929
    %v933 = vsel %vm366, %v925, 0
    %935 = vmatprep.subr.mxu0 0.0
    %936 = vmatpush1.msra.mxu0 %v930
    %937 = vmatprep.subr.mxu0 0.0
    %938 = vmatpush1.msra.mxu0 0.0
    %939 = vmatprep.subr.mxu0 0.0
    %940 = vmatpush1.msra.mxu0 0.0
    %941 = vmatprep.subr.mxu0 0.0
    %942 = vmatpush1.msra.mxu0 0.0
    %943 = vmatprep.subr.mxu0 0.0
    %944 = vmatpush1.msra.mxu0 0.0
    %945 = vmatprep.subr.mxu0 0.0
    %946 = vmatpush1.msra.mxu0 0.0
    %947 = vmatprep.subr.mxu0 0.0
    %948 = vmatpush1.msra.mxu0 0.0
    %949 = vmatprep.subr.mxu0 0.0
    %950 = vmatpush1.msra.mxu0 0.0
    %951 = vmatprep.subr.mxu0 0.0
    %952 = vmatpush1.msra.mxu0 0.0
    %953 = vmatprep.subr.mxu0 0.0
    %954 = vmatpush1.msra.mxu0 0.0
    %955 = vmatprep.subr.mxu0 0.0
    %956 = vmatpush1.msra.mxu0 0.0
    %957 = vmatprep.subr.mxu0 0.0
    %958 = vmatpush1.msra.mxu0 0.0
    %959 = vmatprep.subr.mxu0 0.0
    %960 = vmatpush1.msra.mxu0 0.0
    %961 = vmatprep.subr.mxu0 0.0
    %962 = vmatpush1.msra.mxu0 0.0
    %963 = vmatprep.subr.mxu0 0.0
    %964 = vmatpush1.msra.mxu0 0.0
    %965 = vmatprep.subr.mxu0 0.0
    %966 = vmatpush1.msra.mxu0 0.0
    %967 = vmatprep.subr.mxu0 0.0
    %968 = vmatpush1.msra.mxu0 0.0
    %969 = vmatprep.subr.mxu0 0.0
    %970 = vmatpush1.msra.mxu0 0.0
    %971 = vmatprep.subr.mxu0 0.0
    %972 = vmatpush1.msra.mxu0 0.0
    %973 = vmatprep.subr.mxu0 0.0
    %974 = vmatpush1.msra.mxu0 0.0
    %975 = vmatprep.subr.mxu0 0.0
    %976 = vmatpush1.msra.mxu0 0.0
    %977 = vmatprep.subr.mxu0 0.0
    %978 = vmatpush1.msra.mxu0 0.0
    %979 = vmatprep.subr.mxu0 0.0
    %980 = vmatpush1.msra.mxu0 0.0
    %981 = vmatprep.subr.mxu0 0.0
    %982 = vmatpush1.msra.mxu0 0.0
    %983 = vmatprep.subr.mxu0 0.0
    %984 = vmatpush1.msra.mxu0 0.0
    %985 = vmatprep.subr.mxu0 0.0
    %986 = vmatpush1.msra.mxu0 0.0
    %987 = vmatprep.subr.mxu0 0.0
    %988 = vmatpush1.msra.mxu0 0.0
    %989 = vmatprep.subr.mxu0 0.0
    %990 = vmatpush1.msra.mxu0 0.0
    %991 = vmatprep.subr.mxu0 0.0
    %992 = vmatpush1.msra.mxu0 0.0
    %993 = vmatprep.subr.mxu0 0.0
    %994 = vmatpush1.msra.mxu0 0.0
    %995 = vmatprep.subr.mxu0 0.0
    %996 = vmatpush1.msra.mxu0 0.0
    %997 = vmatprep.subr.mxu0 0.0
    %998 = vmatpush1.msra.mxu0 0.0
    %999 = vmatprep.mubr.f32.mxu0 0.0
    %1000 = vmatmul.mubr.f32.gmra.mrb[0].mxu0 %v933
    %v1001 = vpop.f32.mrb[0].mxu0
    %v1002 = vadd.f32 0.0, %v1001
    %v1003 = vpop.f32.mrb[0].mxu0
    %1004 = vdwg.mxu0
    %v1005 = vrcp.pop %v928
    %v1006 = vmul.f32 %v1002, %v1005
    %v1008 = vsel %vm366, %v1006, 0
    %1010 = vmatprep.subr.mxu0 0.0
    %1011 = vmatpush1.msra.mxu0 %v349
    %1012 = vmatprep.subr.mxu0 0.0
    %1013 = vmatpush1.msra.mxu0 0.0
    %1014 = vmatprep.subr.mxu0 0.0
    %1015 = vmatpush1.msra.mxu0 0.0
    %1016 = vmatprep.subr.mxu0 0.0
    %1017 = vmatpush1.msra.mxu0 0.0
    %1018 = vmatprep.subr.mxu0 0.0
    %1019 = vmatpush1.msra.mxu0 0.0
    %1020 = vmatprep.subr.mxu0 0.0
    %1021 = vmatpush1.msra.mxu0 0.0
    %1022 = vmatprep.subr.mxu0 0.0
    %1023 = vmatpush1.msra.mxu0 0.0
    %1024 = vmatprep.subr.mxu0 0.0
    %1025 = vmatpush1.msra.mxu0 0.0
    %1026 = vmatprep.subr.mxu0 0.0
    %1027 = vmatpush1.msra.mxu0 0.0
    %1028 = vmatprep.subr.mxu0 0.0
    %1029 = vmatpush1.msra.mxu0 0.0
    %1030 = vmatprep.subr.mxu0 0.0
    %1031 = vmatpush1.msra.mxu0 0.0
    %1032 = vmatprep.subr.mxu0 0.0
    %1033 = vmatpush1.msra.mxu0 0.0
    %1034 = vmatprep.subr.mxu0 0.0
    %1035 = vmatpush1.msra.mxu0 0.0
    %1036 = vmatprep.subr.mxu0 0.0
    %1037 = vmatpush1.msra.mxu0 0.0
    %1038 = vmatprep.subr.mxu0 0.0
    %1039 = vmatpush1.msra.mxu0 0.0
    %1040 = vmatprep.subr.mxu0 0.0
    %1041 = vmatpush1.msra.mxu0 0.0
    %1042 = vmatprep.subr.mxu0 0.0
    %1043 = vmatpush1.msra.mxu0 0.0
    %1044 = vmatprep.subr.mxu0 0.0
    %1045 = vmatpush1.msra.mxu0 0.0
    %1046 = vmatprep.subr.mxu0 0.0
    %1047 = vmatpush1.msra.mxu0 0.0
    %1048 = vmatprep.subr.mxu0 0.0
    %1049 = vmatpush1.msra.mxu0 0.0
    %1050 = vmatprep.subr.mxu0 0.0
    %1051 = vmatpush1.msra.mxu0 0.0
    %1052 = vmatprep.subr.mxu0 0.0
    %1053 = vmatpush1.msra.mxu0 0.0
    %1054 = vmatprep.subr.mxu0 0.0
    %1055 = vmatpush1.msra.mxu0 0.0
    %1056 = vmatprep.subr.mxu0 0.0
    %1057 = vmatpush1.msra.mxu0 0.0
    %1058 = vmatprep.subr.mxu0 0.0
    %1059 = vmatpush1.msra.mxu0 0.0
    %1060 = vmatprep.subr.mxu0 0.0
    %1061 = vmatpush1.msra.mxu0 0.0
    %1062 = vmatprep.subr.mxu0 0.0
    %1063 = vmatpush1.msra.mxu0 0.0
    %1064 = vmatprep.subr.mxu0 0.0
    %1065 = vmatpush1.msra.mxu0 0.0
    %1066 = vmatprep.subr.mxu0 0.0
    %1067 = vmatpush1.msra.mxu0 0.0
    %1068 = vmatprep.subr.mxu0 0.0
    %1069 = vmatpush1.msra.mxu0 0.0
    %1070 = vmatprep.subr.mxu0 0.0
    %1071 = vmatpush1.msra.mxu0 0.0
    %1072 = vmatprep.subr.mxu0 0.0
    %1073 = vmatpush1.msra.mxu0 0.0
    %1074 = vmatprep.mubr.f32.mxu0 0.0
    %1075 = vmatmul.mubr.f32.gmra.mrb[0].mxu0 %v1008
    %v1076 = vpop.f32.mrb[0].mxu0
    %v1077 = vadd.f32 0.0, %v1076
    %v1078 = vpop.f32.mrb[0].mxu0
    %1079 = vdwg.mxu0
    %v1080 = vadd.f32 %v838, %v1077
    %1081 = vrot.lane.b32.xlu0 %v345, 104
    %v1082 = vpop.permute.xlu0 %1081
    %1083 = vrot.lane.b32.xlu0 %v258, 104
    %v1084 = vpop.permute.xlu0 %1083
    %v1085 = vsel %vm366, %v1082, 0
    %v1087 = vsel %vm366, %v1084, 0
    %1089 = vmatprep.subr.mxu0 0.0
    %1090 = vmatpush1.xpose.msra.mxu0 %v1087
    %1091 = vmatprep.subr.mxu0 0.0
    %1092 = vmatpush1.xpose.msra.mxu0 0.0
    %1093 = vmatprep.subr.mxu0 0.0
    %1094 = vmatpush1.xpose.msra.mxu0 0.0
    %1095 = vmatprep.subr.mxu0 0.0
    %1096 = vmatpush1.xpose.msra.mxu0 0.0
    %1097 = vmatprep.subr.mxu0 0.0
    %1098 = vmatpush1.xpose.msra.mxu0 0.0
    %1099 = vmatprep.subr.mxu0 0.0
    %1100 = vmatpush1.xpose.msra.mxu0 0.0
    %1101 = vmatprep.subr.mxu0 0.0
    %1102 = vmatpush1.xpose.msra.mxu0 0.0
    %1103 = vmatprep.subr.mxu0 0.0
    %1104 = vmatpush1.xpose.msra.mxu0 0.0
    %1105 = vmatprep.subr.mxu0 0.0
    %1106 = vmatpush1.xpose.msra.mxu0 0.0
    %1107 = vmatprep.subr.mxu0 0.0
    %1108 = vmatpush1.xpose.msra.mxu0 0.0
    %1109 = vmatprep.subr.mxu0 0.0
    %1110 = vmatpush1.xpose.msra.mxu0 0.0
    %1111 = vmatprep.subr.mxu0 0.0
    %1112 = vmatpush1.xpose.msra.mxu0 0.0
    %1113 = vmatprep.subr.mxu0 0.0
    %1114 = vmatpush1.xpose.msra.mxu0 0.0
    %1115 = vmatprep.subr.mxu0 0.0
    %1116 = vmatpush1.xpose.msra.mxu0 0.0
    %1117 = vmatprep.subr.mxu0 0.0
    %1118 = vmatpush1.xpose.msra.mxu0 0.0
    %1119 = vmatprep.subr.mxu0 0.0
    %1120 = vmatpush1.xpose.msra.mxu0 0.0
    %1121 = vmatprep.subr.mxu0 0.0
    %1122 = vmatpush1.xpose.msra.mxu0 0.0
    %1123 = vmatprep.subr.mxu0 0.0
    %1124 = vmatpush1.xpose.msra.mxu0 0.0
    %1125 = vmatprep.subr.mxu0 0.0
    %1126 = vmatpush1.xpose.msra.mxu0 0.0
    %1127 = vmatprep.subr.mxu0 0.0
    %1128 = vmatpush1.xpose.msra.mxu0 0.0
    %1129 = vmatprep.subr.mxu0 0.0
    %1130 = vmatpush1.xpose.msra.mxu0 0.0
    %1131 = vmatprep.subr.mxu0 0.0
    %1132 = vmatpush1.xpose.msra.mxu0 0.0
    %1133 = vmatprep.subr.mxu0 0.0
    %1134 = vmatpush1.xpose.msra.mxu0 0.0
    %1135 = vmatprep.subr.mxu0 0.0
    %1136 = vmatpush1.xpose.msra.mxu0 0.0
    %1137 = vmatprep.subr.mxu0 0.0
    %1138 = vmatpush1.xpose.msra.mxu0 0.0
    %1139 = vmatprep.subr.mxu0 0.0
    %1140 = vmatpush1.xpose.msra.mxu0 0.0
    %1141 = vmatprep.subr.mxu0 0.0
    %1142 = vmatpush1.xpose.msra.mxu0 0.0
    %1143 = vmatprep.subr.mxu0 0.0
    %1144 = vmatpush1.xpose.msra.mxu0 0.0
    %1145 = vmatprep.subr.mxu0 0.0
    %1146 = vmatpush1.xpose.msra.mxu0 0.0
    %1147 = vmatprep.subr.mxu0 0.0
    %1148 = vmatpush1.xpose.msra.mxu0 0.0
    %1149 = vmatprep.subr.mxu0 0.0
    %1150 = vmatpush1.xpose.msra.mxu0 0.0
    %1151 = vmatprep.subr.mxu0 0.0
    %1152 = vmatpush1.xpose.msra.mxu0 0.0
    %1153 = vmatprep.mubr.f32.mxu0 0.0
    %1154 = vmatmul.mubr.f32.gmra.mrb[0].mxu0 %v1085
    %v1155 = vpop.f32.mrb[0].mxu0
    %v1156 = vadd.f32 0.0, %v1155
    %v1157 = vpop.f32.mrb[0].mxu0
    %1158 = vdwg.mxu0
    %v1159 = vsel %vm365, %v1156, -1e+30
    %v1160 = vsel %vm366, %v1159, -inf
    %1161 = vmax.xlane.f32.xlu0 %v1160
    %v1162 = vpop.xlane.xlu0 %1161
    %v1163 = vsub.f32 %v1159, %v1162
    %v1164 = vmul.f32 %v1163, 1.442695
    %v1165 = vpow.pop %v1164
    %v1166 = vsel %vm366, %v1165, 0.0
    %1167 = vadd.xlane.f32.xlu0 %v1166
    %v1168 = vpop.xlane.xlu0 %1167
    %1169 = vrot.lane.b32.xlu0 %v337, 104
    %v1170 = vpop.permute.xlu0 %1169
    %v1173 = vsel %vm366, %v1165, 0
    %1175 = vmatprep.subr.mxu0 0.0
    %1176 = vmatpush1.msra.mxu0 %v1170
    %1177 = vmatprep.subr.mxu0 0.0
    %1178 = vmatpush1.msra.mxu0 0.0
    %1179 = vmatprep.subr.mxu0 0.0
    %1180 = vmatpush1.msra.mxu0 0.0
    %1181 = vmatprep.subr.mxu0 0.0
    %1182 = vmatpush1.msra.mxu0 0.0
    %1183 = vmatprep.subr.mxu0 0.0
    %1184 = vmatpush1.msra.mxu0 0.0
    %1185 = vmatprep.subr.mxu0 0.0
    %1186 = vmatpush1.msra.mxu0 0.0
    %1187 = vmatprep.subr.mxu0 0.0
    %1188 = vmatpush1.msra.mxu0 0.0
    %1189 = vmatprep.subr.mxu0 0.0
    %1190 = vmatpush1.msra.mxu0 0.0
    %1191 = vmatprep.subr.mxu0 0.0
    %1192 = vmatpush1.msra.mxu0 0.0
    %1193 = vmatprep.subr.mxu0 0.0
    %1194 = vmatpush1.msra.mxu0 0.0
    %1195 = vmatprep.subr.mxu0 0.0
    %1196 = vmatpush1.msra.mxu0 0.0
    %1197 = vmatprep.subr.mxu0 0.0
    %1198 = vmatpush1.msra.mxu0 0.0
    %1199 = vmatprep.subr.mxu0 0.0
    %1200 = vmatpush1.msra.mxu0 0.0
    %1201 = vmatprep.subr.mxu0 0.0
    %1202 = vmatpush1.msra.mxu0 0.0
    %1203 = vmatprep.subr.mxu0 0.0
    %1204 = vmatpush1.msra.mxu0 0.0
    %1205 = vmatprep.subr.mxu0 0.0
    %1206 = vmatpush1.msra.mxu0 0.0
    %1207 = vmatprep.subr.mxu0 0.0
    %1208 = vmatpush1.msra.mxu0 0.0
    %1209 = vmatprep.subr.mxu0 0.0
    %1210 = vmatpush1.msra.mxu0 0.0
    %1211 = vmatprep.subr.mxu0 0.0
    %1212 = vmatpush1.msra.mxu0 0.0
    %1213 = vmatprep.subr.mxu0 0.0
    %1214 = vmatpush1.msra.mxu0 0.0
    %1215 = vmatprep.subr.mxu0 0.0
    %1216 = vmatpush1.msra.mxu0 0.0
    %1217 = vmatprep.subr.mxu0 0.0
    %1218 = vmatpush1.msra.mxu0 0.0
    %1219 = vmatprep.subr.mxu0 0.0
    %1220 = vmatpush1.msra.mxu0 0.0
    %1221 = vmatprep.subr.mxu0 0.0
    %1222 = vmatpush1.msra.mxu0 0.0
    %1223 = vmatprep.subr.mxu0 0.0
    %1224 = vmatpush1.msra.mxu0 0.0
    %1225 = vmatprep.subr.mxu0 0.0
    %1226 = vmatpush1.msra.mxu0 0.0
    %1227 = vmatprep.subr.mxu0 0.0
    %1228 = vmatpush1.msra.mxu0 0.0
    %1229 = vmatprep.subr.mxu0 0.0
    %1230 = vmatpush1.msra.mxu0 0.0
    %1231 = vmatprep.subr.mxu0 0.0
    %1232 = vmatpush1.msra.mxu0 0.0
    %1233 = vmatprep.subr.mxu0 0.0
    %1234 = vmatpush1.msra.mxu0 0.0
    %1235 = vmatprep.subr.mxu0 0.0
    %1236 = vmatpush1.msra.mxu0 0.0
    %1237 = vmatprep.subr.mxu0 0.0
    %1238 = vmatpush1.msra.mxu0 0.0
    %1239 = vmatprep.mubr.f32.mxu0 0.0
    %1240 = vmatmul.mubr.f32.gmra.mrb[0].mxu0 %v1173
    %v1241 = vpop.f32.mrb[0].mxu0
    %v1242 = vadd.f32 0.0, %v1241
    %v1243 = vpop.f32.mrb[0].mxu0
    %1244 = vdwg.mxu0
    %v1245 = vrcp.pop %v1168
    %v1246 = vmul.f32 %v1242, %v1245
    %v1248 = vsel %vm366, %v1246, 0
    %1250 = vmatprep.subr.mxu0 0.0
    %1251 = vmatpush1.msra.mxu0 %v350
    %1252 = vmatprep.subr.mxu0 0.0
    %1253 = vmatpush1.msra.mxu0 0.0
    %1254 = vmatprep.subr.mxu0 0.0
    %1255 = vmatpush1.msra.mxu0 0.0
    %1256 = vmatprep.subr.mxu0 0.0
    %1257 = vmatpush1.msra.mxu0 0.0
    %1258 = vmatprep.subr.mxu0 0.0
    %1259 = vmatpush1.msra.mxu0 0.0
    %1260 = vmatprep.subr.mxu0 0.0
    %1261 = vmatpush1.msra.mxu0 0.0
    %1262 = vmatprep.subr.mxu0 0.0
    %1263 = vmatpush1.msra.mxu0 0.0
    %1264 = vmatprep.subr.mxu0 0.0
    %1265 = vmatpush1.msra.mxu0 0.0
    %1266 = vmatprep.subr.mxu0 0.0
    %1267 = vmatpush1.msra.mxu0 0.0
    %1268 = vmatprep.subr.mxu0 0.0
    %1269 = vmatpush1.msra.mxu0 0.0
    %1270 = vmatprep.subr.mxu0 0.0
    %1271 = vmatpush1.msra.mxu0 0.0
    %1272 = vmatprep.subr.mxu0 0.0
    %1273 = vmatpush1.msra.mxu0 0.0
    %1274 = vmatprep.subr.mxu0 0.0
    %1275 = vmatpush1.msra.mxu0 0.0
    %1276 = vmatprep.subr.mxu0 0.0
    %1277 = vmatpush1.msra.mxu0 0.0
    %1278 = vmatprep.subr.mxu0 0.0
    %1279 = vmatpush1.msra.mxu0 0.0
    %1280 = vmatprep.subr.mxu0 0.0
    %1281 = vmatpush1.msra.mxu0 0.0
    %1282 = vmatprep.subr.mxu0 0.0
    %1283 = vmatpush1.msra.mxu0 0.0
    %1284 = vmatprep.subr.mxu0 0.0
    %1285 = vmatpush1.msra.mxu0 0.0
    %1286 = vmatprep.subr.mxu0 0.0
    %1287 = vmatpush1.msra.mxu0 0.0
    %1288 = vmatprep.subr.mxu0 0.0
    %1289 = vmatpush1.msra.mxu0 0.0
    %1290 = vmatprep.subr.mxu0 0.0
    %1291 = vmatpush1.msra.mxu0 0.0
    %1292 = vmatprep.subr.mxu0 0.0
    %1293 = vmatpush1.msra.mxu0 0.0
    %1294 = vmatprep.subr.mxu0 0.0
    %1295 = vmatpush1.msra.mxu0 0.0
    %1296 = vmatprep.subr.mxu0 0.0
    %1297 = vmatpush1.msra.mxu0 0.0
    %1298 = vmatprep.subr.mxu0 0.0
    %1299 = vmatpush1.msra.mxu0 0.0
    %1300 = vmatprep.subr.mxu0 0.0
    %1301 = vmatpush1.msra.mxu0 0.0
    %1302 = vmatprep.subr.mxu0 0.0
    %1303 = vmatpush1.msra.mxu0 0.0
    %1304 = vmatprep.subr.mxu0 0.0
    %1305 = vmatpush1.msra.mxu0 0.0
    %1306 = vmatprep.subr.mxu0 0.0
    %1307 = vmatpush1.msra.mxu0 0.0
    %1308 = vmatprep.subr.mxu0 0.0
    %1309 = vmatpush1.msra.mxu0 0.0
    %1310 = vmatprep.subr.mxu0 0.0
    %1311 = vmatpush1.msra.mxu0 0.0
    %1312 = vmatprep.subr.mxu0 0.0
    %1313 = vmatpush1.msra.mxu0 0.0
    %1314 = vmatprep.mubr.f32.mxu0 0.0
    %1315 = vmatmul.mubr.f32.gmra.mrb[0].mxu0 %v1248
    %v1316 = vpop.f32.mrb[0].mxu0
    %v1317 = vadd.f32 0.0, %v1316
    %v1318 = vpop.f32.mrb[0].mxu0
    %1319 = vdwg.mxu0
    %v1320 = vadd.f32 %v1080, %v1317
    %v1322 = vlaneseq
    %v1323 = vshrl.u32 %v1322, 7
    %v1324 = vsub.s32 0, %v1323
    %v1325 = vrot.slane %v351, %v1324
    %v1327 = vadd.f32 %v1320, %v1325
    %s1328 = sadd.s32 %s358, 1
    %s1329 = sld [smem:[#allocation3 + %s1328]]
    %v1330 = vstv %s1329
    %vm1331 = vcmp.lt.s32.totalorder %v353, %v1330
    %vm1332 = vcmp.lt.s32.totalorder %v355, %v1330
    %vm1333 = vmand %vm1331, %vm1332
    %vm1334 = vmor %vm1333, %vm357
    %vm1335 = vmand %vm356, %vm1334
    %v1337 = vsel %vm366, %v346, 0
    %v1340 = vsel %vm366, %v263, 0
    %1342 = vmatprep.subr.mxu0 0.0
    %1343 = vmatpush1.xpose.msra.mxu0 %v1340
    %1344 = vmatprep.subr.mxu0 0.0
    %1345 = vmatpush1.xpose.msra.mxu0 0.0
    %1346 = vmatprep.subr.mxu0 0.0
    %1347 = vmatpush1.xpose.msra.mxu0 0.0
    %1348 = vmatprep.subr.mxu0 0.0
    %1349 = vmatpush1.xpose.msra.mxu0 0.0
    %1350 = vmatprep.subr.mxu0 0.0
    %1351 = vmatpush1.xpose.msra.mxu0 0.0
    %1352 = vmatprep.subr.mxu0 0.0
    %1353 = vmatpush1.xpose.msra.mxu0 0.0
    %1354 = vmatprep.subr.mxu0 0.0
    %1355 = vmatpush1.xpose.msra.mxu0 0.0
    %1356 = vmatprep.subr.mxu0 0.0
    %1357 = vmatpush1.xpose.msra.mxu0 0.0
    %1358 = vmatprep.subr.mxu0 0.0
    %1359 = vmatpush1.xpose.msra.mxu0 0.0
    %1360 = vmatprep.subr.mxu0 0.0
    %1361 = vmatpush1.xpose.msra.mxu0 0.0
    %1362 = vmatprep.subr.mxu0 0.0
    %1363 = vmatpush1.xpose.msra.mxu0 0.0
    %1364 = vmatprep.subr.mxu0 0.0
    %1365 = vmatpush1.xpose.msra.mxu0 0.0
    %1366 = vmatprep.subr.mxu0 0.0
    %1367 = vmatpush1.xpose.msra.mxu0 0.0
    %1368 = vmatprep.subr.mxu0 0.0
    %1369 = vmatpush1.xpose.msra.mxu0 0.0
    %1370 = vmatprep.subr.mxu0 0.0
    %1371 = vmatpush1.xpose.msra.mxu0 0.0
    %1372 = vmatprep.subr.mxu0 0.0
    %1373 = vmatpush1.xpose.msra.mxu0 0.0
    %1374 = vmatprep.subr.mxu0 0.0
    %1375 = vmatpush1.xpose.msra.mxu0 0.0
    %1376 = vmatprep.subr.mxu0 0.0
    %1377 = vmatpush1.xpose.msra.mxu0 0.0
    %1378 = vmatprep.subr.mxu0 0.0
    %1379 = vmatpush1.xpose.msra.mxu0 0.0
    %1380 = vmatprep.subr.mxu0 0.0
    %1381 = vmatpush1.xpose.msra.mxu0 0.0
    %1382 = vmatprep.subr.mxu0 0.0
    %1383 = vmatpush1.xpose.msra.mxu0 0.0
    %1384 = vmatprep.subr.mxu0 0.0
    %1385 = vmatpush1.xpose.msra.mxu0 0.0
    %1386 = vmatprep.subr.mxu0 0.0
    %1387 = vmatpush1.xpose.msra.mxu0 0.0
    %1388 = vmatprep.subr.mxu0 0.0
    %1389 = vmatpush1.xpose.msra.mxu0 0.0
    %1390 = vmatprep.subr.mxu0 0.0
    %1391 = vmatpush1.xpose.msra.mxu0 0.0
    %1392 = vmatprep.subr.mxu0 0.0
    %1393 = vmatpush1.xpose.msra.mxu0 0.0
    %1394 = vmatprep.subr.mxu0 0.0
    %1395 = vmatpush1.xpose.msra.mxu0 0.0
    %1396 = vmatprep.subr.mxu0 0.0
    %1397 = vmatpush1.xpose.msra.mxu0 0.0
    %1398 = vmatprep.subr.mxu0 0.0
    %1399 = vmatpush1.xpose.msra.mxu0 0.0
    %1400 = vmatprep.subr.mxu0 0.0
    %1401 = vmatpush1.xpose.msra.mxu0 0.0
    %1402 = vmatprep.subr.mxu0 0.0
    %1403 = vmatpush1.xpose.msra.mxu0 0.0
    %1404 = vmatprep.subr.mxu0 0.0
    %1405 = vmatpush1.xpose.msra.mxu0 0.0
    %1406 = vmatprep.mubr.f32.mxu0 0.0
    %1407 = vmatmul.mubr.f32.gmra.mrb[0].mxu0 %v1337
    %v1408 = vpop.f32.mrb[0].mxu0
    %v1409 = vadd.f32 0.0, %v1408
    %v1410 = vpop.f32.mrb[0].mxu0
    %1411 = vdwg.mxu0
    %v1412 = vsel %vm1335, %v1409, -1e+30
    %v1413 = vsel %vm366, %v1412, -inf
    %1414 = vmax.xlane.f32.xlu0 %v1413
    %v1415 = vpop.xlane.xlu0 %1414
    %v1416 = vsub.f32 %v1412, %v1415
    %v1417 = vmul.f32 %v1416, 1.442695
    %v1418 = vpow.pop %v1417
    %v1419 = vsel %vm366, %v1418, 0.0
    %1420 = vadd.xlane.f32.xlu0 %v1419
    %v1421 = vpop.xlane.xlu0 %1420
    %v1423 = vsel %vm366, %v1418, 0
    %1425 = vmatprep.subr.mxu0 0.0
    %1426 = vmatpush1.msra.mxu0 %v342
    %1427 = vmatprep.subr.mxu0 0.0
    %1428 = vmatpush1.msra.mxu0 0.0
    %1429 = vmatprep.subr.mxu0 0.0
    %1430 = vmatpush1.msra.mxu0 0.0
    %1431 = vmatprep.subr.mxu0 0.0
    %1432 = vmatpush1.msra.mxu0 0.0
    %1433 = vmatprep.subr.mxu0 0.0
    %1434 = vmatpush1.msra.mxu0 0.0
    %1435 = vmatprep.subr.mxu0 0.0
    %1436 = vmatpush1.msra.mxu0 0.0
    %1437 = vmatprep.subr.mxu0 0.0
    %1438 = vmatpush1.msra.mxu0 0.0
    %1439 = vmatprep.subr.mxu0 0.0
    %1440 = vmatpush1.msra.mxu0 0.0
    %1441 = vmatprep.subr.mxu0 0.0
    %1442 = vmatpush1.msra.mxu0 0.0
    %1443 = vmatprep.subr.mxu0 0.0
    %1444 = vmatpush1.msra.mxu0 0.0
    %1445 = vmatprep.subr.mxu0 0.0
    %1446 = vmatpush1.msra.mxu0 0.0
    %1447 = vmatprep.subr.mxu0 0.0
    %1448 = vmatpush1.msra.mxu0 0.0
    %1449 = vmatprep.subr.mxu0 0.0
    %1450 = vmatpush1.msra.mxu0 0.0
    %1451 = vmatprep.subr.mxu0 0.0
    %1452 = vmatpush1.msra.mxu0 0.0
    %1453 = vmatprep.subr.mxu0 0.0
    %1454 = vmatpush1.msra.mxu0 0.0
    %1455 = vmatprep.subr.mxu0 0.0
    %1456 = vmatpush1.msra.mxu0 0.0
    %1457 = vmatprep.subr.mxu0 0.0
    %1458 = vmatpush1.msra.mxu0 0.0
    %1459 = vmatprep.subr.mxu0 0.0
    %1460 = vmatpush1.msra.mxu0 0.0
    %1461 = vmatprep.subr.mxu0 0.0
    %1462 = vmatpush1.msra.mxu0 0.0
    %1463 = vmatprep.subr.mxu0 0.0
    %1464 = vmatpush1.msra.mxu0 0.0
    %1465 = vmatprep.subr.mxu0 0.0
    %1466 = vmatpush1.msra.mxu0 0.0
    %1467 = vmatprep.subr.mxu0 0.0
    %1468 = vmatpush1.msra.mxu0 0.0
    %1469 = vmatprep.subr.mxu0 0.0
    %1470 = vmatpush1.msra.mxu0 0.0
    %1471 = vmatprep.subr.mxu0 0.0
    %1472 = vmatpush1.msra.mxu0 0.0
    %1473 = vmatprep.subr.mxu0 0.0
    %1474 = vmatpush1.msra.mxu0 0.0
    %1475 = vmatprep.subr.mxu0 0.0
    %1476 = vmatpush1.msra.mxu0 0.0
    %1477 = vmatprep.subr.mxu0 0.0
    %1478 = vmatpush1.msra.mxu0 0.0
    %1479 = vmatprep.subr.mxu0 0.0
    %1480 = vmatpush1.msra.mxu0 0.0
    %1481 = vmatprep.subr.mxu0 0.0
    %1482 = vmatpush1.msra.mxu0 0.0
    %1483 = vmatprep.subr.mxu0 0.0
    %1484 = vmatpush1.msra.mxu0 0.0
    %1485 = vmatprep.subr.mxu0 0.0
    %1486 = vmatpush1.msra.mxu0 0.0
    %1487 = vmatprep.subr.mxu0 0.0
    %1488 = vmatpush1.msra.mxu0 0.0
    %1489 = vmatprep.mubr.f32.mxu0 0.0
    %1490 = vmatmul.mubr.f32.gmra.mrb[0].mxu0 %v1423
    %v1491 = vpop.f32.mrb[0].mxu0
    %v1492 = vadd.f32 0.0, %v1491
    %v1493 = vpop.f32.mrb[0].mxu0
    %1494 = vdwg.mxu0
    %v1495 = vrcp.pop %v1421
    %v1496 = vmul.f32 %v1492, %v1495
    %1497 = vrot.lane.b32.xlu0 %v346, 120
    %v1498 = vpop.permute.xlu0 %1497
    %1499 = vrot.lane.b32.xlu0 %v263, 120
    %v1500 = vpop.permute.xlu0 %1499
    %v1501 = vsel %vm366, %v1498, 0
    %v1503 = vsel %vm366, %v1500, 0
    %1505 = vmatprep.subr.mxu0 0.0
    %1506 = vmatpush1.xpose.msra.mxu0 %v1503
    %1507 = vmatprep.subr.mxu0 0.0
    %1508 = vmatpush1.xpose.msra.mxu0 0.0
    %1509 = vmatprep.subr.mxu0 0.0
    %1510 = vmatpush1.xpose.msra.mxu0 0.0
    %1511 = vmatprep.subr.mxu0 0.0
    %1512 = vmatpush1.xpose.msra.mxu0 0.0
    %1513 = vmatprep.subr.mxu0 0.0
    %1514 = vmatpush1.xpose.msra.mxu0 0.0
    %1515 = vmatprep.subr.mxu0 0.0
    %1516 = vmatpush1.xpose.msra.mxu0 0.0
    %1517 = vmatprep.subr.mxu0 0.0
    %1518 = vmatpush1.xpose.msra.mxu0 0.0
    %1519 = vmatprep.subr.mxu0 0.0
    %1520 = vmatpush1.xpose.msra.mxu0 0.0
    %1521 = vmatprep.subr.mxu0 0.0
    %1522 = vmatpush1.xpose.msra.mxu0 0.0
    %1523 = vmatprep.subr.mxu0 0.0
    %1524 = vmatpush1.xpose.msra.mxu0 0.0
    %1525 = vmatprep.subr.mxu0 0.0
    %1526 = vmatpush1.xpose.msra.mxu0 0.0
    %1527 = vmatprep.subr.mxu0 0.0
    %1528 = vmatpush1.xpose.msra.mxu0 0.0
    %1529 = vmatprep.subr.mxu0 0.0
    %1530 = vmatpush1.xpose.msra.mxu0 0.0
    %1531 = vmatprep.subr.mxu0 0.0
    %1532 = vmatpush1.xpose.msra.mxu0 0.0
    %1533 = vmatprep.subr.mxu0 0.0
    %1534 = vmatpush1.xpose.msra.mxu0 0.0
    %1535 = vmatprep.subr.mxu0 0.0
    %1536 = vmatpush1.xpose.msra.mxu0 0.0
    %1537 = vmatprep.subr.mxu0 0.0
    %1538 = vmatpush1.xpose.msra.mxu0 0.0
    %1539 = vmatprep.subr.mxu0 0.0
    %1540 = vmatpush1.xpose.msra.mxu0 0.0
    %1541 = vmatprep.subr.mxu0 0.0
    %1542 = vmatpush1.xpose.msra.mxu0 0.0
    %1543 = vmatprep.subr.mxu0 0.0
    %1544 = vmatpush1.xpose.msra.mxu0 0.0
    %1545 = vmatprep.subr.mxu0 0.0
    %1546 = vmatpush1.xpose.msra.mxu0 0.0
    %1547 = vmatprep.subr.mxu0 0.0
    %1548 = vmatpush1.xpose.msra.mxu0 0.0
    %1549 = vmatprep.subr.mxu0 0.0
    %1550 = vmatpush1.xpose.msra.mxu0 0.0
    %1551 = vmatprep.subr.mxu0 0.0
    %1552 = vmatpush1.xpose.msra.mxu0 0.0
    %1553 = vmatprep.subr.mxu0 0.0
    %1554 = vmatpush1.xpose.msra.mxu0 0.0
    %1555 = vmatprep.subr.mxu0 0.0
    %1556 = vmatpush1.xpose.msra.mxu0 0.0
    %1557 = vmatprep.subr.mxu0 0.0
    %1558 = vmatpush1.xpose.msra.mxu0 0.0
    %1559 = vmatprep.subr.mxu0 0.0
    %1560 = vmatpush1.xpose.msra.mxu0 0.0
    %1561 = vmatprep.subr.mxu0 0.0
    %1562 = vmatpush1.xpose.msra.mxu0 0.0
    %1563 = vmatprep.subr.mxu0 0.0
    %1564 = vmatpush1.xpose.msra.mxu0 0.0
    %1565 = vmatprep.subr.mxu0 0.0
    %1566 = vmatpush1.xpose.msra.mxu0 0.0
    %1567 = vmatprep.subr.mxu0 0.0
    %1568 = vmatpush1.xpose.msra.mxu0 0.0
    %1569 = vmatprep.mubr.f32.mxu0 0.0
    %1570 = vmatmul.mubr.f32.gmra.mrb[0].mxu0 %v1501
    %v1571 = vpop.f32.mrb[0].mxu0
    %v1572 = vadd.f32 0.0, %v1571
    %v1573 = vpop.f32.mrb[0].mxu0
    %1574 = vdwg.mxu0
    %v1575 = vsel %vm1335, %v1572, -1e+30
    %v1576 = vsel %vm366, %v1575, -inf
    %1577 = vmax.xlane.f32.xlu0 %v1576
    %v1578 = vpop.xlane.xlu0 %1577
    %v1579 = vsub.f32 %v1575, %v1578
    %v1580 = vmul.f32 %v1579, 1.442695
    %v1581 = vpow.pop %v1580
    %v1582 = vsel %vm366, %v1581, 0.0
    %1583 = vadd.xlane.f32.xlu0 %v1582
    %v1584 = vpop.xlane.xlu0 %1583
    %1586 = vrot.lane.b32.xlu0 %v342, 120
    %v1587 = vpop.permute.xlu0 %1586
    %v1590 = vsel %vm366, %v1581, 0
    %1592 = vmatprep.subr.mxu0 0.0
    %1593 = vmatpush1.msra.mxu0 %v1587
    %1594 = vmatprep.subr.mxu0 0.0
    %1595 = vmatpush1.msra.mxu0 0.0
    %1596 = vmatprep.subr.mxu0 0.0
    %1597 = vmatpush1.msra.mxu0 0.0
    %1598 = vmatprep.subr.mxu0 0.0
    %1599 = vmatpush1.msra.mxu0 0.0
    %1600 = vmatprep.subr.mxu0 0.0
    %1601 = vmatpush1.msra.mxu0 0.0
    %1602 = vmatprep.subr.mxu0 0.0
    %1603 = vmatpush1.msra.mxu0 0.0
    %1604 = vmatprep.subr.mxu0 0.0
    %1605 = vmatpush1.msra.mxu0 0.0
    %1606 = vmatprep.subr.mxu0 0.0
    %1607 = vmatpush1.msra.mxu0 0.0
    %1608 = vmatprep.subr.mxu0 0.0
    %1609 = vmatpush1.msra.mxu0 0.0
    %1610 = vmatprep.subr.mxu0 0.0
    %1611 = vmatpush1.msra.mxu0 0.0
    %1612 = vmatprep.subr.mxu0 0.0
    %1613 = vmatpush1.msra.mxu0 0.0
    %1614 = vmatprep.subr.mxu0 0.0
    %1615 = vmatpush1.msra.mxu0 0.0
    %1616 = vmatprep.subr.mxu0 0.0
    %1617 = vmatpush1.msra.mxu0 0.0
    %1618 = vmatprep.subr.mxu0 0.0
    %1619 = vmatpush1.msra.mxu0 0.0
    %1620 = vmatprep.subr.mxu0 0.0
    %1621 = vmatpush1.msra.mxu0 0.0
    %1622 = vmatprep.subr.mxu0 0.0
    %1623 = vmatpush1.msra.mxu0 0.0
    %1624 = vmatprep.subr.mxu0 0.0
    %1625 = vmatpush1.msra.mxu0 0.0
    %1626 = vmatprep.subr.mxu0 0.0
    %1627 = vmatpush1.msra.mxu0 0.0
    %1628 = vmatprep.subr.mxu0 0.0
    %1629 = vmatpush1.msra.mxu0 0.0
    %1630 = vmatprep.subr.mxu0 0.0
    %1631 = vmatpush1.msra.mxu0 0.0
    %1632 = vmatprep.subr.mxu0 0.0
    %1633 = vmatpush1.msra.mxu0 0.0
    %1634 = vmatprep.subr.mxu0 0.0
    %1635 = vmatpush1.msra.mxu0 0.0
    %1636 = vmatprep.subr.mxu0 0.0
    %1637 = vmatpush1.msra.mxu0 0.0
    %1638 = vmatprep.subr.mxu0 0.0
    %1639 = vmatpush1.msra.mxu0 0.0
    %1640 = vmatprep.subr.mxu0 0.0
    %1641 = vmatpush1.msra.mxu0 0.0
    %1642 = vmatprep.subr.mxu0 0.0
    %1643 = vmatpush1.msra.mxu0 0.0
    %1644 = vmatprep.subr.mxu0 0.0
    %1645 = vmatpush1.msra.mxu0 0.0
    %1646 = vmatprep.subr.mxu0 0.0
    %1647 = vmatpush1.msra.mxu0 0.0
    %1648 = vmatprep.subr.mxu0 0.0
    %1649 = vmatpush1.msra.mxu0 0.0
    %1650 = vmatprep.subr.mxu0 0.0
    %1651 = vmatpush1.msra.mxu0 0.0
    %1652 = vmatprep.subr.mxu0 0.0
    %1653 = vmatpush1.msra.mxu0 0.0
    %1654 = vmatprep.subr.mxu0 0.0
    %1655 = vmatpush1.msra.mxu0 0.0
    %1656 = vmatprep.mubr.f32.mxu0 0.0
    %1657 = vmatmul.mubr.f32.gmra.mrb[0].mxu0 %v1590
    %v1658 = vpop.f32.mrb[0].mxu0
    %v1659 = vadd.f32 0.0, %v1658
    %v1660 = vpop.f32.mrb[0].mxu0
    %1661 = vdwg.mxu0
    %v1662 = vrcp.pop %v1584
    %v1663 = vmul.f32 %v1659, %v1662
    %v1665 = vsel %vm366, %v1663, 0
    %1667 = vmatprep.subr.mxu0 0.0
    %1668 = vmatpush1.msra.mxu0 %v348
    %1669 = vmatprep.subr.mxu0 0.0
    %1670 = vmatpush1.msra.mxu0 0.0
    %1671 = vmatprep.subr.mxu0 0.0
    %1672 = vmatpush1.msra.mxu0 0.0
    %1673 = vmatprep.subr.mxu0 0.0
    %1674 = vmatpush1.msra.mxu0 0.0
    %1675 = vmatprep.subr.mxu0 0.0
    %1676 = vmatpush1.msra.mxu0 0.0
    %1677 = vmatprep.subr.mxu0 0.0
    %1678 = vmatpush1.msra.mxu0 0.0
    %1679 = vmatprep.subr.mxu0 0.0
    %1680 = vmatpush1.msra.mxu0 0.0
    %1681 = vmatprep.subr.mxu0 0.0
    %1682 = vmatpush1.msra.mxu0 0.0
    %1683 = vmatprep.subr.mxu0 0.0
    %1684 = vmatpush1.msra.mxu0 0.0
    %1685 = vmatprep.subr.mxu0 0.0
    %1686 = vmatpush1.msra.mxu0 0.0
    %1687 = vmatprep.subr.mxu0 0.0
    %1688 = vmatpush1.msra.mxu0 0.0
    %1689 = vmatprep.subr.mxu0 0.0
    %1690 = vmatpush1.msra.mxu0 0.0
    %1691 = vmatprep.subr.mxu0 0.0
    %1692 = vmatpush1.msra.mxu0 0.0
    %1693 = vmatprep.subr.mxu0 0.0
    %1694 = vmatpush1.msra.mxu0 0.0
    %1695 = vmatprep.subr.mxu0 0.0
    %1696 = vmatpush1.msra.mxu0 0.0
    %1697 = vmatprep.subr.mxu0 0.0
    %1698 = vmatpush1.msra.mxu0 0.0
    %1699 = vmatprep.subr.mxu0 0.0
    %1700 = vmatpush1.msra.mxu0 0.0
    %1701 = vmatprep.subr.mxu0 0.0
    %1702 = vmatpush1.msra.mxu0 0.0
    %1703 = vmatprep.subr.mxu0 0.0
    %1704 = vmatpush1.msra.mxu0 0.0
    %1705 = vmatprep.subr.mxu0 0.0
    %1706 = vmatpush1.msra.mxu0 0.0
    %1707 = vmatprep.subr.mxu0 0.0
    %1708 = vmatpush1.msra.mxu0 0.0
    %1709 = vmatprep.subr.mxu0 0.0
    %1710 = vmatpush1.msra.mxu0 0.0
    %1711 = vmatprep.subr.mxu0 0.0
    %1712 = vmatpush1.msra.mxu0 0.0
    %1713 = vmatprep.subr.mxu0 0.0
    %1714 = vmatpush1.msra.mxu0 0.0
    %1715 = vmatprep.subr.mxu0 0.0
    %1716 = vmatpush1.msra.mxu0 0.0
    %1717 = vmatprep.subr.mxu0 0.0
    %1718 = vmatpush1.msra.mxu0 0.0
    %1719 = vmatprep.subr.mxu0 0.0
    %1720 = vmatpush1.msra.mxu0 0.0
    %1721 = vmatprep.subr.mxu0 0.0
    %1722 = vmatpush1.msra.mxu0 0.0
    %1723 = vmatprep.subr.mxu0 0.0
    %1724 = vmatpush1.msra.mxu0 0.0
    %1725 = vmatprep.subr.mxu0 0.0
    %1726 = vmatpush1.msra.mxu0 0.0
    %1727 = vmatprep.subr.mxu0 0.0
    %1728 = vmatpush1.msra.mxu0 0.0
    %1729 = vmatprep.subr.mxu0 0.0
    %1730 = vmatpush1.msra.mxu0 0.0
    %1731 = vmatprep.mubr.f32.mxu0 0.0
    %1732 = vmatmul.mubr.f32.gmra.mrb[0].mxu0 %v1665
    %v1733 = vpop.f32.mrb[0].mxu0
    %v1734 = vadd.f32 0.0, %v1733
    %v1735 = vpop.f32.mrb[0].mxu0
    %1736 = vdwg.mxu0
    %v1738 = vsel %vm366, %v1496, 0
    %1740 = vmatprep.subr.mxu0 0.0
    %1741 = vmatpush1.msra.mxu0 %v347
    %1742 = vmatprep.subr.mxu0 0.0
    %1743 = vmatpush1.msra.mxu0 0.0
    %1744 = vmatprep.subr.mxu0 0.0
    %1745 = vmatpush1.msra.mxu0 0.0
    %1746 = vmatprep.subr.mxu0 0.0
    %1747 = vmatpush1.msra.mxu0 0.0
    %1748 = vmatprep.subr.mxu0 0.0
    %1749 = vmatpush1.msra.mxu0 0.0
    %1750 = vmatprep.subr.mxu0 0.0
    %1751 = vmatpush1.msra.mxu0 0.0
    %1752 = vmatprep.subr.mxu0 0.0
    %1753 = vmatpush1.msra.mxu0 0.0
    %1754 = vmatprep.subr.mxu0 0.0
    %1755 = vmatpush1.msra.mxu0 0.0
    %1756 = vmatprep.subr.mxu0 0.0
    %1757 = vmatpush1.msra.mxu0 0.0
    %1758 = vmatprep.subr.mxu0 0.0
    %1759 = vmatpush1.msra.mxu0 0.0
    %1760 = vmatprep.subr.mxu0 0.0
    %1761 = vmatpush1.msra.mxu0 0.0
    %1762 = vmatprep.subr.mxu0 0.0
    %1763 = vmatpush1.msra.mxu0 0.0
    %1764 = vmatprep.subr.mxu0 0.0
    %1765 = vmatpush1.msra.mxu0 0.0
    %1766 = vmatprep.subr.mxu0 0.0
    %1767 = vmatpush1.msra.mxu0 0.0
    %1768 = vmatprep.subr.mxu0 0.0
    %1769 = vmatpush1.msra.mxu0 0.0
    %1770 = vmatprep.subr.mxu0 0.0
    %1771 = vmatpush1.msra.mxu0 0.0
    %1772 = vmatprep.subr.mxu0 0.0
    %1773 = vmatpush1.msra.mxu0 0.0
    %1774 = vmatprep.subr.mxu0 0.0
    %1775 = vmatpush1.msra.mxu0 0.0
    %1776 = vmatprep.subr.mxu0 0.0
    %1777 = vmatpush1.msra.mxu0 0.0
    %1778 = vmatprep.subr.mxu0 0.0
    %1779 = vmatpush1.msra.mxu0 0.0
    %1780 = vmatprep.subr.mxu0 0.0
    %1781 = vmatpush1.msra.mxu0 0.0
    %1782 = vmatprep.subr.mxu0 0.0
    %1783 = vmatpush1.msra.mxu0 0.0
    %1784 = vmatprep.subr.mxu0 0.0
    %1785 = vmatpush1.msra.mxu0 0.0
    %1786 = vmatprep.subr.mxu0 0.0
    %1787 = vmatpush1.msra.mxu0 0.0
    %1788 = vmatprep.subr.mxu0 0.0
    %1789 = vmatpush1.msra.mxu0 0.0
    %1790 = vmatprep.subr.mxu0 0.0
    %1791 = vmatpush1.msra.mxu0 0.0
    %1792 = vmatprep.subr.mxu0 0.0
    %1793 = vmatpush1.msra.mxu0 0.0
    %1794 = vmatprep.subr.mxu0 0.0
    %1795 = vmatpush1.msra.mxu0 0.0
    %1796 = vmatprep.subr.mxu0 0.0
    %1797 = vmatpush1.msra.mxu0 0.0
    %1798 = vmatprep.subr.mxu0 0.0
    %1799 = vmatpush1.msra.mxu0 0.0
    %1800 = vmatprep.subr.mxu0 0.0
    %1801 = vmatpush1.msra.mxu0 0.0
    %1802 = vmatprep.subr.mxu0 0.0
    %1803 = vmatpush1.msra.mxu0 0.0
    %1804 = vmatprep.mubr.f32.mxu0 0.0
    %1805 = vmatmul.mubr.f32.gmra.mrb[0].mxu0 %v1738
    %v1806 = vpop.f32.mrb[0].mxu0
    %v1807 = vadd.f32 %v1734, %v1806
    %v1808 = vpop.f32.mrb[0].mxu0
    %1809 = vdwg.mxu0
    %1810 = vrot.lane.b32.xlu0 %v346, 112
    %v1811 = vpop.permute.xlu0 %1810
    %1812 = vrot.lane.b32.xlu0 %v263, 112
    %v1813 = vpop.permute.xlu0 %1812
    %v1814 = vsel %vm366, %v1811, 0
    %v1816 = vsel %vm366, %v1813, 0
    %1818 = vmatprep.subr.mxu0 0.0
    %1819 = vmatpush1.xpose.msra.mxu0 %v1816
    %1820 = vmatprep.subr.mxu0 0.0
    %1821 = vmatpush1.xpose.msra.mxu0 0.0
    %1822 = vmatprep.subr.mxu0 0.0
    %1823 = vmatpush1.xpose.msra.mxu0 0.0
    %1824 = vmatprep.subr.mxu0 0.0
    %1825 = vmatpush1.xpose.msra.mxu0 0.0
    %1826 = vmatprep.subr.mxu0 0.0
    %1827 = vmatpush1.xpose.msra.mxu0 0.0
    %1828 = vmatprep.subr.mxu0 0.0
    %1829 = vmatpush1.xpose.msra.mxu0 0.0
    %1830 = vmatprep.subr.mxu0 0.0
    %1831 = vmatpush1.xpose.msra.mxu0 0.0
    %1832 = vmatprep.subr.mxu0 0.0
    %1833 = vmatpush1.xpose.msra.mxu0 0.0
    %1834 = vmatprep.subr.mxu0 0.0
    %1835 = vmatpush1.xpose.msra.mxu0 0.0
    %1836 = vmatprep.subr.mxu0 0.0
    %1837 = vmatpush1.xpose.msra.mxu0 0.0
    %1838 = vmatprep.subr.mxu0 0.0
    %1839 = vmatpush1.xpose.msra.mxu0 0.0
    %1840 = vmatprep.subr.mxu0 0.0
    %1841 = vmatpush1.xpose.msra.mxu0 0.0
    %1842 = vmatprep.subr.mxu0 0.0
    %1843 = vmatpush1.xpose.msra.mxu0 0.0
    %1844 = vmatprep.subr.mxu0 0.0
    %1845 = vmatpush1.xpose.msra.mxu0 0.0
    %1846 = vmatprep.subr.mxu0 0.0
    %1847 = vmatpush1.xpose.msra.mxu0 0.0
    %1848 = vmatprep.subr.mxu0 0.0
    %1849 = vmatpush1.xpose.msra.mxu0 0.0
    %1850 = vmatprep.subr.mxu0 0.0
    %1851 = vmatpush1.xpose.msra.mxu0 0.0
    %1852 = vmatprep.subr.mxu0 0.0
    %1853 = vmatpush1.xpose.msra.mxu0 0.0
    %1854 = vmatprep.subr.mxu0 0.0
    %1855 = vmatpush1.xpose.msra.mxu0 0.0
    %1856 = vmatprep.subr.mxu0 0.0
    %1857 = vmatpush1.xpose.msra.mxu0 0.0
    %1858 = vmatprep.subr.mxu0 0.0
    %1859 = vmatpush1.xpose.msra.mxu0 0.0
    %1860 = vmatprep.subr.mxu0 0.0
    %1861 = vmatpush1.xpose.msra.mxu0 0.0
    %1862 = vmatprep.subr.mxu0 0.0
    %1863 = vmatpush1.xpose.msra.mxu0 0.0
    %1864 = vmatprep.subr.mxu0 0.0
    %1865 = vmatpush1.xpose.msra.mxu0 0.0
    %1866 = vmatprep.subr.mxu0 0.0
    %1867 = vmatpush1.xpose.msra.mxu0 0.0
    %1868 = vmatprep.subr.mxu0 0.0
    %1869 = vmatpush1.xpose.msra.mxu0 0.0
    %1870 = vmatprep.subr.mxu0 0.0
    %1871 = vmatpush1.xpose.msra.mxu0 0.0
    %1872 = vmatprep.subr.mxu0 0.0
    %1873 = vmatpush1.xpose.msra.mxu0 0.0
    %1874 = vmatprep.subr.mxu0 0.0
    %1875 = vmatpush1.xpose.msra.mxu0 0.0
    %1876 = vmatprep.subr.mxu0 0.0
    %1877 = vmatpush1.xpose.msra.mxu0 0.0
    %1878 = vmatprep.subr.mxu0 0.0
    %1879 = vmatpush1.xpose.msra.mxu0 0.0
    %1880 = vmatprep.subr.mxu0 0.0
    %1881 = vmatpush1.xpose.msra.mxu0 0.0
    %1882 = vmatprep.mubr.f32.mxu0 0.0
    %1883 = vmatmul.mubr.f32.gmra.mrb[0].mxu0 %v1814
    %v1884 = vpop.f32.mrb[0].mxu0
    %v1885 = vadd.f32 0.0, %v1884
    %v1886 = vpop.f32.mrb[0].mxu0
    %1887 = vdwg.mxu0
    %v1888 = vsel %vm1335, %v1885, -1e+30
    %v1889 = vsel %vm366, %v1888, -inf
    %1890 = vmax.xlane.f32.xlu0 %v1889
    %v1891 = vpop.xlane.xlu0 %1890
    %v1892 = vsub.f32 %v1888, %v1891
    %v1893 = vmul.f32 %v1892, 1.442695
    %v1894 = vpow.pop %v1893
    %v1895 = vsel %vm366, %v1894, 0.0
    %1896 = vadd.xlane.f32.xlu0 %v1895
    %v1897 = vpop.xlane.xlu0 %1896
    %1898 = vrot.lane.b32.xlu0 %v342, 112
    %v1899 = vpop.permute.xlu0 %1898
    %v1902 = vsel %vm366, %v1894, 0
    %1904 = vmatprep.subr.mxu0 0.0
    %1905 = vmatpush1.msra.mxu0 %v1899
    %1906 = vmatprep.subr.mxu0 0.0
    %1907 = vmatpush1.msra.mxu0 0.0
    %1908 = vmatprep.subr.mxu0 0.0
    %1909 = vmatpush1.msra.mxu0 0.0
    %1910 = vmatprep.subr.mxu0 0.0
    %1911 = vmatpush1.msra.mxu0 0.0
    %1912 = vmatprep.subr.mxu0 0.0
    %1913 = vmatpush1.msra.mxu0 0.0
    %1914 = vmatprep.subr.mxu0 0.0
    %1915 = vmatpush1.msra.mxu0 0.0
    %1916 = vmatprep.subr.mxu0 0.0
    %1917 = vmatpush1.msra.mxu0 0.0
    %1918 = vmatprep.subr.mxu0 0.0
    %1919 = vmatpush1.msra.mxu0 0.0
    %1920 = vmatprep.subr.mxu0 0.0
    %1921 = vmatpush1.msra.mxu0 0.0
    %1922 = vmatprep.subr.mxu0 0.0
    %1923 = vmatpush1.msra.mxu0 0.0
    %1924 = vmatprep.subr.mxu0 0.0
    %1925 = vmatpush1.msra.mxu0 0.0
    %1926 = vmatprep.subr.mxu0 0.0
    %1927 = vmatpush1.msra.mxu0 0.0
    %1928 = vmatprep.subr.mxu0 0.0
    %1929 = vmatpush1.msra.mxu0 0.0
    %1930 = vmatprep.subr.mxu0 0.0
    %1931 = vmatpush1.msra.mxu0 0.0
    %1932 = vmatprep.subr.mxu0 0.0
    %1933 = vmatpush1.msra.mxu0 0.0
    %1934 = vmatprep.subr.mxu0 0.0
    %1935 = vmatpush1.msra.mxu0 0.0
    %1936 = vmatprep.subr.mxu0 0.0
    %1937 = vmatpush1.msra.mxu0 0.0
    %1938 = vmatprep.subr.mxu0 0.0
    %1939 = vmatpush1.msra.mxu0 0.0
    %1940 = vmatprep.subr.mxu0 0.0
    %1941 = vmatpush1.msra.mxu0 0.0
    %1942 = vmatprep.subr.mxu0 0.0
    %1943 = vmatpush1.msra.mxu0 0.0
    %1944 = vmatprep.subr.mxu0 0.0
    %1945 = vmatpush1.msra.mxu0 0.0
    %1946 = vmatprep.subr.mxu0 0.0
    %1947 = vmatpush1.msra.mxu0 0.0
    %1948 = vmatprep.subr.mxu0 0.0
    %1949 = vmatpush1.msra.mxu0 0.0
    %1950 = vmatprep.subr.mxu0 0.0
    %1951 = vmatpush1.msra.mxu0 0.0
    %1952 = vmatprep.subr.mxu0 0.0
    %1953 = vmatpush1.msra.mxu0 0.0
    %1954 = vmatprep.subr.mxu0 0.0
    %1955 = vmatpush1.msra.mxu0 0.0
    %1956 = vmatprep.subr.mxu0 0.0
    %1957 = vmatpush1.msra.mxu0 0.0
    %1958 = vmatprep.subr.mxu0 0.0
    %1959 = vmatpush1.msra.mxu0 0.0
    %1960 = vmatprep.subr.mxu0 0.0
    %1961 = vmatpush1.msra.mxu0 0.0
    %1962 = vmatprep.subr.mxu0 0.0
    %1963 = vmatpush1.msra.mxu0 0.0
    %1964 = vmatprep.subr.mxu0 0.0
    %1965 = vmatpush1.msra.mxu0 0.0
    %1966 = vmatprep.subr.mxu0 0.0
    %1967 = vmatpush1.msra.mxu0 0.0
    %1968 = vmatprep.mubr.f32.mxu0 0.0
    %1969 = vmatmul.mubr.f32.gmra.mrb[0].mxu0 %v1902
    %v1970 = vpop.f32.mrb[0].mxu0
    %v1971 = vadd.f32 0.0, %v1970
    %v1972 = vpop.f32.mrb[0].mxu0
    %1973 = vdwg.mxu0
    %v1974 = vrcp.pop %v1897
    %v1975 = vmul.f32 %v1971, %v1974
    %v1977 = vsel %vm366, %v1975, 0
    %1979 = vmatprep.subr.mxu0 0.0
    %1980 = vmatpush1.msra.mxu0 %v349
    %1981 = vmatprep.subr.mxu0 0.0
    %1982 = vmatpush1.msra.mxu0 0.0
    %1983 = vmatprep.subr.mxu0 0.0
    %1984 = vmatpush1.msra.mxu0 0.0
    %1985 = vmatprep.subr.mxu0 0.0
    %1986 = vmatpush1.msra.mxu0 0.0
    %1987 = vmatprep.subr.mxu0 0.0
    %1988 = vmatpush1.msra.mxu0 0.0
    %1989 = vmatprep.subr.mxu0 0.0
    %1990 = vmatpush1.msra.mxu0 0.0
    %1991 = vmatprep.subr.mxu0 0.0
    %1992 = vmatpush1.msra.mxu0 0.0
    %1993 = vmatprep.subr.mxu0 0.0
    %1994 = vmatpush1.msra.mxu0 0.0
    %1995 = vmatprep.subr.mxu0 0.0
    %1996 = vmatpush1.msra.mxu0 0.0
    %1997 = vmatprep.subr.mxu0 0.0
    %1998 = vmatpush1.msra.mxu0 0.0
    %1999 = vmatprep.subr.mxu0 0.0
    %2000 = vmatpush1.msra.mxu0 0.0
    %2001 = vmatprep.subr.mxu0 0.0
    %2002 = vmatpush1.msra.mxu0 0.0
    %2003 = vmatprep.subr.mxu0 0.0
    %2004 = vmatpush1.msra.mxu0 0.0
    %2005 = vmatprep.subr.mxu0 0.0
    %2006 = vmatpush1.msra.mxu0 0.0
    %2007 = vmatprep.subr.mxu0 0.0
    %2008 = vmatpush1.msra.mxu0 0.0
    %2009 = vmatprep.subr.mxu0 0.0
    %2010 = vmatpush1.msra.mxu0 0.0
    %2011 = vmatprep.subr.mxu0 0.0
    %2012 = vmatpush1.msra.mxu0 0.0
    %2013 = vmatprep.subr.mxu0 0.0
    %2014 = vmatpush1.msra.mxu0 0.0
    %2015 = vmatprep.subr.mxu0 0.0
    %2016 = vmatpush1.msra.mxu0 0.0
    %2017 = vmatprep.subr.mxu0 0.0
    %2018 = vmatpush1.msra.mxu0 0.0
    %2019 = vmatprep.subr.mxu0 0.0
    %2020 = vmatpush1.msra.mxu0 0.0
    %2021 = vmatprep.subr.mxu0 0.0
    %2022 = vmatpush1.msra.mxu0 0.0
    %2023 = vmatprep.subr.mxu0 0.0
    %2024 = vmatpush1.msra.mxu0 0.0
    %2025 = vmatprep.subr.mxu0 0.0
    %2026 = vmatpush1.msra.mxu0 0.0
    %2027 = vmatprep.subr.mxu0 0.0
    %2028 = vmatpush1.msra.mxu0 0.0
    %2029 = vmatprep.subr.mxu0 0.0
    %2030 = vmatpush1.msra.mxu0 0.0
    %2031 = vmatprep.subr.mxu0 0.0
    %2032 = vmatpush1.msra.mxu0 0.0
    %2033 = vmatprep.subr.mxu0 0.0
    %2034 = vmatpush1.msra.mxu0 0.0
    %2035 = vmatprep.subr.mxu0 0.0
    %2036 = vmatpush1.msra.mxu0 0.0
    %2037 = vmatprep.subr.mxu0 0.0
    %2038 = vmatpush1.msra.mxu0 0.0
    %2039 = vmatprep.subr.mxu0 0.0
    %2040 = vmatpush1.msra.mxu0 0.0
    %2041 = vmatprep.subr.mxu0 0.0
    %2042 = vmatpush1.msra.mxu0 0.0
    %2043 = vmatprep.mubr.f32.mxu0 0.0
    %2044 = vmatmul.mubr.f32.gmra.mrb[0].mxu0 %v1977
    %v2045 = vpop.f32.mrb[0].mxu0
    %v2046 = vadd.f32 0.0, %v2045
    %v2047 = vpop.f32.mrb[0].mxu0
    %2048 = vdwg.mxu0
    %v2049 = vadd.f32 %v1807, %v2046
    %2050 = vrot.lane.b32.xlu0 %v346, 104
    %v2051 = vpop.permute.xlu0 %2050
    %2052 = vrot.lane.b32.xlu0 %v263, 104
    %v2053 = vpop.permute.xlu0 %2052
    %v2054 = vsel %vm366, %v2051, 0
    %v2056 = vsel %vm366, %v2053, 0
    %2058 = vmatprep.subr.mxu0 0.0
    %2059 = vmatpush1.xpose.msra.mxu0 %v2056
    %2060 = vmatprep.subr.mxu0 0.0
    %2061 = vmatpush1.xpose.msra.mxu0 0.0
    %2062 = vmatprep.subr.mxu0 0.0
    %2063 = vmatpush1.xpose.msra.mxu0 0.0
    %2064 = vmatprep.subr.mxu0 0.0
    %2065 = vmatpush1.xpose.msra.mxu0 0.0
    %2066 = vmatprep.subr.mxu0 0.0
    %2067 = vmatpush1.xpose.msra.mxu0 0.0
    %2068 = vmatprep.subr.mxu0 0.0
    %2069 = vmatpush1.xpose.msra.mxu0 0.0
    %2070 = vmatprep.subr.mxu0 0.0
    %2071 = vmatpush1.xpose.msra.mxu0 0.0
    %2072 = vmatprep.subr.mxu0 0.0
    %2073 = vmatpush1.xpose.msra.mxu0 0.0
    %2074 = vmatprep.subr.mxu0 0.0
    %2075 = vmatpush1.xpose.msra.mxu0 0.0
    %2076 = vmatprep.subr.mxu0 0.0
    %2077 = vmatpush1.xpose.msra.mxu0 0.0
    %2078 = vmatprep.subr.mxu0 0.0
    %2079 = vmatpush1.xpose.msra.mxu0 0.0
    %2080 = vmatprep.subr.mxu0 0.0
    %2081 = vmatpush1.xpose.msra.mxu0 0.0
    %2082 = vmatprep.subr.mxu0 0.0
    %2083 = vmatpush1.xpose.msra.mxu0 0.0
    %2084 = vmatprep.subr.mxu0 0.0
    %2085 = vmatpush1.xpose.msra.mxu0 0.0
    %2086 = vmatprep.subr.mxu0 0.0
    %2087 = vmatpush1.xpose.msra.mxu0 0.0
    %2088 = vmatprep.subr.mxu0 0.0
    %2089 = vmatpush1.xpose.msra.mxu0 0.0
    %2090 = vmatprep.subr.mxu0 0.0
    %2091 = vmatpush1.xpose.msra.mxu0 0.0
    %2092 = vmatprep.subr.mxu0 0.0
    %2093 = vmatpush1.xpose.msra.mxu0 0.0
    %2094 = vmatprep.subr.mxu0 0.0
    %2095 = vmatpush1.xpose.msra.mxu0 0.0
    %2096 = vmatprep.subr.mxu0 0.0
    %2097 = vmatpush1.xpose.msra.mxu0 0.0
    %2098 = vmatprep.subr.mxu0 0.0
    %2099 = vmatpush1.xpose.msra.mxu0 0.0
    %2100 = vmatprep.subr.mxu0 0.0
    %2101 = vmatpush1.xpose.msra.mxu0 0.0
    %2102 = vmatprep.subr.mxu0 0.0
    %2103 = vmatpush1.xpose.msra.mxu0 0.0
    %2104 = vmatprep.subr.mxu0 0.0
    %2105 = vmatpush1.xpose.msra.mxu0 0.0
    %2106 = vmatprep.subr.mxu0 0.0
    %2107 = vmatpush1.xpose.msra.mxu0 0.0
    %2108 = vmatprep.subr.mxu0 0.0
    %2109 = vmatpush1.xpose.msra.mxu0 0.0
    %2110 = vmatprep.subr.mxu0 0.0
    %2111 = vmatpush1.xpose.msra.mxu0 0.0
    %2112 = vmatprep.subr.mxu0 0.0
    %2113 = vmatpush1.xpose.msra.mxu0 0.0
    %2114 = vmatprep.subr.mxu0 0.0
    %2115 = vmatpush1.xpose.msra.mxu0 0.0
    %2116 = vmatprep.subr.mxu0 0.0
    %2117 = vmatpush1.xpose.msra.mxu0 0.0
    %2118 = vmatprep.subr.mxu0 0.0
    %2119 = vmatpush1.xpose.msra.mxu0 0.0
    %2120 = vmatprep.subr.mxu0 0.0
    %2121 = vmatpush1.xpose.msra.mxu0 0.0
    %2122 = vmatprep.mubr.f32.mxu0 0.0
    %2123 = vmatmul.mubr.f32.gmra.mrb[0].mxu0 %v2054
    %v2124 = vpop.f32.mrb[0].mxu0
    %v2125 = vadd.f32 0.0, %v2124
    %v2126 = vpop.f32.mrb[0].mxu0
    %2127 = vdwg.mxu0
    %v2128 = vsel %vm1335, %v2125, -1e+30
    %v2129 = vsel %vm366, %v2128, -inf
    %2130 = vmax.xlane.f32.xlu0 %v2129
    %v2131 = vpop.xlane.xlu0 %2130
    %v2132 = vsub.f32 %v2128, %v2131
    %v2133 = vmul.f32 %v2132, 1.442695
    %v2134 = vpow.pop %v2133
    %v2135 = vsel %vm366, %v2134, 0.0
    %2136 = vadd.xlane.f32.xlu0 %v2135
    %v2137 = vpop.xlane.xlu0 %2136
    %2138 = vrot.lane.b32.xlu0 %v342, 104
    %v2139 = vpop.permute.xlu0 %2138
    %v2142 = vsel %vm366, %v2134, 0
    %2144 = vmatprep.subr.mxu0 0.0
    %2145 = vmatpush1.msra.mxu0 %v2139
    %2146 = vmatprep.subr.mxu0 0.0
    %2147 = vmatpush1.msra.mxu0 0.0
    %2148 = vmatprep.subr.mxu0 0.0
    %2149 = vmatpush1.msra.mxu0 0.0
    %2150 = vmatprep.subr.mxu0 0.0
    %2151 = vmatpush1.msra.mxu0 0.0
    %2152 = vmatprep.subr.mxu0 0.0
    %2153 = vmatpush1.msra.mxu0 0.0
    %2154 = vmatprep.subr.mxu0 0.0
    %2155 = vmatpush1.msra.mxu0 0.0
    %2156 = vmatprep.subr.mxu0 0.0
    %2157 = vmatpush1.msra.mxu0 0.0
    %2158 = vmatprep.subr.mxu0 0.0
    %2159 = vmatpush1.msra.mxu0 0.0
    %2160 = vmatprep.subr.mxu0 0.0
    %2161 = vmatpush1.msra.mxu0 0.0
    %2162 = vmatprep.subr.mxu0 0.0
    %2163 = vmatpush1.msra.mxu0 0.0
    %2164 = vmatprep.subr.mxu0 0.0
    %2165 = vmatpush1.msra.mxu0 0.0
    %2166 = vmatprep.subr.mxu0 0.0
    %2167 = vmatpush1.msra.mxu0 0.0
    %2168 = vmatprep.subr.mxu0 0.0
    %2169 = vmatpush1.msra.mxu0 0.0
    %2170 = vmatprep.subr.mxu0 0.0
    %2171 = vmatpush1.msra.mxu0 0.0
    %2172 = vmatprep.subr.mxu0 0.0
    %2173 = vmatpush1.msra.mxu0 0.0
    %2174 = vmatprep.subr.mxu0 0.0
    %2175 = vmatpush1.msra.mxu0 0.0
    %2176 = vmatprep.subr.mxu0 0.0
    %2177 = vmatpush1.msra.mxu0 0.0
    %2178 = vmatprep.subr.mxu0 0.0
    %2179 = vmatpush1.msra.mxu0 0.0
    %2180 = vmatprep.subr.mxu0 0.0
    %2181 = vmatpush1.msra.mxu0 0.0
    %2182 = vmatprep.subr.mxu0 0.0
    %2183 = vmatpush1.msra.mxu0 0.0
    %2184 = vmatprep.subr.mxu0 0.0
    %2185 = vmatpush1.msra.mxu0 0.0
    %2186 = vmatprep.subr.mxu0 0.0
    %2187 = vmatpush1.msra.mxu0 0.0
    %2188 = vmatprep.subr.mxu0 0.0
    %2189 = vmatpush1.msra.mxu0 0.0
    %2190 = vmatprep.subr.mxu0 0.0
    %2191 = vmatpush1.msra.mxu0 0.0
    %2192 = vmatprep.subr.mxu0 0.0
    %2193 = vmatpush1.msra.mxu0 0.0
    %2194 = vmatprep.subr.mxu0 0.0
    %2195 = vmatpush1.msra.mxu0 0.0
    %2196 = vmatprep.subr.mxu0 0.0
    %2197 = vmatpush1.msra.mxu0 0.0
    %2198 = vmatprep.subr.mxu0 0.0
    %2199 = vmatpush1.msra.mxu0 0.0
    %2200 = vmatprep.subr.mxu0 0.0
    %2201 = vmatpush1.msra.mxu0 0.0
    %2202 = vmatprep.subr.mxu0 0.0
    %2203 = vmatpush1.msra.mxu0 0.0
    %2204 = vmatprep.subr.mxu0 0.0
    %2205 = vmatpush1.msra.mxu0 0.0
    %2206 = vmatprep.subr.mxu0 0.0
    %2207 = vmatpush1.msra.mxu0 0.0
    %2208 = vmatprep.mubr.f32.mxu0 0.0
    %2209 = vmatmul.mubr.f32.gmra.mrb[0].mxu0 %v2142
    %v2210 = vpop.f32.mrb[0].mxu0
    %v2211 = vadd.f32 0.0, %v2210
    %v2212 = vpop.f32.mrb[0].mxu0
    %2213 = vdwg.mxu0
    %v2214 = vrcp.pop %v2137
    %v2215 = vmul.f32 %v2211, %v2214
    %v2217 = vsel %vm366, %v2215, 0
    %2219 = vmatprep.subr.mxu0 0.0
    %2220 = vmatpush1.msra.mxu0 %v350
    %2221 = vmatprep.subr.mxu0 0.0
    %2222 = vmatpush1.msra.mxu0 0.0
    %2223 = vmatprep.subr.mxu0 0.0
    %2224 = vmatpush1.msra.mxu0 0.0
    %2225 = vmatprep.subr.mxu0 0.0
    %2226 = vmatpush1.msra.mxu0 0.0
    %2227 = vmatprep.subr.mxu0 0.0
    %2228 = vmatpush1.msra.mxu0 0.0
    %2229 = vmatprep.subr.mxu0 0.0
    %2230 = vmatpush1.msra.mxu0 0.0
    %2231 = vmatprep.subr.mxu0 0.0
    %2232 = vmatpush1.msra.mxu0 0.0
    %2233 = vmatprep.subr.mxu0 0.0
    %2234 = vmatpush1.msra.mxu0 0.0
    %2235 = vmatprep.subr.mxu0 0.0
    %2236 = vmatpush1.msra.mxu0 0.0
    %2237 = vmatprep.subr.mxu0 0.0
    %2238 = vmatpush1.msra.mxu0 0.0
    %2239 = vmatprep.subr.mxu0 0.0
    %2240 = vmatpush1.msra.mxu0 0.0
    %2241 = vmatprep.subr.mxu0 0.0
    %2242 = vmatpush1.msra.mxu0 0.0
    %2243 = vmatprep.subr.mxu0 0.0
    %2244 = vmatpush1.msra.mxu0 0.0
    %2245 = vmatprep.subr.mxu0 0.0
    %2246 = vmatpush1.msra.mxu0 0.0
    %2247 = vmatprep.subr.mxu0 0.0
    %2248 = vmatpush1.msra.mxu0 0.0
    %2249 = vmatprep.subr.mxu0 0.0
    %2250 = vmatpush1.msra.mxu0 0.0
    %2251 = vmatprep.subr.mxu0 0.0
    %2252 = vmatpush1.msra.mxu0 0.0
    %2253 = vmatprep.subr.mxu0 0.0
    %2254 = vmatpush1.msra.mxu0 0.0
    %2255 = vmatprep.subr.mxu0 0.0
    %2256 = vmatpush1.msra.mxu0 0.0
    %2257 = vmatprep.subr.mxu0 0.0
    %2258 = vmatpush1.msra.mxu0 0.0
    %2259 = vmatprep.subr.mxu0 0.0
    %2260 = vmatpush1.msra.mxu0 0.0
    %2261 = vmatprep.subr.mxu0 0.0
    %2262 = vmatpush1.msra.mxu0 0.0
    %2263 = vmatprep.subr.mxu0 0.0
    %2264 = vmatpush1.msra.mxu0 0.0
    %2265 = vmatprep.subr.mxu0 0.0
    %2266 = vmatpush1.msra.mxu0 0.0
    %2267 = vmatprep.subr.mxu0 0.0
    %2268 = vmatpush1.msra.mxu0 0.0
    %2269 = vmatprep.subr.mxu0 0.0
    %2270 = vmatpush1.msra.mxu0 0.0
    %2271 = vmatprep.subr.mxu0 0.0
    %2272 = vmatpush1.msra.mxu0 0.0
    %2273 = vmatprep.subr.mxu0 0.0
    %2274 = vmatpush1.msra.mxu0 0.0
    %2275 = vmatprep.subr.mxu0 0.0
    %2276 = vmatpush1.msra.mxu0 0.0
    %2277 = vmatprep.subr.mxu0 0.0
    %2278 = vmatpush1.msra.mxu0 0.0
    %2279 = vmatprep.subr.mxu0 0.0
    %2280 = vmatpush1.msra.mxu0 0.0
    %2281 = vmatprep.subr.mxu0 0.0
    %2282 = vmatpush1.msra.mxu0 0.0
    %2283 = vmatprep.mubr.f32.mxu0 0.0
    %2284 = vmatmul.mubr.f32.gmra.mrb[0].mxu0 %v2217
    %v2285 = vpop.f32.mrb[0].mxu0
    %v2286 = vadd.f32 0.0, %v2285
    %v2287 = vpop.f32.mrb[0].mxu0
    %2288 = vdwg.mxu0
    %v2289 = vadd.f32 %v2049, %v2286
    %v2290 = vadd.f32 %v2289, %v1325
    %2291 = vst.msk [vmem:[#allocation13] sm:$0xff] %vm105, %v1327
    %2292 = vst.msk [vmem:[#allocation13 + $0x8] sm:$0xff] %vm105, %v2290
    // Predicated region
    $region46: #{_mha_pallas.1} parent=1 // pred_check
      _
    $region47: #{_mha_pallas.1} parent=1 // pred_check_branch
      %2294 = sbr.rel (0) target = $region49
    $region48: #{_mha_pallas.1} parent=1 // pred_region
      %s2296 = ssub.s32 256, 256
      %2297 = vsyncadd [#allocation6], %s2296
      %s2298 = sshll.u32 [#allocation13], 4
      %s2299 = int_to_ptr.vmem [resolvable:$true] %s2298
      %2304 = dma.vmem_to_hbm [thread:$0]  %s2299, 256, %s7, [#allocation6], 128, 128, 8
    $region49: #{_mha_pallas.1} parent=1 // pred_fallthru
      _
    // Predicated region
    $region50: #{_mha_pallas.1} parent=1 // pred_check
      _
    $region51: #{_mha_pallas.1} parent=1 // pred_check_branch
      %2306 = sbr.rel (0) target = $region53
    $region52: #{_mha_pallas.1} parent=1 // pred_region
      %2307 = dma.done [#allocation6], 256
    $region53: #{_mha_pallas.1} parent=1 // pred_fallthru
      _
    %2308 = vsyncpa [#allocation5], 1
    %2309 = vsyncpa [#allocation8], 1
    %2310 = vsyncpa [#allocation11], 1
    %2311 = vsyncpa [#allocation6], 1

</llo_original>
